<compile_context>
chip_gen: v7x
topology: tpu7x:2x2x1
jax: 0.10.0
libtpu: 0.0.40
codegen_flags: <defaults>
</compile_context>

<pallas_src>
import jax
import jax.numpy as jnp
from jax import lax
from jax.experimental import pallas as pl
from jax.experimental.pallas import tpu as pltpu


# ---------------------------------------------------------------------------
# Kernel helpers
# ---------------------------------------------------------------------------
def _masked_min_max(Ab, h):
    """Per-target-node masked min/max over neighbours, 2D ops only."""
    N, F = h.shape
    NEG = jnp.float32(-1e30)
    mx = jnp.full((N, F), NEG, jnp.float32)
    neg_mn = jnp.full((N, F), NEG, jnp.float32)
    # Iterate sublane-sized (8-wide) source-node groups with a running max
    # carried in two (N, F) arrays.  All slices are static, so no (N, chunk, F)
    # temporary is ever materialised and no axis-1 XLU reduce is emitted.
    # TODO(synk): for large N replace with a lax.fori_loop over streamed A row
    # tiles inside a row-tiled grid (avoids dynamic lane-offset slicing here).
    for c0 in range(0, N, 8):
        ag = Ab[:, c0:c0 + 8]            # (N, 8)  static lane slice of A
        hg = h[c0:c0 + 8, :]             # (8, F)  static sublane slice of h
        for k in range(8):
            m = ag[:, k:k + 1] > 0       # (N, 1) "source j is a neighbour"
            hk = hg[k:k + 1, :]          # (1, F) source-node features
            mx = jnp.where(m, jnp.maximum(mx, hk), mx)
            neg_mn = jnp.where(m, jnp.maximum(neg_mn, -hk), neg_mn)
    return -neg_mn, mx


def _pna_relu_bn(Ab, invdeg, hasnb, amp, att, h, w_ref, b_ref, g_ref, be_ref):
    """One PNAConv -> ReLU -> BatchNorm1d block on VMEM-resident values."""
    N, F = h.shape

    # --- mean / std aggregation via MXU (bf16 inputs, f32 accumulation) ------
    hb = h.astype(jnp.bfloat16)
    nbr_sum = jnp.dot(Ab, hb, preferred_element_type=jnp.float32)
    nbr_sumsq = jnp.dot(Ab, (h * h).astype(jnp.bfloat16),
                        preferred_element_type=jnp.float32)
    mean = nbr_sum * invdeg                     # exactly 0 for isolated nodes
    var = jnp.maximum(nbr_sumsq * invdeg - mean * mean, 0.0)
    std = jnp.sqrt(var + 1e-5) * hasnb

    # --- masked min / max (2D running-max formulation) ------------------------
    mn, mx = _masked_min_max(Ab, h)
    mn = mn * hasnb
    mx = mx * hasnb

    # --- single fused projection matmul --------------------------------------
    # operand lanes: [ id(mean|mn|mx|std) | amp*(...) | att*(...) ]  -> (N, 12F)
    # weights:       (12F, Fout), rows in the matching order.
    aggcat = jnp.concatenate([mean, mn, mx, std], axis=1)            # (N, 4F)
    full = jnp.concatenate([aggcat, amp * aggcat, att * aggcat],
                           axis=1).astype(jnp.bfloat16)              # (N, 12F)
    acc = jnp.dot(full, w_ref[...],
                  preferred_element_type=jnp.float32) + b_ref[...]

    # --- ReLU + single-pass BatchNorm1d (training-mode batch statistics) ------
    hr = jnp.maximum(acc, 0.0)
    mu = jnp.mean(hr, axis=0, keepdims=True)
    msq = jnp.mean(hr * hr, axis=0, keepdims=True)
    var_bn = jnp.maximum(msq - mu * mu, 0.0)
    return (hr - mu) * lax.rsqrt(var_bn + 1e-5) * g_ref[...] + be_ref[...]


def _gcn_fused_kernel(a_ref, invdeg_ref, hasnb_ref, amp_ref, att_ref, x_ref,
                      w1_ref, b1_ref, g1_ref, be1_ref,
                      w2_ref, b2_ref, g2_ref, be2_ref,
                      w3_ref, b3_ref, g3_ref, be3_ref,
                      w4_ref, b4_ref, g4_ref, be4_ref,
                      wc_ref, bc_ref, o_ref):
    """Whole GCN forward: 4 x (PNAConv -> ReLU -> BN) -> Linear, in VMEM."""
    Ab = a_ref[...]                 # (N, N) bf16 adjacency (0/1, exact)
    invdeg = invdeg_ref[...]        # (N, 1) f32  1/deg (deg clamped to >= 1)
    hasnb = hasnb_ref[...]          # (N, 1) f32  0/1 has-neighbour mask
    amp = amp_ref[...]              # (N, 1) f32  amplification scaler
    att = att_ref[...]              # (N, 1) f32  attenuation scaler

    h = x_ref[...]                  # (N, gene_dim) f32
    layer_refs = ((w1_ref, b1_ref, g1_ref, be1_ref),
                  (w2_ref, b2_ref, g2_ref, be2_ref),
                  (w3_ref, b3_ref, g3_ref, be3_ref),
                  (w4_ref, b4_ref, g4_ref, be4_ref))
    for (w_ref, b_ref, g_ref, be_ref) in layer_refs:
        h = _pna_relu_bn(Ab, invdeg, hasnb, amp, att, h,
                         w_ref, b_ref, g_ref, be_ref)

    # classifier: bf16 x bf16 -> f32, lane-dense 128-wide padded output store
    o_ref[...] = (jnp.dot(h.astype(jnp.bfloat16), wc_ref[...],
                          preferred_element_type=jnp.float32) + bc_ref[...])


# ---------------------------------------------------------------------------
# Wrapper
# ---------------------------------------------------------------------------
def _degree_stats(A):
    """Precompute degree-derived quantities once on the host graph."""
    deg = jnp.sum(A, axis=1, keepdims=True)                 # in-degree (N, 1)
    has_nb = (deg > 0.0).astype(jnp.float32)
    deg_c = jnp.maximum(deg, 1.0)                           # PyG clamps deg>=1
    inv_deg = 1.0 / deg_c
    log_deg = jnp.log(deg_c + 1.0)
    # NOTE: PyG uses a dataset-level delta; here it is the per-graph average.
    delta = jnp.mean(log_deg)
    amp = log_deg / delta
    att = delta / log_deg
    return inv_deg, has_nb, amp, att


def init_params(key, gene_dim, hidden_dim, num_classes):
    dims = [(gene_dim, hidden_dim),
            (hidden_dim, 2 * hidden_dim),
            (2 * hidden_dim, hidden_dim),
            (hidden_dim, hidden_dim // 2)]
    layers = []
    for fin, fout in dims:
        key, kw, kb = jax.random.split(key, 3)
        bound = 1.0 / jnp.sqrt(12.0 * fin)                  # fan_in = 12 * fin
        # rows (12*fin): scaler-major [identity | amplification | attenuation],
        # each an aggregator-ordered [mean | min | max | std] block of fin rows
        # -> matches the kernel's single concatenated projection operand.
        w = jax.random.uniform(kw, (12 * fin, fout), jnp.float32,
                               -bound, bound)
        b = jax.random.uniform(kb, (1, fout), jnp.float32, -bound, bound)
        gamma = jnp.ones((1, fout), jnp.float32)
        beta = jnp.zeros((1, fout), jnp.float32)
        layers.append((w.astype(jnp.bfloat16), b, gamma, beta))

    key, kw, kb = jax.random.split(key, 3)
    fin = hidden_dim // 2
    bound = 1.0 / jnp.sqrt(float(fin))
    wc = jax.random.uniform(kw, (fin, num_classes), jnp.float32, -bound, bound)
    bc = jax.random.uniform(kb, (1, num_classes), jnp.float32, -bound, bound)
    cpad = ((num_classes + 127) // 128) * 128               # lane-dense output
    wc_p = jnp.zeros((fin, cpad), jnp.float32).at[:, :num_classes].set(wc)
    bc_p = jnp.zeros((1, cpad), jnp.float32).at[:, :num_classes].set(bc)
    return {"layers": layers,
            "cls_w": wc_p.astype(jnp.bfloat16),
            "cls_b": bc_p}


def gcn_forward(params, x, A, num_classes):
    N = x.shape[0]
    assert N % 8 == 0, "node count must be a multiple of 8 (sublane tiling)"

    inv_deg, has_nb, amp, att = _degree_stats(A)

    flat = []
    for (w, b, g, be) in params["layers"]:
        flat += [w, b, g, be]
    inputs = [A.astype(jnp.bfloat16), inv_deg, has_nb, amp, att,
              x.astype(jnp.float32)] + flat + [params["cls_w"], params["cls_b"]]

    cpad = params["cls_w"].shape[1]
    out_bytes = N * cpad * 4
    in_bytes = sum(int(a.size) * a.dtype.itemsize for a in inputs)
    # Explicit scoped-VMEM budget: defaults are only 16 MiB (v5e) / 32 MiB
    # (v6e, v7x).  Give the fused kernel headroom, stay below v7x physical.
    vmem_limit = int(min(max(4 * (in_bytes + out_bytes), 16 * 2**20),
                         48 * 2**20))

    vmem = pl.BlockSpec(memory_space=pltpu.MemorySpace.VMEM)
    out = pl.pallas_call(
        _gcn_fused_kernel,
        out_shape=jax.ShapeDtypeStruct((N, cpad), jnp.float32),
        in_specs=[vmem] * len(inputs),
        out_specs=vmem,
        compiler_params=pltpu.CompilerParams(vmem_limit_bytes=vmem_limit),
    )(*inputs)
    return out[:, :num_classes]


# ---------------------------------------------------------------------------
# Example run
# ---------------------------------------------------------------------------
if __name__ == "__main__":
    key = jax.random.PRNGKey(0)

    N = 16               # number of graph nodes
    gene_dim = 32
    hidden_dim = 32
    num_classes = 2
    n_extra_edges = 24

    # Deterministic edge_index: a ring (every node gets >=1 in-edge) plus
    # random extra edges.  edge_index is [2, E] = [src; dst].
    key, ks, kd, kx = jax.random.split(key, 4)
    ring_src = jnp.arange(N, dtype=jnp.int32)
    ring_dst = (ring_src + 1) % N
    extra_src = jax.random.randint(ks, (n_extra_edges,), 0, N, jnp.int32)
    extra_dst = jax.random.randint(kd, (n_extra_edges,), 0, N, jnp.int32)
    edge_index = jnp.stack([jnp.concatenate([ring_src, extra_src]),
                            jnp.concatenate([ring_dst, extra_dst])])

    # Dense adjacency: A[i, j] = 1 iff edge j -> i.
    A = jnp.zeros((N, N), jnp.float32).at[edge_index[1], edge_index[0]].set(1.0)
    x = jax.random.normal(kx, (N, gene_dim), jnp.float32)

    params = init_params(jax.random.PRNGKey(42), gene_dim, hidden_dim,
                         num_classes)

    fwd = jax.jit(gcn_forward, static_argnames=("num_classes",))
    out = fwd(params, x, A, num_classes=num_classes)
    out = jax.block_until_ready(out)

    assert out.shape == (N, num_classes) and out.dtype == jnp.float32
    assert bool(jnp.all(jnp.isfinite(out)))
    print("KERNEL_OK")
</pallas_src>

<mosaic_0001>
module attributes {stable_mosaic.version = 11 : i64} {
  func.func @_gcn_fused_kernel(%arg0: memref<16x16xbf16, #tpu.memory_space<vmem>>, %arg1: memref<16x1xf32, #tpu.memory_space<vmem>>, %arg2: memref<16x1xf32, #tpu.memory_space<vmem>>, %arg3: memref<16x1xf32, #tpu.memory_space<vmem>>, %arg4: memref<16x1xf32, #tpu.memory_space<vmem>>, %arg5: memref<16x32xf32, #tpu.memory_space<vmem>>, %arg6: memref<384x32xbf16, #tpu.memory_space<vmem>>, %arg7: memref<1x32xf32, #tpu.memory_space<vmem>>, %arg8: memref<1x32xf32, #tpu.memory_space<vmem>>, %arg9: memref<1x32xf32, #tpu.memory_space<vmem>>, %arg10: memref<384x64xbf16, #tpu.memory_space<vmem>>, %arg11: memref<1x64xf32, #tpu.memory_space<vmem>>, %arg12: memref<1x64xf32, #tpu.memory_space<vmem>>, %arg13: memref<1x64xf32, #tpu.memory_space<vmem>>, %arg14: memref<768x32xbf16, #tpu.memory_space<vmem>>, %arg15: memref<1x32xf32, #tpu.memory_space<vmem>>, %arg16: memref<1x32xf32, #tpu.memory_space<vmem>>, %arg17: memref<1x32xf32, #tpu.memory_space<vmem>>, %arg18: memref<384x16xbf16, #tpu.memory_space<vmem>>, %arg19: memref<1x16xf32, #tpu.memory_space<vmem>>, %arg20: memref<1x16xf32, #tpu.memory_space<vmem>>, %arg21: memref<1x16xf32, #tpu.memory_space<vmem>>, %arg22: memref<16x128xbf16, #tpu.memory_space<vmem>>, %arg23: memref<1x128xf32, #tpu.memory_space<vmem>>, %arg24: memref<16x128xf32, #tpu.memory_space<vmem>>) attributes {dimension_semantics = [], scalar_prefetch = 0 : i64, scratch_operands = 0 : i64, tpu.core_type = #tpu.core_type<tc>} {
    %c0 = arith.constant 0 : index
    %c0_0 = arith.constant 0 : index
    %0 = vector.load %arg0[%c0, %c0_0] : memref<16x16xbf16, #tpu.memory_space<vmem>>, vector<16x16xbf16>
    %c0_1 = arith.constant 0 : index
    %c0_2 = arith.constant 0 : index
    %1 = vector.load %arg1[%c0_1, %c0_2] : memref<16x1xf32, #tpu.memory_space<vmem>>, vector<16x1xf32>
    %c0_3 = arith.constant 0 : index
    %c0_4 = arith.constant 0 : index
    %2 = vector.load %arg2[%c0_3, %c0_4] : memref<16x1xf32, #tpu.memory_space<vmem>>, vector<16x1xf32>
    %c0_5 = arith.constant 0 : index
    %c0_6 = arith.constant 0 : index
    %3 = vector.load %arg3[%c0_5, %c0_6] : memref<16x1xf32, #tpu.memory_space<vmem>>, vector<16x1xf32>
    %c0_7 = arith.constant 0 : index
    %c0_8 = arith.constant 0 : index
    %4 = vector.load %arg4[%c0_7, %c0_8] : memref<16x1xf32, #tpu.memory_space<vmem>>, vector<16x1xf32>
    %c0_9 = arith.constant 0 : index
    %c0_10 = arith.constant 0 : index
    %5 = vector.load %arg5[%c0_9, %c0_10] : memref<16x32xf32, #tpu.memory_space<vmem>>, vector<16x32xf32>
    %6 = arith.truncf %5 : vector<16x32xf32> to vector<16x32xbf16>
    %cst = arith.constant dense<0.000000e+00> : vector<16x32xf32>
    %7 = tpu.matmul %0, %6, %cst {dimension_numbers = #tpu.dot_dimension_numbers<[1], [0], [0], [1], [0, 0, 1, 1], [], []>} : vector<16x16xbf16>, vector<16x32xbf16>, vector<16x32xf32> -> vector<16x32xf32>
    %8 = arith.mulf %5, %5 : vector<16x32xf32>
    %9 = arith.truncf %8 : vector<16x32xf32> to vector<16x32xbf16>
    %cst_11 = arith.constant dense<0.000000e+00> : vector<16x32xf32>
    %10 = tpu.matmul %0, %9, %cst_11 {dimension_numbers = #tpu.dot_dimension_numbers<[1], [0], [0], [1], [0, 0, 1, 1], [], []>} : vector<16x16xbf16>, vector<16x32xbf16>, vector<16x32xf32> -> vector<16x32xf32>
    %11 = vector.broadcast %1 : vector<16x1xf32> to vector<16x32xf32>
    %12 = arith.mulf %7, %11 : vector<16x32xf32>
    %13 = vector.broadcast %1 : vector<16x1xf32> to vector<16x32xf32>
    %14 = arith.mulf %10, %13 : vector<16x32xf32>
    %15 = arith.mulf %12, %12 : vector<16x32xf32>
    %16 = arith.subf %14, %15 : vector<16x32xf32>
    %cst_12 = arith.constant 0.000000e+00 : f32
    %17 = vector.broadcast %cst_12 : f32 to vector<16x32xf32>
    %18 = arith.maximumf %16, %17 : vector<16x32xf32>
    %cst_13 = arith.constant 9.99999974E-6 : f32
    %19 = vector.broadcast %cst_13 : f32 to vector<16x32xf32>
    %20 = arith.addf %18, %19 : vector<16x32xf32>
    %21 = math.sqrt %20 : vector<16x32xf32>
    %22 = vector.broadcast %2 : vector<16x1xf32> to vector<16x32xf32>
    %23 = arith.mulf %21, %22 : vector<16x32xf32>
    %cst_14 = arith.constant -1.000000e+30 : f32
    %24 = vector.broadcast %cst_14 : f32 to vector<16x32xf32>
    %cst_15 = arith.constant -1.000000e+30 : f32
    %25 = vector.broadcast %cst_15 : f32 to vector<16x32xf32>
    %26 = vector.extract_strided_slice %0 {offsets = [0, 0], sizes = [16, 8], strides = [1, 1]} : vector<16x16xbf16> to vector<16x8xbf16>
    %27 = vector.extract_strided_slice %5 {offsets = [0, 0], sizes = [8, 32], strides = [1, 1]} : vector<16x32xf32> to vector<8x32xf32>
    %28 = vector.extract_strided_slice %26 {offsets = [0, 0], sizes = [16, 1], strides = [1, 1]} : vector<16x8xbf16> to vector<16x1xbf16>
    %cst_16 = arith.constant 0.000000e+00 : bf16
    %29 = vector.broadcast %cst_16 : bf16 to vector<16x1xbf16>
    %30 = arith.cmpf ogt, %28, %29 : vector<16x1xbf16>
    %31 = vector.extract_strided_slice %27 {offsets = [0, 0], sizes = [1, 32], strides = [1, 1]} : vector<8x32xf32> to vector<1x32xf32>
    %32 = vector.broadcast %31 : vector<1x32xf32> to vector<16x32xf32>
    %33 = arith.maximumf %24, %32 : vector<16x32xf32>
    %34 = vector.shape_cast %30 : vector<16x1xi1> to vector<16x1xi1>
    %35 = vector.broadcast %34 : vector<16x1xi1> to vector<16x32xi1>
    %36 = arith.select %35, %33, %24 : vector<16x32xi1>, vector<16x32xf32>
    %cst_17 = arith.constant 0.000000e+00 : f32
    %37 = vector.broadcast %cst_17 : f32 to vector<1x32xf32>
    %38 = arith.subf %37, %31 : vector<1x32xf32>
    %39 = vector.broadcast %38 : vector<1x32xf32> to vector<16x32xf32>
    %40 = arith.maximumf %25, %39 : vector<16x32xf32>
    %41 = vector.shape_cast %30 : vector<16x1xi1> to vector<16x1xi1>
    %42 = vector.broadcast %41 : vector<16x1xi1> to vector<16x32xi1>
    %43 = arith.select %42, %40, %25 : vector<16x32xi1>, vector<16x32xf32>
    %44 = vector.extract_strided_slice %26 {offsets = [0, 1], sizes = [16, 1], strides = [1, 1]} : vector<16x8xbf16> to vector<16x1xbf16>
    %cst_18 = arith.constant 0.000000e+00 : bf16
    %45 = vector.broadcast %cst_18 : bf16 to vector<16x1xbf16>
    %46 = arith.cmpf ogt, %44, %45 : vector<16x1xbf16>
    %47 = vector.extract_strided_slice %27 {offsets = [1, 0], sizes = [1, 32], strides = [1, 1]} : vector<8x32xf32> to vector<1x32xf32>
    %48 = vector.broadcast %47 : vector<1x32xf32> to vector<16x32xf32>
    %49 = arith.maximumf %36, %48 : vector<16x32xf32>
    %50 = vector.shape_cast %46 : vector<16x1xi1> to vector<16x1xi1>
    %51 = vector.broadcast %50 : vector<16x1xi1> to vector<16x32xi1>
    %52 = arith.select %51, %49, %36 : vector<16x32xi1>, vector<16x32xf32>
    %cst_19 = arith.constant 0.000000e+00 : f32
    %53 = vector.broadcast %cst_19 : f32 to vector<1x32xf32>
    %54 = arith.subf %53, %47 : vector<1x32xf32>
    %55 = vector.broadcast %54 : vector<1x32xf32> to vector<16x32xf32>
    %56 = arith.maximumf %43, %55 : vector<16x32xf32>
    %57 = vector.shape_cast %46 : vector<16x1xi1> to vector<16x1xi1>
    %58 = vector.broadcast %57 : vector<16x1xi1> to vector<16x32xi1>
    %59 = arith.select %58, %56, %43 : vector<16x32xi1>, vector<16x32xf32>
    %60 = vector.extract_strided_slice %26 {offsets = [0, 2], sizes = [16, 1], strides = [1, 1]} : vector<16x8xbf16> to vector<16x1xbf16>
    %cst_20 = arith.constant 0.000000e+00 : bf16
    %61 = vector.broadcast %cst_20 : bf16 to vector<16x1xbf16>
    %62 = arith.cmpf ogt, %60, %61 : vector<16x1xbf16>
    %63 = vector.extract_strided_slice %27 {offsets = [2, 0], sizes = [1, 32], strides = [1, 1]} : vector<8x32xf32> to vector<1x32xf32>
    %64 = vector.broadcast %63 : vector<1x32xf32> to vector<16x32xf32>
    %65 = arith.maximumf %52, %64 : vector<16x32xf32>
    %66 = vector.shape_cast %62 : vector<16x1xi1> to vector<16x1xi1>
    %67 = vector.broadcast %66 : vector<16x1xi1> to vector<16x32xi1>
    %68 = arith.select %67, %65, %52 : vector<16x32xi1>, vector<16x32xf32>
    %cst_21 = arith.constant 0.000000e+00 : f32
    %69 = vector.broadcast %cst_21 : f32 to vector<1x32xf32>
    %70 = arith.subf %69, %63 : vector<1x32xf32>
    %71 = vector.broadcast %70 : vector<1x32xf32> to vector<16x32xf32>
    %72 = arith.maximumf %59, %71 : vector<16x32xf32>
    %73 = vector.shape_cast %62 : vector<16x1xi1> to vector<16x1xi1>
    %74 = vector.broadcast %73 : vector<16x1xi1> to vector<16x32xi1>
    %75 = arith.select %74, %72, %59 : vector<16x32xi1>, vector<16x32xf32>
    %76 = vector.extract_strided_slice %26 {offsets = [0, 3], sizes = [16, 1], strides = [1, 1]} : vector<16x8xbf16> to vector<16x1xbf16>
    %cst_22 = arith.constant 0.000000e+00 : bf16
    %77 = vector.broadcast %cst_22 : bf16 to vector<16x1xbf16>
    %78 = arith.cmpf ogt, %76, %77 : vector<16x1xbf16>
    %79 = vector.extract_strided_slice %27 {offsets = [3, 0], sizes = [1, 32], strides = [1, 1]} : vector<8x32xf32> to vector<1x32xf32>
    %80 = vector.broadcast %79 : vector<1x32xf32> to vector<16x32xf32>
    %81 = arith.maximumf %68, %80 : vector<16x32xf32>
    %82 = vector.shape_cast %78 : vector<16x1xi1> to vector<16x1xi1>
    %83 = vector.broadcast %82 : vector<16x1xi1> to vector<16x32xi1>
    %84 = arith.select %83, %81, %68 : vector<16x32xi1>, vector<16x32xf32>
    %cst_23 = arith.constant 0.000000e+00 : f32
    %85 = vector.broadcast %cst_23 : f32 to vector<1x32xf32>
    %86 = arith.subf %85, %79 : vector<1x32xf32>
    %87 = vector.broadcast %86 : vector<1x32xf32> to vector<16x32xf32>
    %88 = arith.maximumf %75, %87 : vector<16x32xf32>
    %89 = vector.shape_cast %78 : vector<16x1xi1> to vector<16x1xi1>
    %90 = vector.broadcast %89 : vector<16x1xi1> to vector<16x32xi1>
    %91 = arith.select %90, %88, %75 : vector<16x32xi1>, vector<16x32xf32>
    %92 = vector.extract_strided_slice %26 {offsets = [0, 4], sizes = [16, 1], strides = [1, 1]} : vector<16x8xbf16> to vector<16x1xbf16>
    %cst_24 = arith.constant 0.000000e+00 : bf16
    %93 = vector.broadcast %cst_24 : bf16 to vector<16x1xbf16>
    %94 = arith.cmpf ogt, %92, %93 : vector<16x1xbf16>
    %95 = vector.extract_strided_slice %27 {offsets = [4, 0], sizes = [1, 32], strides = [1, 1]} : vector<8x32xf32> to vector<1x32xf32>
    %96 = vector.broadcast %95 : vector<1x32xf32> to vector<16x32xf32>
    %97 = arith.maximumf %84, %96 : vector<16x32xf32>
    %98 = vector.shape_cast %94 : vector<16x1xi1> to vector<16x1xi1>
    %99 = vector.broadcast %98 : vector<16x1xi1> to vector<16x32xi1>
    %100 = arith.select %99, %97, %84 : vector<16x32xi1>, vector<16x32xf32>
    %cst_25 = arith.constant 0.000000e+00 : f32
    %101 = vector.broadcast %cst_25 : f32 to vector<1x32xf32>
    %102 = arith.subf %101, %95 : vector<1x32xf32>
    %103 = vector.broadcast %102 : vector<1x32xf32> to vector<16x32xf32>
    %104 = arith.maximumf %91, %103 : vector<16x32xf32>
    %105 = vector.shape_cast %94 : vector<16x1xi1> to vector<16x1xi1>
    %106 = vector.broadcast %105 : vector<16x1xi1> to vector<16x32xi1>
    %107 = arith.select %106, %104, %91 : vector<16x32xi1>, vector<16x32xf32>
    %108 = vector.extract_strided_slice %26 {offsets = [0, 5], sizes = [16, 1], strides = [1, 1]} : vector<16x8xbf16> to vector<16x1xbf16>
    %cst_26 = arith.constant 0.000000e+00 : bf16
    %109 = vector.broadcast %cst_26 : bf16 to vector<16x1xbf16>
    %110 = arith.cmpf ogt, %108, %109 : vector<16x1xbf16>
    %111 = vector.extract_strided_slice %27 {offsets = [5, 0], sizes = [1, 32], strides = [1, 1]} : vector<8x32xf32> to vector<1x32xf32>
    %112 = vector.broadcast %111 : vector<1x32xf32> to vector<16x32xf32>
    %113 = arith.maximumf %100, %112 : vector<16x32xf32>
    %114 = vector.shape_cast %110 : vector<16x1xi1> to vector<16x1xi1>
    %115 = vector.broadcast %114 : vector<16x1xi1> to vector<16x32xi1>
    %116 = arith.select %115, %113, %100 : vector<16x32xi1>, vector<16x32xf32>
    %cst_27 = arith.constant 0.000000e+00 : f32
    %117 = vector.broadcast %cst_27 : f32 to vector<1x32xf32>
    %118 = arith.subf %117, %111 : vector<1x32xf32>
    %119 = vector.broadcast %118 : vector<1x32xf32> to vector<16x32xf32>
    %120 = arith.maximumf %107, %119 : vector<16x32xf32>
    %121 = vector.shape_cast %110 : vector<16x1xi1> to vector<16x1xi1>
    %122 = vector.broadcast %121 : vector<16x1xi1> to vector<16x32xi1>
    %123 = arith.select %122, %120, %107 : vector<16x32xi1>, vector<16x32xf32>
    %124 = vector.extract_strided_slice %26 {offsets = [0, 6], sizes = [16, 1], strides = [1, 1]} : vector<16x8xbf16> to vector<16x1xbf16>
    %cst_28 = arith.constant 0.000000e+00 : bf16
    %125 = vector.broadcast %cst_28 : bf16 to vector<16x1xbf16>
    %126 = arith.cmpf ogt, %124, %125 : vector<16x1xbf16>
    %127 = vector.extract_strided_slice %27 {offsets = [6, 0], sizes = [1, 32], strides = [1, 1]} : vector<8x32xf32> to vector<1x32xf32>
    %128 = vector.broadcast %127 : vector<1x32xf32> to vector<16x32xf32>
    %129 = arith.maximumf %116, %128 : vector<16x32xf32>
    %130 = vector.shape_cast %126 : vector<16x1xi1> to vector<16x1xi1>
    %131 = vector.broadcast %130 : vector<16x1xi1> to vector<16x32xi1>
    %132 = arith.select %131, %129, %116 : vector<16x32xi1>, vector<16x32xf32>
    %cst_29 = arith.constant 0.000000e+00 : f32
    %133 = vector.broadcast %cst_29 : f32 to vector<1x32xf32>
    %134 = arith.subf %133, %127 : vector<1x32xf32>
    %135 = vector.broadcast %134 : vector<1x32xf32> to vector<16x32xf32>
    %136 = arith.maximumf %123, %135 : vector<16x32xf32>
    %137 = vector.shape_cast %126 : vector<16x1xi1> to vector<16x1xi1>
    %138 = vector.broadcast %137 : vector<16x1xi1> to vector<16x32xi1>
    %139 = arith.select %138, %136, %123 : vector<16x32xi1>, vector<16x32xf32>
    %140 = vector.extract_strided_slice %26 {offsets = [0, 7], sizes = [16, 1], strides = [1, 1]} : vector<16x8xbf16> to vector<16x1xbf16>
    %cst_30 = arith.constant 0.000000e+00 : bf16
    %141 = vector.broadcast %cst_30 : bf16 to vector<16x1xbf16>
    %142 = arith.cmpf ogt, %140, %141 : vector<16x1xbf16>
    %143 = vector.extract_strided_slice %27 {offsets = [7, 0], sizes = [1, 32], strides = [1, 1]} : vector<8x32xf32> to vector<1x32xf32>
    %144 = vector.broadcast %143 : vector<1x32xf32> to vector<16x32xf32>
    %145 = arith.maximumf %132, %144 : vector<16x32xf32>
    %146 = vector.shape_cast %142 : vector<16x1xi1> to vector<16x1xi1>
    %147 = vector.broadcast %146 : vector<16x1xi1> to vector<16x32xi1>
    %148 = arith.select %147, %145, %132 : vector<16x32xi1>, vector<16x32xf32>
    %cst_31 = arith.constant 0.000000e+00 : f32
    %149 = vector.broadcast %cst_31 : f32 to vector<1x32xf32>
    %150 = arith.subf %149, %143 : vector<1x32xf32>
    %151 = vector.broadcast %150 : vector<1x32xf32> to vector<16x32xf32>
    %152 = arith.maximumf %139, %151 : vector<16x32xf32>
    %153 = vector.shape_cast %142 : vector<16x1xi1> to vector<16x1xi1>
    %154 = vector.broadcast %153 : vector<16x1xi1> to vector<16x32xi1>
    %155 = arith.select %154, %152, %139 : vector<16x32xi1>, vector<16x32xf32>
    %156 = vector.extract_strided_slice %0 {offsets = [0, 8], sizes = [16, 8], strides = [1, 1]} : vector<16x16xbf16> to vector<16x8xbf16>
    %157 = vector.extract_strided_slice %5 {offsets = [8, 0], sizes = [8, 32], strides = [1, 1]} : vector<16x32xf32> to vector<8x32xf32>
    %158 = vector.extract_strided_slice %156 {offsets = [0, 0], sizes = [16, 1], strides = [1, 1]} : vector<16x8xbf16> to vector<16x1xbf16>
    %cst_32 = arith.constant 0.000000e+00 : bf16
    %159 = vector.broadcast %cst_32 : bf16 to vector<16x1xbf16>
    %160 = arith.cmpf ogt, %158, %159 : vector<16x1xbf16>
    %161 = vector.extract_strided_slice %157 {offsets = [0, 0], sizes = [1, 32], strides = [1, 1]} : vector<8x32xf32> to vector<1x32xf32>
    %162 = vector.broadcast %161 : vector<1x32xf32> to vector<16x32xf32>
    %163 = arith.maximumf %148, %162 : vector<16x32xf32>
    %164 = vector.shape_cast %160 : vector<16x1xi1> to vector<16x1xi1>
    %165 = vector.broadcast %164 : vector<16x1xi1> to vector<16x32xi1>
    %166 = arith.select %165, %163, %148 : vector<16x32xi1>, vector<16x32xf32>
    %cst_33 = arith.constant 0.000000e+00 : f32
    %167 = vector.broadcast %cst_33 : f32 to vector<1x32xf32>
    %168 = arith.subf %167, %161 : vector<1x32xf32>
    %169 = vector.broadcast %168 : vector<1x32xf32> to vector<16x32xf32>
    %170 = arith.maximumf %155, %169 : vector<16x32xf32>
    %171 = vector.shape_cast %160 : vector<16x1xi1> to vector<16x1xi1>
    %172 = vector.broadcast %171 : vector<16x1xi1> to vector<16x32xi1>
    %173 = arith.select %172, %170, %155 : vector<16x32xi1>, vector<16x32xf32>
    %174 = vector.extract_strided_slice %156 {offsets = [0, 1], sizes = [16, 1], strides = [1, 1]} : vector<16x8xbf16> to vector<16x1xbf16>
    %cst_34 = arith.constant 0.000000e+00 : bf16
    %175 = vector.broadcast %cst_34 : bf16 to vector<16x1xbf16>
    %176 = arith.cmpf ogt, %174, %175 : vector<16x1xbf16>
    %177 = vector.extract_strided_slice %157 {offsets = [1, 0], sizes = [1, 32], strides = [1, 1]} : vector<8x32xf32> to vector<1x32xf32>
    %178 = vector.broadcast %177 : vector<1x32xf32> to vector<16x32xf32>
    %179 = arith.maximumf %166, %178 : vector<16x32xf32>
    %180 = vector.shape_cast %176 : vector<16x1xi1> to vector<16x1xi1>
    %181 = vector.broadcast %180 : vector<16x1xi1> to vector<16x32xi1>
    %182 = arith.select %181, %179, %166 : vector<16x32xi1>, vector<16x32xf32>
    %cst_35 = arith.constant 0.000000e+00 : f32
    %183 = vector.broadcast %cst_35 : f32 to vector<1x32xf32>
    %184 = arith.subf %183, %177 : vector<1x32xf32>
    %185 = vector.broadcast %184 : vector<1x32xf32> to vector<16x32xf32>
    %186 = arith.maximumf %173, %185 : vector<16x32xf32>
    %187 = vector.shape_cast %176 : vector<16x1xi1> to vector<16x1xi1>
    %188 = vector.broadcast %187 : vector<16x1xi1> to vector<16x32xi1>
    %189 = arith.select %188, %186, %173 : vector<16x32xi1>, vector<16x32xf32>
    %190 = vector.extract_strided_slice %156 {offsets = [0, 2], sizes = [16, 1], strides = [1, 1]} : vector<16x8xbf16> to vector<16x1xbf16>
    %cst_36 = arith.constant 0.000000e+00 : bf16
    %191 = vector.broadcast %cst_36 : bf16 to vector<16x1xbf16>
    %192 = arith.cmpf ogt, %190, %191 : vector<16x1xbf16>
    %193 = vector.extract_strided_slice %157 {offsets = [2, 0], sizes = [1, 32], strides = [1, 1]} : vector<8x32xf32> to vector<1x32xf32>
    %194 = vector.broadcast %193 : vector<1x32xf32> to vector<16x32xf32>
    %195 = arith.maximumf %182, %194 : vector<16x32xf32>
    %196 = vector.shape_cast %192 : vector<16x1xi1> to vector<16x1xi1>
    %197 = vector.broadcast %196 : vector<16x1xi1> to vector<16x32xi1>
    %198 = arith.select %197, %195, %182 : vector<16x32xi1>, vector<16x32xf32>
    %cst_37 = arith.constant 0.000000e+00 : f32
    %199 = vector.broadcast %cst_37 : f32 to vector<1x32xf32>
    %200 = arith.subf %199, %193 : vector<1x32xf32>
    %201 = vector.broadcast %200 : vector<1x32xf32> to vector<16x32xf32>
    %202 = arith.maximumf %189, %201 : vector<16x32xf32>
    %203 = vector.shape_cast %192 : vector<16x1xi1> to vector<16x1xi1>
    %204 = vector.broadcast %203 : vector<16x1xi1> to vector<16x32xi1>
    %205 = arith.select %204, %202, %189 : vector<16x32xi1>, vector<16x32xf32>
    %206 = vector.extract_strided_slice %156 {offsets = [0, 3], sizes = [16, 1], strides = [1, 1]} : vector<16x8xbf16> to vector<16x1xbf16>
    %cst_38 = arith.constant 0.000000e+00 : bf16
    %207 = vector.broadcast %cst_38 : bf16 to vector<16x1xbf16>
    %208 = arith.cmpf ogt, %206, %207 : vector<16x1xbf16>
    %209 = vector.extract_strided_slice %157 {offsets = [3, 0], sizes = [1, 32], strides = [1, 1]} : vector<8x32xf32> to vector<1x32xf32>
    %210 = vector.broadcast %209 : vector<1x32xf32> to vector<16x32xf32>
    %211 = arith.maximumf %198, %210 : vector<16x32xf32>
    %212 = vector.shape_cast %208 : vector<16x1xi1> to vector<16x1xi1>
    %213 = vector.broadcast %212 : vector<16x1xi1> to vector<16x32xi1>
    %214 = arith.select %213, %211, %198 : vector<16x32xi1>, vector<16x32xf32>
    %cst_39 = arith.constant 0.000000e+00 : f32
    %215 = vector.broadcast %cst_39 : f32 to vector<1x32xf32>
    %216 = arith.subf %215, %209 : vector<1x32xf32>
    %217 = vector.broadcast %216 : vector<1x32xf32> to vector<16x32xf32>
    %218 = arith.maximumf %205, %217 : vector<16x32xf32>
    %219 = vector.shape_cast %208 : vector<16x1xi1> to vector<16x1xi1>
    %220 = vector.broadcast %219 : vector<16x1xi1> to vector<16x32xi1>
    %221 = arith.select %220, %218, %205 : vector<16x32xi1>, vector<16x32xf32>
    %222 = vector.extract_strided_slice %156 {offsets = [0, 4], sizes = [16, 1], strides = [1, 1]} : vector<16x8xbf16> to vector<16x1xbf16>
    %cst_40 = arith.constant 0.000000e+00 : bf16
    %223 = vector.broadcast %cst_40 : bf16 to vector<16x1xbf16>
    %224 = arith.cmpf ogt, %222, %223 : vector<16x1xbf16>
    %225 = vector.extract_strided_slice %157 {offsets = [4, 0], sizes = [1, 32], strides = [1, 1]} : vector<8x32xf32> to vector<1x32xf32>
    %226 = vector.broadcast %225 : vector<1x32xf32> to vector<16x32xf32>
    %227 = arith.maximumf %214, %226 : vector<16x32xf32>
    %228 = vector.shape_cast %224 : vector<16x1xi1> to vector<16x1xi1>
    %229 = vector.broadcast %228 : vector<16x1xi1> to vector<16x32xi1>
    %230 = arith.select %229, %227, %214 : vector<16x32xi1>, vector<16x32xf32>
    %cst_41 = arith.constant 0.000000e+00 : f32
    %231 = vector.broadcast %cst_41 : f32 to vector<1x32xf32>
    %232 = arith.subf %231, %225 : vector<1x32xf32>
    %233 = vector.broadcast %232 : vector<1x32xf32> to vector<16x32xf32>
    %234 = arith.maximumf %221, %233 : vector<16x32xf32>
    %235 = vector.shape_cast %224 : vector<16x1xi1> to vector<16x1xi1>
    %236 = vector.broadcast %235 : vector<16x1xi1> to vector<16x32xi1>
    %237 = arith.select %236, %234, %221 : vector<16x32xi1>, vector<16x32xf32>
    %238 = vector.extract_strided_slice %156 {offsets = [0, 5], sizes = [16, 1], strides = [1, 1]} : vector<16x8xbf16> to vector<16x1xbf16>
    %cst_42 = arith.constant 0.000000e+00 : bf16
    %239 = vector.broadcast %cst_42 : bf16 to vector<16x1xbf16>
    %240 = arith.cmpf ogt, %238, %239 : vector<16x1xbf16>
    %241 = vector.extract_strided_slice %157 {offsets = [5, 0], sizes = [1, 32], strides = [1, 1]} : vector<8x32xf32> to vector<1x32xf32>
    %242 = vector.broadcast %241 : vector<1x32xf32> to vector<16x32xf32>
    %243 = arith.maximumf %230, %242 : vector<16x32xf32>
    %244 = vector.shape_cast %240 : vector<16x1xi1> to vector<16x1xi1>
    %245 = vector.broadcast %244 : vector<16x1xi1> to vector<16x32xi1>
    %246 = arith.select %245, %243, %230 : vector<16x32xi1>, vector<16x32xf32>
    %cst_43 = arith.constant 0.000000e+00 : f32
    %247 = vector.broadcast %cst_43 : f32 to vector<1x32xf32>
    %248 = arith.subf %247, %241 : vector<1x32xf32>
    %249 = vector.broadcast %248 : vector<1x32xf32> to vector<16x32xf32>
    %250 = arith.maximumf %237, %249 : vector<16x32xf32>
    %251 = vector.shape_cast %240 : vector<16x1xi1> to vector<16x1xi1>
    %252 = vector.broadcast %251 : vector<16x1xi1> to vector<16x32xi1>
    %253 = arith.select %252, %250, %237 : vector<16x32xi1>, vector<16x32xf32>
    %254 = vector.extract_strided_slice %156 {offsets = [0, 6], sizes = [16, 1], strides = [1, 1]} : vector<16x8xbf16> to vector<16x1xbf16>
    %cst_44 = arith.constant 0.000000e+00 : bf16
    %255 = vector.broadcast %cst_44 : bf16 to vector<16x1xbf16>
    %256 = arith.cmpf ogt, %254, %255 : vector<16x1xbf16>
    %257 = vector.extract_strided_slice %157 {offsets = [6, 0], sizes = [1, 32], strides = [1, 1]} : vector<8x32xf32> to vector<1x32xf32>
    %258 = vector.broadcast %257 : vector<1x32xf32> to vector<16x32xf32>
    %259 = arith.maximumf %246, %258 : vector<16x32xf32>
    %260 = vector.shape_cast %256 : vector<16x1xi1> to vector<16x1xi1>
    %261 = vector.broadcast %260 : vector<16x1xi1> to vector<16x32xi1>
    %262 = arith.select %261, %259, %246 : vector<16x32xi1>, vector<16x32xf32>
    %cst_45 = arith.constant 0.000000e+00 : f32
    %263 = vector.broadcast %cst_45 : f32 to vector<1x32xf32>
    %264 = arith.subf %263, %257 : vector<1x32xf32>
    %265 = vector.broadcast %264 : vector<1x32xf32> to vector<16x32xf32>
    %266 = arith.maximumf %253, %265 : vector<16x32xf32>
    %267 = vector.shape_cast %256 : vector<16x1xi1> to vector<16x1xi1>
    %268 = vector.broadcast %267 : vector<16x1xi1> to vector<16x32xi1>
    %269 = arith.select %268, %266, %253 : vector<16x32xi1>, vector<16x32xf32>
    %270 = vector.extract_strided_slice %156 {offsets = [0, 7], sizes = [16, 1], strides = [1, 1]} : vector<16x8xbf16> to vector<16x1xbf16>
    %cst_46 = arith.constant 0.000000e+00 : bf16
    %271 = vector.broadcast %cst_46 : bf16 to vector<16x1xbf16>
    %272 = arith.cmpf ogt, %270, %271 : vector<16x1xbf16>
    %273 = vector.extract_strided_slice %157 {offsets = [7, 0], sizes = [1, 32], strides = [1, 1]} : vector<8x32xf32> to vector<1x32xf32>
    %274 = vector.broadcast %273 : vector<1x32xf32> to vector<16x32xf32>
    %275 = arith.maximumf %262, %274 : vector<16x32xf32>
    %276 = vector.shape_cast %272 : vector<16x1xi1> to vector<16x1xi1>
    %277 = vector.broadcast %276 : vector<16x1xi1> to vector<16x32xi1>
    %278 = arith.select %277, %275, %262 : vector<16x32xi1>, vector<16x32xf32>
    %cst_47 = arith.constant 0.000000e+00 : f32
    %279 = vector.broadcast %cst_47 : f32 to vector<1x32xf32>
    %280 = arith.subf %279, %273 : vector<1x32xf32>
    %281 = vector.broadcast %280 : vector<1x32xf32> to vector<16x32xf32>
    %282 = arith.maximumf %269, %281 : vector<16x32xf32>
    %283 = vector.shape_cast %272 : vector<16x1xi1> to vector<16x1xi1>
    %284 = vector.broadcast %283 : vector<16x1xi1> to vector<16x32xi1>
    %285 = arith.select %284, %282, %269 : vector<16x32xi1>, vector<16x32xf32>
    %cst_48 = arith.constant 0.000000e+00 : f32
    %286 = vector.broadcast %cst_48 : f32 to vector<16x32xf32>
    %287 = arith.subf %286, %285 : vector<16x32xf32>
    %288 = vector.broadcast %2 : vector<16x1xf32> to vector<16x32xf32>
    %289 = arith.mulf %287, %288 : vector<16x32xf32>
    %290 = vector.broadcast %2 : vector<16x1xf32> to vector<16x32xf32>
    %291 = arith.mulf %278, %290 : vector<16x32xf32>
    %292 = tpu.concatenate %12, %289, %291, %23 in 1 : vector<16x32xf32>, vector<16x32xf32>, vector<16x32xf32>, vector<16x32xf32> -> vector<16x128xf32>
    %293 = vector.broadcast %3 : vector<16x1xf32> to vector<16x128xf32>
    %294 = arith.mulf %293, %292 : vector<16x128xf32>
    %295 = vector.broadcast %4 : vector<16x1xf32> to vector<16x128xf32>
    %296 = arith.mulf %295, %292 : vector<16x128xf32>
    %297 = tpu.concatenate %292, %294, %296 in 1 : vector<16x128xf32>, vector<16x128xf32>, vector<16x128xf32> -> vector<16x384xf32>
    %298 = arith.truncf %297 : vector<16x384xf32> to vector<16x384xbf16>
    %c0_49 = arith.constant 0 : index
    %c0_50 = arith.constant 0 : index
    %299 = vector.load %arg6[%c0_49, %c0_50] : memref<384x32xbf16, #tpu.memory_space<vmem>>, vector<384x32xbf16>
    %cst_51 = arith.constant dense<0.000000e+00> : vector<16x32xf32>
    %300 = tpu.matmul %298, %299, %cst_51 {dimension_numbers = #tpu.dot_dimension_numbers<[1], [0], [0], [1], [0, 0, 1, 1], [], []>} : vector<16x384xbf16>, vector<384x32xbf16>, vector<16x32xf32> -> vector<16x32xf32>
    %c0_52 = arith.constant 0 : index
    %c0_53 = arith.constant 0 : index
    %301 = vector.load %arg7[%c0_52, %c0_53] : memref<1x32xf32, #tpu.memory_space<vmem>>, vector<1x32xf32>
    %302 = vector.broadcast %301 : vector<1x32xf32> to vector<16x32xf32>
    %303 = arith.addf %300, %302 : vector<16x32xf32>
    %cst_54 = arith.constant 0.000000e+00 : f32
    %304 = vector.broadcast %cst_54 : f32 to vector<16x32xf32>
    %305 = arith.maximumf %303, %304 : vector<16x32xf32>
    %cst_55 = arith.constant dense<0.000000e+00> : vector<32xf32>
    %306 = vector.multi_reduction <add>, %305, %cst_55 [0] : vector<16x32xf32> to vector<32xf32>
    %307 = vector.shape_cast %306 : vector<32xf32> to vector<1x32xf32>
    %cst_56 = arith.constant 1.600000e+01 : f32
    %308 = vector.broadcast %cst_56 : f32 to vector<1x32xf32>
    %309 = arith.divf %307, %308 : vector<1x32xf32>
    %310 = arith.mulf %305, %305 : vector<16x32xf32>
    %cst_57 = arith.constant dense<0.000000e+00> : vector<32xf32>
    %311 = vector.multi_reduction <add>, %310, %cst_57 [0] : vector<16x32xf32> to vector<32xf32>
    %312 = vector.shape_cast %311 : vector<32xf32> to vector<1x32xf32>
    %cst_58 = arith.constant 1.600000e+01 : f32
    %313 = vector.broadcast %cst_58 : f32 to vector<1x32xf32>
    %314 = arith.divf %312, %313 : vector<1x32xf32>
    %315 = arith.mulf %309, %309 : vector<1x32xf32>
    %316 = arith.subf %314, %315 : vector<1x32xf32>
    %cst_59 = arith.constant 0.000000e+00 : f32
    %317 = vector.broadcast %cst_59 : f32 to vector<1x32xf32>
    %318 = arith.maximumf %316, %317 : vector<1x32xf32>
    %319 = vector.broadcast %309 : vector<1x32xf32> to vector<16x32xf32>
    %320 = arith.subf %305, %319 : vector<16x32xf32>
    %cst_60 = arith.constant 9.99999974E-6 : f32
    %321 = vector.broadcast %cst_60 : f32 to vector<1x32xf32>
    %322 = arith.addf %318, %321 : vector<1x32xf32>
    %323 = math.rsqrt %322 : vector<1x32xf32>
    %324 = vector.broadcast %323 : vector<1x32xf32> to vector<16x32xf32>
    %325 = arith.mulf %320, %324 : vector<16x32xf32>
    %c0_61 = arith.constant 0 : index
    %c0_62 = arith.constant 0 : index
    %326 = vector.load %arg8[%c0_61, %c0_62] : memref<1x32xf32, #tpu.memory_space<vmem>>, vector<1x32xf32>
    %327 = vector.broadcast %326 : vector<1x32xf32> to vector<16x32xf32>
    %328 = arith.mulf %325, %327 : vector<16x32xf32>
    %c0_63 = arith.constant 0 : index
    %c0_64 = arith.constant 0 : index
    %329 = vector.load %arg9[%c0_63, %c0_64] : memref<1x32xf32, #tpu.memory_space<vmem>>, vector<1x32xf32>
    %330 = vector.broadcast %329 : vector<1x32xf32> to vector<16x32xf32>
    %331 = arith.addf %328, %330 : vector<16x32xf32>
    %332 = arith.truncf %331 : vector<16x32xf32> to vector<16x32xbf16>
    %cst_65 = arith.constant dense<0.000000e+00> : vector<16x32xf32>
    %333 = tpu.matmul %0, %332, %cst_65 {dimension_numbers = #tpu.dot_dimension_numbers<[1], [0], [0], [1], [0, 0, 1, 1], [], []>} : vector<16x16xbf16>, vector<16x32xbf16>, vector<16x32xf32> -> vector<16x32xf32>
    %334 = arith.mulf %331, %331 : vector<16x32xf32>
    %335 = arith.truncf %334 : vector<16x32xf32> to vector<16x32xbf16>
    %cst_66 = arith.constant dense<0.000000e+00> : vector<16x32xf32>
    %336 = tpu.matmul %0, %335, %cst_66 {dimension_numbers = #tpu.dot_dimension_numbers<[1], [0], [0], [1], [0, 0, 1, 1], [], []>} : vector<16x16xbf16>, vector<16x32xbf16>, vector<16x32xf32> -> vector<16x32xf32>
    %337 = vector.broadcast %1 : vector<16x1xf32> to vector<16x32xf32>
    %338 = arith.mulf %333, %337 : vector<16x32xf32>
    %339 = vector.broadcast %1 : vector<16x1xf32> to vector<16x32xf32>
    %340 = arith.mulf %336, %339 : vector<16x32xf32>
    %341 = arith.mulf %338, %338 : vector<16x32xf32>
    %342 = arith.subf %340, %341 : vector<16x32xf32>
    %cst_67 = arith.constant 0.000000e+00 : f32
    %343 = vector.broadcast %cst_67 : f32 to vector<16x32xf32>
    %344 = arith.maximumf %342, %343 : vector<16x32xf32>
    %cst_68 = arith.constant 9.99999974E-6 : f32
    %345 = vector.broadcast %cst_68 : f32 to vector<16x32xf32>
    %346 = arith.addf %344, %345 : vector<16x32xf32>
    %347 = math.sqrt %346 : vector<16x32xf32>
    %348 = vector.broadcast %2 : vector<16x1xf32> to vector<16x32xf32>
    %349 = arith.mulf %347, %348 : vector<16x32xf32>
    %cst_69 = arith.constant -1.000000e+30 : f32
    %350 = vector.broadcast %cst_69 : f32 to vector<16x32xf32>
    %cst_70 = arith.constant -1.000000e+30 : f32
    %351 = vector.broadcast %cst_70 : f32 to vector<16x32xf32>
    %352 = vector.extract_strided_slice %0 {offsets = [0, 0], sizes = [16, 8], strides = [1, 1]} : vector<16x16xbf16> to vector<16x8xbf16>
    %353 = vector.extract_strided_slice %331 {offsets = [0, 0], sizes = [8, 32], strides = [1, 1]} : vector<16x32xf32> to vector<8x32xf32>
    %354 = vector.extract_strided_slice %352 {offsets = [0, 0], sizes = [16, 1], strides = [1, 1]} : vector<16x8xbf16> to vector<16x1xbf16>
    %cst_71 = arith.constant 0.000000e+00 : bf16
    %355 = vector.broadcast %cst_71 : bf16 to vector<16x1xbf16>
    %356 = arith.cmpf ogt, %354, %355 : vector<16x1xbf16>
    %357 = vector.extract_strided_slice %353 {offsets = [0, 0], sizes = [1, 32], strides = [1, 1]} : vector<8x32xf32> to vector<1x32xf32>
    %358 = vector.broadcast %357 : vector<1x32xf32> to vector<16x32xf32>
    %359 = arith.maximumf %350, %358 : vector<16x32xf32>
    %360 = vector.shape_cast %356 : vector<16x1xi1> to vector<16x1xi1>
    %361 = vector.broadcast %360 : vector<16x1xi1> to vector<16x32xi1>
    %362 = arith.select %361, %359, %350 : vector<16x32xi1>, vector<16x32xf32>
    %cst_72 = arith.constant 0.000000e+00 : f32
    %363 = vector.broadcast %cst_72 : f32 to vector<1x32xf32>
    %364 = arith.subf %363, %357 : vector<1x32xf32>
    %365 = vector.broadcast %364 : vector<1x32xf32> to vector<16x32xf32>
    %366 = arith.maximumf %351, %365 : vector<16x32xf32>
    %367 = vector.shape_cast %356 : vector<16x1xi1> to vector<16x1xi1>
    %368 = vector.broadcast %367 : vector<16x1xi1> to vector<16x32xi1>
    %369 = arith.select %368, %366, %351 : vector<16x32xi1>, vector<16x32xf32>
    %370 = vector.extract_strided_slice %352 {offsets = [0, 1], sizes = [16, 1], strides = [1, 1]} : vector<16x8xbf16> to vector<16x1xbf16>
    %cst_73 = arith.constant 0.000000e+00 : bf16
    %371 = vector.broadcast %cst_73 : bf16 to vector<16x1xbf16>
    %372 = arith.cmpf ogt, %370, %371 : vector<16x1xbf16>
    %373 = vector.extract_strided_slice %353 {offsets = [1, 0], sizes = [1, 32], strides = [1, 1]} : vector<8x32xf32> to vector<1x32xf32>
    %374 = vector.broadcast %373 : vector<1x32xf32> to vector<16x32xf32>
    %375 = arith.maximumf %362, %374 : vector<16x32xf32>
    %376 = vector.shape_cast %372 : vector<16x1xi1> to vector<16x1xi1>
    %377 = vector.broadcast %376 : vector<16x1xi1> to vector<16x32xi1>
    %378 = arith.select %377, %375, %362 : vector<16x32xi1>, vector<16x32xf32>
    %cst_74 = arith.constant 0.000000e+00 : f32
    %379 = vector.broadcast %cst_74 : f32 to vector<1x32xf32>
    %380 = arith.subf %379, %373 : vector<1x32xf32>
    %381 = vector.broadcast %380 : vector<1x32xf32> to vector<16x32xf32>
    %382 = arith.maximumf %369, %381 : vector<16x32xf32>
    %383 = vector.shape_cast %372 : vector<16x1xi1> to vector<16x1xi1>
    %384 = vector.broadcast %383 : vector<16x1xi1> to vector<16x32xi1>
    %385 = arith.select %384, %382, %369 : vector<16x32xi1>, vector<16x32xf32>
    %386 = vector.extract_strided_slice %352 {offsets = [0, 2], sizes = [16, 1], strides = [1, 1]} : vector<16x8xbf16> to vector<16x1xbf16>
    %cst_75 = arith.constant 0.000000e+00 : bf16
    %387 = vector.broadcast %cst_75 : bf16 to vector<16x1xbf16>
    %388 = arith.cmpf ogt, %386, %387 : vector<16x1xbf16>
    %389 = vector.extract_strided_slice %353 {offsets = [2, 0], sizes = [1, 32], strides = [1, 1]} : vector<8x32xf32> to vector<1x32xf32>
    %390 = vector.broadcast %389 : vector<1x32xf32> to vector<16x32xf32>
    %391 = arith.maximumf %378, %390 : vector<16x32xf32>
    %392 = vector.shape_cast %388 : vector<16x1xi1> to vector<16x1xi1>
    %393 = vector.broadcast %392 : vector<16x1xi1> to vector<16x32xi1>
    %394 = arith.select %393, %391, %378 : vector<16x32xi1>, vector<16x32xf32>
    %cst_76 = arith.constant 0.000000e+00 : f32
    %395 = vector.broadcast %cst_76 : f32 to vector<1x32xf32>
    %396 = arith.subf %395, %389 : vector<1x32xf32>
    %397 = vector.broadcast %396 : vector<1x32xf32> to vector<16x32xf32>
    %398 = arith.maximumf %385, %397 : vector<16x32xf32>
    %399 = vector.shape_cast %388 : vector<16x1xi1> to vector<16x1xi1>
    %400 = vector.broadcast %399 : vector<16x1xi1> to vector<16x32xi1>
    %401 = arith.select %400, %398, %385 : vector<16x32xi1>, vector<16x32xf32>
    %402 = vector.extract_strided_slice %352 {offsets = [0, 3], sizes = [16, 1], strides = [1, 1]} : vector<16x8xbf16> to vector<16x1xbf16>
    %cst_77 = arith.constant 0.000000e+00 : bf16
    %403 = vector.broadcast %cst_77 : bf16 to vector<16x1xbf16>
    %404 = arith.cmpf ogt, %402, %403 : vector<16x1xbf16>
    %405 = vector.extract_strided_slice %353 {offsets = [3, 0], sizes = [1, 32], strides = [1, 1]} : vector<8x32xf32> to vector<1x32xf32>
    %406 = vector.broadcast %405 : vector<1x32xf32> to vector<16x32xf32>
    %407 = arith.maximumf %394, %406 : vector<16x32xf32>
    %408 = vector.shape_cast %404 : vector<16x1xi1> to vector<16x1xi1>
    %409 = vector.broadcast %408 : vector<16x1xi1> to vector<16x32xi1>
    %410 = arith.select %409, %407, %394 : vector<16x32xi1>, vector<16x32xf32>
    %cst_78 = arith.constant 0.000000e+00 : f32
    %411 = vector.broadcast %cst_78 : f32 to vector<1x32xf32>
    %412 = arith.subf %411, %405 : vector<1x32xf32>
    %413 = vector.broadcast %412 : vector<1x32xf32> to vector<16x32xf32>
    %414 = arith.maximumf %401, %413 : vector<16x32xf32>
    %415 = vector.shape_cast %404 : vector<16x1xi1> to vector<16x1xi1>
    %416 = vector.broadcast %415 : vector<16x1xi1> to vector<16x32xi1>
    %417 = arith.select %416, %414, %401 : vector<16x32xi1>, vector<16x32xf32>
    %418 = vector.extract_strided_slice %352 {offsets = [0, 4], sizes = [16, 1], strides = [1, 1]} : vector<16x8xbf16> to vector<16x1xbf16>
    %cst_79 = arith.constant 0.000000e+00 : bf16
    %419 = vector.broadcast %cst_79 : bf16 to vector<16x1xbf16>
    %420 = arith.cmpf ogt, %418, %419 : vector<16x1xbf16>
    %421 = vector.extract_strided_slice %353 {offsets = [4, 0], sizes = [1, 32], strides = [1, 1]} : vector<8x32xf32> to vector<1x32xf32>
    %422 = vector.broadcast %421 : vector<1x32xf32> to vector<16x32xf32>
    %423 = arith.maximumf %410, %422 : vector<16x32xf32>
    %424 = vector.shape_cast %420 : vector<16x1xi1> to vector<16x1xi1>
    %425 = vector.broadcast %424 : vector<16x1xi1> to vector<16x32xi1>
    %426 = arith.select %425, %423, %410 : vector<16x32xi1>, vector<16x32xf32>
    %cst_80 = arith.constant 0.000000e+00 : f32
    %427 = vector.broadcast %cst_80 : f32 to vector<1x32xf32>
    %428 = arith.subf %427, %421 : vector<1x32xf32>
    %429 = vector.broadcast %428 : vector<1x32xf32> to vector<16x32xf32>
    %430 = arith.maximumf %417, %429 : vector<16x32xf32>
    %431 = vector.shape_cast %420 : vector<16x1xi1> to vector<16x1xi1>
    %432 = vector.broadcast %431 : vector<16x1xi1> to vector<16x32xi1>
    %433 = arith.select %432, %430, %417 : vector<16x32xi1>, vector<16x32xf32>
    %434 = vector.extract_strided_slice %352 {offsets = [0, 5], sizes = [16, 1], strides = [1, 1]} : vector<16x8xbf16> to vector<16x1xbf16>
    %cst_81 = arith.constant 0.000000e+00 : bf16
    %435 = vector.broadcast %cst_81 : bf16 to vector<16x1xbf16>
    %436 = arith.cmpf ogt, %434, %435 : vector<16x1xbf16>
    %437 = vector.extract_strided_slice %353 {offsets = [5, 0], sizes = [1, 32], strides = [1, 1]} : vector<8x32xf32> to vector<1x32xf32>
    %438 = vector.broadcast %437 : vector<1x32xf32> to vector<16x32xf32>
    %439 = arith.maximumf %426, %438 : vector<16x32xf32>
    %440 = vector.shape_cast %436 : vector<16x1xi1> to vector<16x1xi1>
    %441 = vector.broadcast %440 : vector<16x1xi1> to vector<16x32xi1>
    %442 = arith.select %441, %439, %426 : vector<16x32xi1>, vector<16x32xf32>
    %cst_82 = arith.constant 0.000000e+00 : f32
    %443 = vector.broadcast %cst_82 : f32 to vector<1x32xf32>
    %444 = arith.subf %443, %437 : vector<1x32xf32>
    %445 = vector.broadcast %444 : vector<1x32xf32> to vector<16x32xf32>
    %446 = arith.maximumf %433, %445 : vector<16x32xf32>
    %447 = vector.shape_cast %436 : vector<16x1xi1> to vector<16x1xi1>
    %448 = vector.broadcast %447 : vector<16x1xi1> to vector<16x32xi1>
    %449 = arith.select %448, %446, %433 : vector<16x32xi1>, vector<16x32xf32>
    %450 = vector.extract_strided_slice %352 {offsets = [0, 6], sizes = [16, 1], strides = [1, 1]} : vector<16x8xbf16> to vector<16x1xbf16>
    %cst_83 = arith.constant 0.000000e+00 : bf16
    %451 = vector.broadcast %cst_83 : bf16 to vector<16x1xbf16>
    %452 = arith.cmpf ogt, %450, %451 : vector<16x1xbf16>
    %453 = vector.extract_strided_slice %353 {offsets = [6, 0], sizes = [1, 32], strides = [1, 1]} : vector<8x32xf32> to vector<1x32xf32>
    %454 = vector.broadcast %453 : vector<1x32xf32> to vector<16x32xf32>
    %455 = arith.maximumf %442, %454 : vector<16x32xf32>
    %456 = vector.shape_cast %452 : vector<16x1xi1> to vector<16x1xi1>
    %457 = vector.broadcast %456 : vector<16x1xi1> to vector<16x32xi1>
    %458 = arith.select %457, %455, %442 : vector<16x32xi1>, vector<16x32xf32>
    %cst_84 = arith.constant 0.000000e+00 : f32
    %459 = vector.broadcast %cst_84 : f32 to vector<1x32xf32>
    %460 = arith.subf %459, %453 : vector<1x32xf32>
    %461 = vector.broadcast %460 : vector<1x32xf32> to vector<16x32xf32>
    %462 = arith.maximumf %449, %461 : vector<16x32xf32>
    %463 = vector.shape_cast %452 : vector<16x1xi1> to vector<16x1xi1>
    %464 = vector.broadcast %463 : vector<16x1xi1> to vector<16x32xi1>
    %465 = arith.select %464, %462, %449 : vector<16x32xi1>, vector<16x32xf32>
    %466 = vector.extract_strided_slice %352 {offsets = [0, 7], sizes = [16, 1], strides = [1, 1]} : vector<16x8xbf16> to vector<16x1xbf16>
    %cst_85 = arith.constant 0.000000e+00 : bf16
    %467 = vector.broadcast %cst_85 : bf16 to vector<16x1xbf16>
    %468 = arith.cmpf ogt, %466, %467 : vector<16x1xbf16>
    %469 = vector.extract_strided_slice %353 {offsets = [7, 0], sizes = [1, 32], strides = [1, 1]} : vector<8x32xf32> to vector<1x32xf32>
    %470 = vector.broadcast %469 : vector<1x32xf32> to vector<16x32xf32>
    %471 = arith.maximumf %458, %470 : vector<16x32xf32>
    %472 = vector.shape_cast %468 : vector<16x1xi1> to vector<16x1xi1>
    %473 = vector.broadcast %472 : vector<16x1xi1> to vector<16x32xi1>
    %474 = arith.select %473, %471, %458 : vector<16x32xi1>, vector<16x32xf32>
    %cst_86 = arith.constant 0.000000e+00 : f32
    %475 = vector.broadcast %cst_86 : f32 to vector<1x32xf32>
    %476 = arith.subf %475, %469 : vector<1x32xf32>
    %477 = vector.broadcast %476 : vector<1x32xf32> to vector<16x32xf32>
    %478 = arith.maximumf %465, %477 : vector<16x32xf32>
    %479 = vector.shape_cast %468 : vector<16x1xi1> to vector<16x1xi1>
    %480 = vector.broadcast %479 : vector<16x1xi1> to vector<16x32xi1>
    %481 = arith.select %480, %478, %465 : vector<16x32xi1>, vector<16x32xf32>
    %482 = vector.extract_strided_slice %0 {offsets = [0, 8], sizes = [16, 8], strides = [1, 1]} : vector<16x16xbf16> to vector<16x8xbf16>
    %483 = vector.extract_strided_slice %331 {offsets = [8, 0], sizes = [8, 32], strides = [1, 1]} : vector<16x32xf32> to vector<8x32xf32>
    %484 = vector.extract_strided_slice %482 {offsets = [0, 0], sizes = [16, 1], strides = [1, 1]} : vector<16x8xbf16> to vector<16x1xbf16>
    %cst_87 = arith.constant 0.000000e+00 : bf16
    %485 = vector.broadcast %cst_87 : bf16 to vector<16x1xbf16>
    %486 = arith.cmpf ogt, %484, %485 : vector<16x1xbf16>
    %487 = vector.extract_strided_slice %483 {offsets = [0, 0], sizes = [1, 32], strides = [1, 1]} : vector<8x32xf32> to vector<1x32xf32>
    %488 = vector.broadcast %487 : vector<1x32xf32> to vector<16x32xf32>
    %489 = arith.maximumf %474, %488 : vector<16x32xf32>
    %490 = vector.shape_cast %486 : vector<16x1xi1> to vector<16x1xi1>
    %491 = vector.broadcast %490 : vector<16x1xi1> to vector<16x32xi1>
    %492 = arith.select %491, %489, %474 : vector<16x32xi1>, vector<16x32xf32>
    %cst_88 = arith.constant 0.000000e+00 : f32
    %493 = vector.broadcast %cst_88 : f32 to vector<1x32xf32>
    %494 = arith.subf %493, %487 : vector<1x32xf32>
    %495 = vector.broadcast %494 : vector<1x32xf32> to vector<16x32xf32>
    %496 = arith.maximumf %481, %495 : vector<16x32xf32>
    %497 = vector.shape_cast %486 : vector<16x1xi1> to vector<16x1xi1>
    %498 = vector.broadcast %497 : vector<16x1xi1> to vector<16x32xi1>
    %499 = arith.select %498, %496, %481 : vector<16x32xi1>, vector<16x32xf32>
    %500 = vector.extract_strided_slice %482 {offsets = [0, 1], sizes = [16, 1], strides = [1, 1]} : vector<16x8xbf16> to vector<16x1xbf16>
    %cst_89 = arith.constant 0.000000e+00 : bf16
    %501 = vector.broadcast %cst_89 : bf16 to vector<16x1xbf16>
    %502 = arith.cmpf ogt, %500, %501 : vector<16x1xbf16>
    %503 = vector.extract_strided_slice %483 {offsets = [1, 0], sizes = [1, 32], strides = [1, 1]} : vector<8x32xf32> to vector<1x32xf32>
    %504 = vector.broadcast %503 : vector<1x32xf32> to vector<16x32xf32>
    %505 = arith.maximumf %492, %504 : vector<16x32xf32>
    %506 = vector.shape_cast %502 : vector<16x1xi1> to vector<16x1xi1>
    %507 = vector.broadcast %506 : vector<16x1xi1> to vector<16x32xi1>
    %508 = arith.select %507, %505, %492 : vector<16x32xi1>, vector<16x32xf32>
    %cst_90 = arith.constant 0.000000e+00 : f32
    %509 = vector.broadcast %cst_90 : f32 to vector<1x32xf32>
    %510 = arith.subf %509, %503 : vector<1x32xf32>
    %511 = vector.broadcast %510 : vector<1x32xf32> to vector<16x32xf32>
    %512 = arith.maximumf %499, %511 : vector<16x32xf32>
    %513 = vector.shape_cast %502 : vector<16x1xi1> to vector<16x1xi1>
    %514 = vector.broadcast %513 : vector<16x1xi1> to vector<16x32xi1>
    %515 = arith.select %514, %512, %499 : vector<16x32xi1>, vector<16x32xf32>
    %516 = vector.extract_strided_slice %482 {offsets = [0, 2], sizes = [16, 1], strides = [1, 1]} : vector<16x8xbf16> to vector<16x1xbf16>
    %cst_91 = arith.constant 0.000000e+00 : bf16
    %517 = vector.broadcast %cst_91 : bf16 to vector<16x1xbf16>
    %518 = arith.cmpf ogt, %516, %517 : vector<16x1xbf16>
    %519 = vector.extract_strided_slice %483 {offsets = [2, 0], sizes = [1, 32], strides = [1, 1]} : vector<8x32xf32> to vector<1x32xf32>
    %520 = vector.broadcast %519 : vector<1x32xf32> to vector<16x32xf32>
    %521 = arith.maximumf %508, %520 : vector<16x32xf32>
    %522 = vector.shape_cast %518 : vector<16x1xi1> to vector<16x1xi1>
    %523 = vector.broadcast %522 : vector<16x1xi1> to vector<16x32xi1>
    %524 = arith.select %523, %521, %508 : vector<16x32xi1>, vector<16x32xf32>
    %cst_92 = arith.constant 0.000000e+00 : f32
    %525 = vector.broadcast %cst_92 : f32 to vector<1x32xf32>
    %526 = arith.subf %525, %519 : vector<1x32xf32>
    %527 = vector.broadcast %526 : vector<1x32xf32> to vector<16x32xf32>
    %528 = arith.maximumf %515, %527 : vector<16x32xf32>
    %529 = vector.shape_cast %518 : vector<16x1xi1> to vector<16x1xi1>
    %530 = vector.broadcast %529 : vector<16x1xi1> to vector<16x32xi1>
    %531 = arith.select %530, %528, %515 : vector<16x32xi1>, vector<16x32xf32>
    %532 = vector.extract_strided_slice %482 {offsets = [0, 3], sizes = [16, 1], strides = [1, 1]} : vector<16x8xbf16> to vector<16x1xbf16>
    %cst_93 = arith.constant 0.000000e+00 : bf16
    %533 = vector.broadcast %cst_93 : bf16 to vector<16x1xbf16>
    %534 = arith.cmpf ogt, %532, %533 : vector<16x1xbf16>
    %535 = vector.extract_strided_slice %483 {offsets = [3, 0], sizes = [1, 32], strides = [1, 1]} : vector<8x32xf32> to vector<1x32xf32>
    %536 = vector.broadcast %535 : vector<1x32xf32> to vector<16x32xf32>
    %537 = arith.maximumf %524, %536 : vector<16x32xf32>
    %538 = vector.shape_cast %534 : vector<16x1xi1> to vector<16x1xi1>
    %539 = vector.broadcast %538 : vector<16x1xi1> to vector<16x32xi1>
    %540 = arith.select %539, %537, %524 : vector<16x32xi1>, vector<16x32xf32>
    %cst_94 = arith.constant 0.000000e+00 : f32
    %541 = vector.broadcast %cst_94 : f32 to vector<1x32xf32>
    %542 = arith.subf %541, %535 : vector<1x32xf32>
    %543 = vector.broadcast %542 : vector<1x32xf32> to vector<16x32xf32>
    %544 = arith.maximumf %531, %543 : vector<16x32xf32>
    %545 = vector.shape_cast %534 : vector<16x1xi1> to vector<16x1xi1>
    %546 = vector.broadcast %545 : vector<16x1xi1> to vector<16x32xi1>
    %547 = arith.select %546, %544, %531 : vector<16x32xi1>, vector<16x32xf32>
    %548 = vector.extract_strided_slice %482 {offsets = [0, 4], sizes = [16, 1], strides = [1, 1]} : vector<16x8xbf16> to vector<16x1xbf16>
    %cst_95 = arith.constant 0.000000e+00 : bf16
    %549 = vector.broadcast %cst_95 : bf16 to vector<16x1xbf16>
    %550 = arith.cmpf ogt, %548, %549 : vector<16x1xbf16>
    %551 = vector.extract_strided_slice %483 {offsets = [4, 0], sizes = [1, 32], strides = [1, 1]} : vector<8x32xf32> to vector<1x32xf32>
    %552 = vector.broadcast %551 : vector<1x32xf32> to vector<16x32xf32>
    %553 = arith.maximumf %540, %552 : vector<16x32xf32>
    %554 = vector.shape_cast %550 : vector<16x1xi1> to vector<16x1xi1>
    %555 = vector.broadcast %554 : vector<16x1xi1> to vector<16x32xi1>
    %556 = arith.select %555, %553, %540 : vector<16x32xi1>, vector<16x32xf32>
    %cst_96 = arith.constant 0.000000e+00 : f32
    %557 = vector.broadcast %cst_96 : f32 to vector<1x32xf32>
    %558 = arith.subf %557, %551 : vector<1x32xf32>
    %559 = vector.broadcast %558 : vector<1x32xf32> to vector<16x32xf32>
    %560 = arith.maximumf %547, %559 : vector<16x32xf32>
    %561 = vector.shape_cast %550 : vector<16x1xi1> to vector<16x1xi1>
    %562 = vector.broadcast %561 : vector<16x1xi1> to vector<16x32xi1>
    %563 = arith.select %562, %560, %547 : vector<16x32xi1>, vector<16x32xf32>
    %564 = vector.extract_strided_slice %482 {offsets = [0, 5], sizes = [16, 1], strides = [1, 1]} : vector<16x8xbf16> to vector<16x1xbf16>
    %cst_97 = arith.constant 0.000000e+00 : bf16
    %565 = vector.broadcast %cst_97 : bf16 to vector<16x1xbf16>
    %566 = arith.cmpf ogt, %564, %565 : vector<16x1xbf16>
    %567 = vector.extract_strided_slice %483 {offsets = [5, 0], sizes = [1, 32], strides = [1, 1]} : vector<8x32xf32> to vector<1x32xf32>
    %568 = vector.broadcast %567 : vector<1x32xf32> to vector<16x32xf32>
    %569 = arith.maximumf %556, %568 : vector<16x32xf32>
    %570 = vector.shape_cast %566 : vector<16x1xi1> to vector<16x1xi1>
    %571 = vector.broadcast %570 : vector<16x1xi1> to vector<16x32xi1>
    %572 = arith.select %571, %569, %556 : vector<16x32xi1>, vector<16x32xf32>
    %cst_98 = arith.constant 0.000000e+00 : f32
    %573 = vector.broadcast %cst_98 : f32 to vector<1x32xf32>
    %574 = arith.subf %573, %567 : vector<1x32xf32>
    %575 = vector.broadcast %574 : vector<1x32xf32> to vector<16x32xf32>
    %576 = arith.maximumf %563, %575 : vector<16x32xf32>
    %577 = vector.shape_cast %566 : vector<16x1xi1> to vector<16x1xi1>
    %578 = vector.broadcast %577 : vector<16x1xi1> to vector<16x32xi1>
    %579 = arith.select %578, %576, %563 : vector<16x32xi1>, vector<16x32xf32>
    %580 = vector.extract_strided_slice %482 {offsets = [0, 6], sizes = [16, 1], strides = [1, 1]} : vector<16x8xbf16> to vector<16x1xbf16>
    %cst_99 = arith.constant 0.000000e+00 : bf16
    %581 = vector.broadcast %cst_99 : bf16 to vector<16x1xbf16>
    %582 = arith.cmpf ogt, %580, %581 : vector<16x1xbf16>
    %583 = vector.extract_strided_slice %483 {offsets = [6, 0], sizes = [1, 32], strides = [1, 1]} : vector<8x32xf32> to vector<1x32xf32>
    %584 = vector.broadcast %583 : vector<1x32xf32> to vector<16x32xf32>
    %585 = arith.maximumf %572, %584 : vector<16x32xf32>
    %586 = vector.shape_cast %582 : vector<16x1xi1> to vector<16x1xi1>
    %587 = vector.broadcast %586 : vector<16x1xi1> to vector<16x32xi1>
    %588 = arith.select %587, %585, %572 : vector<16x32xi1>, vector<16x32xf32>
    %cst_100 = arith.constant 0.000000e+00 : f32
    %589 = vector.broadcast %cst_100 : f32 to vector<1x32xf32>
    %590 = arith.subf %589, %583 : vector<1x32xf32>
    %591 = vector.broadcast %590 : vector<1x32xf32> to vector<16x32xf32>
    %592 = arith.maximumf %579, %591 : vector<16x32xf32>
    %593 = vector.shape_cast %582 : vector<16x1xi1> to vector<16x1xi1>
    %594 = vector.broadcast %593 : vector<16x1xi1> to vector<16x32xi1>
    %595 = arith.select %594, %592, %579 : vector<16x32xi1>, vector<16x32xf32>
    %596 = vector.extract_strided_slice %482 {offsets = [0, 7], sizes = [16, 1], strides = [1, 1]} : vector<16x8xbf16> to vector<16x1xbf16>
    %cst_101 = arith.constant 0.000000e+00 : bf16
    %597 = vector.broadcast %cst_101 : bf16 to vector<16x1xbf16>
    %598 = arith.cmpf ogt, %596, %597 : vector<16x1xbf16>
    %599 = vector.extract_strided_slice %483 {offsets = [7, 0], sizes = [1, 32], strides = [1, 1]} : vector<8x32xf32> to vector<1x32xf32>
    %600 = vector.broadcast %599 : vector<1x32xf32> to vector<16x32xf32>
    %601 = arith.maximumf %588, %600 : vector<16x32xf32>
    %602 = vector.shape_cast %598 : vector<16x1xi1> to vector<16x1xi1>
    %603 = vector.broadcast %602 : vector<16x1xi1> to vector<16x32xi1>
    %604 = arith.select %603, %601, %588 : vector<16x32xi1>, vector<16x32xf32>
    %cst_102 = arith.constant 0.000000e+00 : f32
    %605 = vector.broadcast %cst_102 : f32 to vector<1x32xf32>
    %606 = arith.subf %605, %599 : vector<1x32xf32>
    %607 = vector.broadcast %606 : vector<1x32xf32> to vector<16x32xf32>
    %608 = arith.maximumf %595, %607 : vector<16x32xf32>
    %609 = vector.shape_cast %598 : vector<16x1xi1> to vector<16x1xi1>
    %610 = vector.broadcast %609 : vector<16x1xi1> to vector<16x32xi1>
    %611 = arith.select %610, %608, %595 : vector<16x32xi1>, vector<16x32xf32>
    %cst_103 = arith.constant 0.000000e+00 : f32
    %612 = vector.broadcast %cst_103 : f32 to vector<16x32xf32>
    %613 = arith.subf %612, %611 : vector<16x32xf32>
    %614 = vector.broadcast %2 : vector<16x1xf32> to vector<16x32xf32>
    %615 = arith.mulf %613, %614 : vector<16x32xf32>
    %616 = vector.broadcast %2 : vector<16x1xf32> to vector<16x32xf32>
    %617 = arith.mulf %604, %616 : vector<16x32xf32>
    %618 = tpu.concatenate %338, %615, %617, %349 in 1 : vector<16x32xf32>, vector<16x32xf32>, vector<16x32xf32>, vector<16x32xf32> -> vector<16x128xf32>
    %619 = vector.broadcast %3 : vector<16x1xf32> to vector<16x128xf32>
    %620 = arith.mulf %619, %618 : vector<16x128xf32>
    %621 = vector.broadcast %4 : vector<16x1xf32> to vector<16x128xf32>
    %622 = arith.mulf %621, %618 : vector<16x128xf32>
    %623 = tpu.concatenate %618, %620, %622 in 1 : vector<16x128xf32>, vector<16x128xf32>, vector<16x128xf32> -> vector<16x384xf32>
    %624 = arith.truncf %623 : vector<16x384xf32> to vector<16x384xbf16>
    %c0_104 = arith.constant 0 : index
    %c0_105 = arith.constant 0 : index
    %625 = vector.load %arg10[%c0_104, %c0_105] : memref<384x64xbf16, #tpu.memory_space<vmem>>, vector<384x64xbf16>
    %cst_106 = arith.constant dense<0.000000e+00> : vector<16x64xf32>
    %626 = tpu.matmul %624, %625, %cst_106 {dimension_numbers = #tpu.dot_dimension_numbers<[1], [0], [0], [1], [0, 0, 1, 1], [], []>} : vector<16x384xbf16>, vector<384x64xbf16>, vector<16x64xf32> -> vector<16x64xf32>
    %c0_107 = arith.constant 0 : index
    %c0_108 = arith.constant 0 : index
    %627 = vector.load %arg11[%c0_107, %c0_108] : memref<1x64xf32, #tpu.memory_space<vmem>>, vector<1x64xf32>
    %628 = vector.broadcast %627 : vector<1x64xf32> to vector<16x64xf32>
    %629 = arith.addf %626, %628 : vector<16x64xf32>
    %cst_109 = arith.constant 0.000000e+00 : f32
    %630 = vector.broadcast %cst_109 : f32 to vector<16x64xf32>
    %631 = arith.maximumf %629, %630 : vector<16x64xf32>
    %cst_110 = arith.constant dense<0.000000e+00> : vector<64xf32>
    %632 = vector.multi_reduction <add>, %631, %cst_110 [0] : vector<16x64xf32> to vector<64xf32>
    %633 = vector.shape_cast %632 : vector<64xf32> to vector<1x64xf32>
    %cst_111 = arith.constant 1.600000e+01 : f32
    %634 = vector.broadcast %cst_111 : f32 to vector<1x64xf32>
    %635 = arith.divf %633, %634 : vector<1x64xf32>
    %636 = arith.mulf %631, %631 : vector<16x64xf32>
    %cst_112 = arith.constant dense<0.000000e+00> : vector<64xf32>
    %637 = vector.multi_reduction <add>, %636, %cst_112 [0] : vector<16x64xf32> to vector<64xf32>
    %638 = vector.shape_cast %637 : vector<64xf32> to vector<1x64xf32>
    %cst_113 = arith.constant 1.600000e+01 : f32
    %639 = vector.broadcast %cst_113 : f32 to vector<1x64xf32>
    %640 = arith.divf %638, %639 : vector<1x64xf32>
    %641 = arith.mulf %635, %635 : vector<1x64xf32>
    %642 = arith.subf %640, %641 : vector<1x64xf32>
    %cst_114 = arith.constant 0.000000e+00 : f32
    %643 = vector.broadcast %cst_114 : f32 to vector<1x64xf32>
    %644 = arith.maximumf %642, %643 : vector<1x64xf32>
    %645 = vector.broadcast %635 : vector<1x64xf32> to vector<16x64xf32>
    %646 = arith.subf %631, %645 : vector<16x64xf32>
    %cst_115 = arith.constant 9.99999974E-6 : f32
    %647 = vector.broadcast %cst_115 : f32 to vector<1x64xf32>
    %648 = arith.addf %644, %647 : vector<1x64xf32>
    %649 = math.rsqrt %648 : vector<1x64xf32>
    %650 = vector.broadcast %649 : vector<1x64xf32> to vector<16x64xf32>
    %651 = arith.mulf %646, %650 : vector<16x64xf32>
    %c0_116 = arith.constant 0 : index
    %c0_117 = arith.constant 0 : index
    %652 = vector.load %arg12[%c0_116, %c0_117] : memref<1x64xf32, #tpu.memory_space<vmem>>, vector<1x64xf32>
    %653 = vector.broadcast %652 : vector<1x64xf32> to vector<16x64xf32>
    %654 = arith.mulf %651, %653 : vector<16x64xf32>
    %c0_118 = arith.constant 0 : index
    %c0_119 = arith.constant 0 : index
    %655 = vector.load %arg13[%c0_118, %c0_119] : memref<1x64xf32, #tpu.memory_space<vmem>>, vector<1x64xf32>
    %656 = vector.broadcast %655 : vector<1x64xf32> to vector<16x64xf32>
    %657 = arith.addf %654, %656 : vector<16x64xf32>
    %658 = arith.truncf %657 : vector<16x64xf32> to vector<16x64xbf16>
    %cst_120 = arith.constant dense<0.000000e+00> : vector<16x64xf32>
    %659 = tpu.matmul %0, %658, %cst_120 {dimension_numbers = #tpu.dot_dimension_numbers<[1], [0], [0], [1], [0, 0, 1, 1], [], []>} : vector<16x16xbf16>, vector<16x64xbf16>, vector<16x64xf32> -> vector<16x64xf32>
    %660 = arith.mulf %657, %657 : vector<16x64xf32>
    %661 = arith.truncf %660 : vector<16x64xf32> to vector<16x64xbf16>
    %cst_121 = arith.constant dense<0.000000e+00> : vector<16x64xf32>
    %662 = tpu.matmul %0, %661, %cst_121 {dimension_numbers = #tpu.dot_dimension_numbers<[1], [0], [0], [1], [0, 0, 1, 1], [], []>} : vector<16x16xbf16>, vector<16x64xbf16>, vector<16x64xf32> -> vector<16x64xf32>
    %663 = vector.broadcast %1 : vector<16x1xf32> to vector<16x64xf32>
    %664 = arith.mulf %659, %663 : vector<16x64xf32>
    %665 = vector.broadcast %1 : vector<16x1xf32> to vector<16x64xf32>
    %666 = arith.mulf %662, %665 : vector<16x64xf32>
    %667 = arith.mulf %664, %664 : vector<16x64xf32>
    %668 = arith.subf %666, %667 : vector<16x64xf32>
    %cst_122 = arith.constant 0.000000e+00 : f32
    %669 = vector.broadcast %cst_122 : f32 to vector<16x64xf32>
    %670 = arith.maximumf %668, %669 : vector<16x64xf32>
    %cst_123 = arith.constant 9.99999974E-6 : f32
    %671 = vector.broadcast %cst_123 : f32 to vector<16x64xf32>
    %672 = arith.addf %670, %671 : vector<16x64xf32>
    %673 = math.sqrt %672 : vector<16x64xf32>
    %674 = vector.broadcast %2 : vector<16x1xf32> to vector<16x64xf32>
    %675 = arith.mulf %673, %674 : vector<16x64xf32>
    %cst_124 = arith.constant -1.000000e+30 : f32
    %676 = vector.broadcast %cst_124 : f32 to vector<16x64xf32>
    %cst_125 = arith.constant -1.000000e+30 : f32
    %677 = vector.broadcast %cst_125 : f32 to vector<16x64xf32>
    %678 = vector.extract_strided_slice %0 {offsets = [0, 0], sizes = [16, 8], strides = [1, 1]} : vector<16x16xbf16> to vector<16x8xbf16>
    %679 = vector.extract_strided_slice %657 {offsets = [0, 0], sizes = [8, 64], strides = [1, 1]} : vector<16x64xf32> to vector<8x64xf32>
    %680 = vector.extract_strided_slice %678 {offsets = [0, 0], sizes = [16, 1], strides = [1, 1]} : vector<16x8xbf16> to vector<16x1xbf16>
    %cst_126 = arith.constant 0.000000e+00 : bf16
    %681 = vector.broadcast %cst_126 : bf16 to vector<16x1xbf16>
    %682 = arith.cmpf ogt, %680, %681 : vector<16x1xbf16>
    %683 = vector.extract_strided_slice %679 {offsets = [0, 0], sizes = [1, 64], strides = [1, 1]} : vector<8x64xf32> to vector<1x64xf32>
    %684 = vector.broadcast %683 : vector<1x64xf32> to vector<16x64xf32>
    %685 = arith.maximumf %676, %684 : vector<16x64xf32>
    %686 = vector.shape_cast %682 : vector<16x1xi1> to vector<16x1xi1>
    %687 = vector.broadcast %686 : vector<16x1xi1> to vector<16x64xi1>
    %688 = arith.select %687, %685, %676 : vector<16x64xi1>, vector<16x64xf32>
    %cst_127 = arith.constant 0.000000e+00 : f32
    %689 = vector.broadcast %cst_127 : f32 to vector<1x64xf32>
    %690 = arith.subf %689, %683 : vector<1x64xf32>
    %691 = vector.broadcast %690 : vector<1x64xf32> to vector<16x64xf32>
    %692 = arith.maximumf %677, %691 : vector<16x64xf32>
    %693 = vector.shape_cast %682 : vector<16x1xi1> to vector<16x1xi1>
    %694 = vector.broadcast %693 : vector<16x1xi1> to vector<16x64xi1>
    %695 = arith.select %694, %692, %677 : vector<16x64xi1>, vector<16x64xf32>
    %696 = vector.extract_strided_slice %678 {offsets = [0, 1], sizes = [16, 1], strides = [1, 1]} : vector<16x8xbf16> to vector<16x1xbf16>
    %cst_128 = arith.constant 0.000000e+00 : bf16
    %697 = vector.broadcast %cst_128 : bf16 to vector<16x1xbf16>
    %698 = arith.cmpf ogt, %696, %697 : vector<16x1xbf16>
    %699 = vector.extract_strided_slice %679 {offsets = [1, 0], sizes = [1, 64], strides = [1, 1]} : vector<8x64xf32> to vector<1x64xf32>
    %700 = vector.broadcast %699 : vector<1x64xf32> to vector<16x64xf32>
    %701 = arith.maximumf %688, %700 : vector<16x64xf32>
    %702 = vector.shape_cast %698 : vector<16x1xi1> to vector<16x1xi1>
    %703 = vector.broadcast %702 : vector<16x1xi1> to vector<16x64xi1>
    %704 = arith.select %703, %701, %688 : vector<16x64xi1>, vector<16x64xf32>
    %cst_129 = arith.constant 0.000000e+00 : f32
    %705 = vector.broadcast %cst_129 : f32 to vector<1x64xf32>
    %706 = arith.subf %705, %699 : vector<1x64xf32>
    %707 = vector.broadcast %706 : vector<1x64xf32> to vector<16x64xf32>
    %708 = arith.maximumf %695, %707 : vector<16x64xf32>
    %709 = vector.shape_cast %698 : vector<16x1xi1> to vector<16x1xi1>
    %710 = vector.broadcast %709 : vector<16x1xi1> to vector<16x64xi1>
    %711 = arith.select %710, %708, %695 : vector<16x64xi1>, vector<16x64xf32>
    %712 = vector.extract_strided_slice %678 {offsets = [0, 2], sizes = [16, 1], strides = [1, 1]} : vector<16x8xbf16> to vector<16x1xbf16>
    %cst_130 = arith.constant 0.000000e+00 : bf16
    %713 = vector.broadcast %cst_130 : bf16 to vector<16x1xbf16>
    %714 = arith.cmpf ogt, %712, %713 : vector<16x1xbf16>
    %715 = vector.extract_strided_slice %679 {offsets = [2, 0], sizes = [1, 64], strides = [1, 1]} : vector<8x64xf32> to vector<1x64xf32>
    %716 = vector.broadcast %715 : vector<1x64xf32> to vector<16x64xf32>
    %717 = arith.maximumf %704, %716 : vector<16x64xf32>
    %718 = vector.shape_cast %714 : vector<16x1xi1> to vector<16x1xi1>
    %719 = vector.broadcast %718 : vector<16x1xi1> to vector<16x64xi1>
    %720 = arith.select %719, %717, %704 : vector<16x64xi1>, vector<16x64xf32>
    %cst_131 = arith.constant 0.000000e+00 : f32
    %721 = vector.broadcast %cst_131 : f32 to vector<1x64xf32>
    %722 = arith.subf %721, %715 : vector<1x64xf32>
    %723 = vector.broadcast %722 : vector<1x64xf32> to vector<16x64xf32>
    %724 = arith.maximumf %711, %723 : vector<16x64xf32>
    %725 = vector.shape_cast %714 : vector<16x1xi1> to vector<16x1xi1>
    %726 = vector.broadcast %725 : vector<16x1xi1> to vector<16x64xi1>
    %727 = arith.select %726, %724, %711 : vector<16x64xi1>, vector<16x64xf32>
    %728 = vector.extract_strided_slice %678 {offsets = [0, 3], sizes = [16, 1], strides = [1, 1]} : vector<16x8xbf16> to vector<16x1xbf16>
    %cst_132 = arith.constant 0.000000e+00 : bf16
    %729 = vector.broadcast %cst_132 : bf16 to vector<16x1xbf16>
    %730 = arith.cmpf ogt, %728, %729 : vector<16x1xbf16>
    %731 = vector.extract_strided_slice %679 {offsets = [3, 0], sizes = [1, 64], strides = [1, 1]} : vector<8x64xf32> to vector<1x64xf32>
    %732 = vector.broadcast %731 : vector<1x64xf32> to vector<16x64xf32>
    %733 = arith.maximumf %720, %732 : vector<16x64xf32>
    %734 = vector.shape_cast %730 : vector<16x1xi1> to vector<16x1xi1>
    %735 = vector.broadcast %734 : vector<16x1xi1> to vector<16x64xi1>
    %736 = arith.select %735, %733, %720 : vector<16x64xi1>, vector<16x64xf32>
    %cst_133 = arith.constant 0.000000e+00 : f32
    %737 = vector.broadcast %cst_133 : f32 to vector<1x64xf32>
    %738 = arith.subf %737, %731 : vector<1x64xf32>
    %739 = vector.broadcast %738 : vector<1x64xf32> to vector<16x64xf32>
    %740 = arith.maximumf %727, %739 : vector<16x64xf32>
    %741 = vector.shape_cast %730 : vector<16x1xi1> to vector<16x1xi1>
    %742 = vector.broadcast %741 : vector<16x1xi1> to vector<16x64xi1>
    %743 = arith.select %742, %740, %727 : vector<16x64xi1>, vector<16x64xf32>
    %744 = vector.extract_strided_slice %678 {offsets = [0, 4], sizes = [16, 1], strides = [1, 1]} : vector<16x8xbf16> to vector<16x1xbf16>
    %cst_134 = arith.constant 0.000000e+00 : bf16
    %745 = vector.broadcast %cst_134 : bf16 to vector<16x1xbf16>
    %746 = arith.cmpf ogt, %744, %745 : vector<16x1xbf16>
    %747 = vector.extract_strided_slice %679 {offsets = [4, 0], sizes = [1, 64], strides = [1, 1]} : vector<8x64xf32> to vector<1x64xf32>
    %748 = vector.broadcast %747 : vector<1x64xf32> to vector<16x64xf32>
    %749 = arith.maximumf %736, %748 : vector<16x64xf32>
    %750 = vector.shape_cast %746 : vector<16x1xi1> to vector<16x1xi1>
    %751 = vector.broadcast %750 : vector<16x1xi1> to vector<16x64xi1>
    %752 = arith.select %751, %749, %736 : vector<16x64xi1>, vector<16x64xf32>
    %cst_135 = arith.constant 0.000000e+00 : f32
    %753 = vector.broadcast %cst_135 : f32 to vector<1x64xf32>
    %754 = arith.subf %753, %747 : vector<1x64xf32>
    %755 = vector.broadcast %754 : vector<1x64xf32> to vector<16x64xf32>
    %756 = arith.maximumf %743, %755 : vector<16x64xf32>
    %757 = vector.shape_cast %746 : vector<16x1xi1> to vector<16x1xi1>
    %758 = vector.broadcast %757 : vector<16x1xi1> to vector<16x64xi1>
    %759 = arith.select %758, %756, %743 : vector<16x64xi1>, vector<16x64xf32>
    %760 = vector.extract_strided_slice %678 {offsets = [0, 5], sizes = [16, 1], strides = [1, 1]} : vector<16x8xbf16> to vector<16x1xbf16>
    %cst_136 = arith.constant 0.000000e+00 : bf16
    %761 = vector.broadcast %cst_136 : bf16 to vector<16x1xbf16>
    %762 = arith.cmpf ogt, %760, %761 : vector<16x1xbf16>
    %763 = vector.extract_strided_slice %679 {offsets = [5, 0], sizes = [1, 64], strides = [1, 1]} : vector<8x64xf32> to vector<1x64xf32>
    %764 = vector.broadcast %763 : vector<1x64xf32> to vector<16x64xf32>
    %765 = arith.maximumf %752, %764 : vector<16x64xf32>
    %766 = vector.shape_cast %762 : vector<16x1xi1> to vector<16x1xi1>
    %767 = vector.broadcast %766 : vector<16x1xi1> to vector<16x64xi1>
    %768 = arith.select %767, %765, %752 : vector<16x64xi1>, vector<16x64xf32>
    %cst_137 = arith.constant 0.000000e+00 : f32
    %769 = vector.broadcast %cst_137 : f32 to vector<1x64xf32>
    %770 = arith.subf %769, %763 : vector<1x64xf32>
    %771 = vector.broadcast %770 : vector<1x64xf32> to vector<16x64xf32>
    %772 = arith.maximumf %759, %771 : vector<16x64xf32>
    %773 = vector.shape_cast %762 : vector<16x1xi1> to vector<16x1xi1>
    %774 = vector.broadcast %773 : vector<16x1xi1> to vector<16x64xi1>
    %775 = arith.select %774, %772, %759 : vector<16x64xi1>, vector<16x64xf32>
    %776 = vector.extract_strided_slice %678 {offsets = [0, 6], sizes = [16, 1], strides = [1, 1]} : vector<16x8xbf16> to vector<16x1xbf16>
    %cst_138 = arith.constant 0.000000e+00 : bf16
    %777 = vector.broadcast %cst_138 : bf16 to vector<16x1xbf16>
    %778 = arith.cmpf ogt, %776, %777 : vector<16x1xbf16>
    %779 = vector.extract_strided_slice %679 {offsets = [6, 0], sizes = [1, 64], strides = [1, 1]} : vector<8x64xf32> to vector<1x64xf32>
    %780 = vector.broadcast %779 : vector<1x64xf32> to vector<16x64xf32>
    %781 = arith.maximumf %768, %780 : vector<16x64xf32>
    %782 = vector.shape_cast %778 : vector<16x1xi1> to vector<16x1xi1>
    %783 = vector.broadcast %782 : vector<16x1xi1> to vector<16x64xi1>
    %784 = arith.select %783, %781, %768 : vector<16x64xi1>, vector<16x64xf32>
    %cst_139 = arith.constant 0.000000e+00 : f32
    %785 = vector.broadcast %cst_139 : f32 to vector<1x64xf32>
    %786 = arith.subf %785, %779 : vector<1x64xf32>
    %787 = vector.broadcast %786 : vector<1x64xf32> to vector<16x64xf32>
    %788 = arith.maximumf %775, %787 : vector<16x64xf32>
    %789 = vector.shape_cast %778 : vector<16x1xi1> to vector<16x1xi1>
    %790 = vector.broadcast %789 : vector<16x1xi1> to vector<16x64xi1>
    %791 = arith.select %790, %788, %775 : vector<16x64xi1>, vector<16x64xf32>
    %792 = vector.extract_strided_slice %678 {offsets = [0, 7], sizes = [16, 1], strides = [1, 1]} : vector<16x8xbf16> to vector<16x1xbf16>
    %cst_140 = arith.constant 0.000000e+00 : bf16
    %793 = vector.broadcast %cst_140 : bf16 to vector<16x1xbf16>
    %794 = arith.cmpf ogt, %792, %793 : vector<16x1xbf16>
    %795 = vector.extract_strided_slice %679 {offsets = [7, 0], sizes = [1, 64], strides = [1, 1]} : vector<8x64xf32> to vector<1x64xf32>
    %796 = vector.broadcast %795 : vector<1x64xf32> to vector<16x64xf32>
    %797 = arith.maximumf %784, %796 : vector<16x64xf32>
    %798 = vector.shape_cast %794 : vector<16x1xi1> to vector<16x1xi1>
    %799 = vector.broadcast %798 : vector<16x1xi1> to vector<16x64xi1>
    %800 = arith.select %799, %797, %784 : vector<16x64xi1>, vector<16x64xf32>
    %cst_141 = arith.constant 0.000000e+00 : f32
    %801 = vector.broadcast %cst_141 : f32 to vector<1x64xf32>
    %802 = arith.subf %801, %795 : vector<1x64xf32>
    %803 = vector.broadcast %802 : vector<1x64xf32> to vector<16x64xf32>
    %804 = arith.maximumf %791, %803 : vector<16x64xf32>
    %805 = vector.shape_cast %794 : vector<16x1xi1> to vector<16x1xi1>
    %806 = vector.broadcast %805 : vector<16x1xi1> to vector<16x64xi1>
    %807 = arith.select %806, %804, %791 : vector<16x64xi1>, vector<16x64xf32>
    %808 = vector.extract_strided_slice %0 {offsets = [0, 8], sizes = [16, 8], strides = [1, 1]} : vector<16x16xbf16> to vector<16x8xbf16>
    %809 = vector.extract_strided_slice %657 {offsets = [8, 0], sizes = [8, 64], strides = [1, 1]} : vector<16x64xf32> to vector<8x64xf32>
    %810 = vector.extract_strided_slice %808 {offsets = [0, 0], sizes = [16, 1], strides = [1, 1]} : vector<16x8xbf16> to vector<16x1xbf16>
    %cst_142 = arith.constant 0.000000e+00 : bf16
    %811 = vector.broadcast %cst_142 : bf16 to vector<16x1xbf16>
    %812 = arith.cmpf ogt, %810, %811 : vector<16x1xbf16>
    %813 = vector.extract_strided_slice %809 {offsets = [0, 0], sizes = [1, 64], strides = [1, 1]} : vector<8x64xf32> to vector<1x64xf32>
    %814 = vector.broadcast %813 : vector<1x64xf32> to vector<16x64xf32>
    %815 = arith.maximumf %800, %814 : vector<16x64xf32>
    %816 = vector.shape_cast %812 : vector<16x1xi1> to vector<16x1xi1>
    %817 = vector.broadcast %816 : vector<16x1xi1> to vector<16x64xi1>
    %818 = arith.select %817, %815, %800 : vector<16x64xi1>, vector<16x64xf32>
    %cst_143 = arith.constant 0.000000e+00 : f32
    %819 = vector.broadcast %cst_143 : f32 to vector<1x64xf32>
    %820 = arith.subf %819, %813 : vector<1x64xf32>
    %821 = vector.broadcast %820 : vector<1x64xf32> to vector<16x64xf32>
    %822 = arith.maximumf %807, %821 : vector<16x64xf32>
    %823 = vector.shape_cast %812 : vector<16x1xi1> to vector<16x1xi1>
    %824 = vector.broadcast %823 : vector<16x1xi1> to vector<16x64xi1>
    %825 = arith.select %824, %822, %807 : vector<16x64xi1>, vector<16x64xf32>
    %826 = vector.extract_strided_slice %808 {offsets = [0, 1], sizes = [16, 1], strides = [1, 1]} : vector<16x8xbf16> to vector<16x1xbf16>
    %cst_144 = arith.constant 0.000000e+00 : bf16
    %827 = vector.broadcast %cst_144 : bf16 to vector<16x1xbf16>
    %828 = arith.cmpf ogt, %826, %827 : vector<16x1xbf16>
    %829 = vector.extract_strided_slice %809 {offsets = [1, 0], sizes = [1, 64], strides = [1, 1]} : vector<8x64xf32> to vector<1x64xf32>
    %830 = vector.broadcast %829 : vector<1x64xf32> to vector<16x64xf32>
    %831 = arith.maximumf %818, %830 : vector<16x64xf32>
    %832 = vector.shape_cast %828 : vector<16x1xi1> to vector<16x1xi1>
    %833 = vector.broadcast %832 : vector<16x1xi1> to vector<16x64xi1>
    %834 = arith.select %833, %831, %818 : vector<16x64xi1>, vector<16x64xf32>
    %cst_145 = arith.constant 0.000000e+00 : f32
    %835 = vector.broadcast %cst_145 : f32 to vector<1x64xf32>
    %836 = arith.subf %835, %829 : vector<1x64xf32>
    %837 = vector.broadcast %836 : vector<1x64xf32> to vector<16x64xf32>
    %838 = arith.maximumf %825, %837 : vector<16x64xf32>
    %839 = vector.shape_cast %828 : vector<16x1xi1> to vector<16x1xi1>
    %840 = vector.broadcast %839 : vector<16x1xi1> to vector<16x64xi1>
    %841 = arith.select %840, %838, %825 : vector<16x64xi1>, vector<16x64xf32>
    %842 = vector.extract_strided_slice %808 {offsets = [0, 2], sizes = [16, 1], strides = [1, 1]} : vector<16x8xbf16> to vector<16x1xbf16>
    %cst_146 = arith.constant 0.000000e+00 : bf16
    %843 = vector.broadcast %cst_146 : bf16 to vector<16x1xbf16>
    %844 = arith.cmpf ogt, %842, %843 : vector<16x1xbf16>
    %845 = vector.extract_strided_slice %809 {offsets = [2, 0], sizes = [1, 64], strides = [1, 1]} : vector<8x64xf32> to vector<1x64xf32>
    %846 = vector.broadcast %845 : vector<1x64xf32> to vector<16x64xf32>
    %847 = arith.maximumf %834, %846 : vector<16x64xf32>
    %848 = vector.shape_cast %844 : vector<16x1xi1> to vector<16x1xi1>
    %849 = vector.broadcast %848 : vector<16x1xi1> to vector<16x64xi1>
    %850 = arith.select %849, %847, %834 : vector<16x64xi1>, vector<16x64xf32>
    %cst_147 = arith.constant 0.000000e+00 : f32
    %851 = vector.broadcast %cst_147 : f32 to vector<1x64xf32>
    %852 = arith.subf %851, %845 : vector<1x64xf32>
    %853 = vector.broadcast %852 : vector<1x64xf32> to vector<16x64xf32>
    %854 = arith.maximumf %841, %853 : vector<16x64xf32>
    %855 = vector.shape_cast %844 : vector<16x1xi1> to vector<16x1xi1>
    %856 = vector.broadcast %855 : vector<16x1xi1> to vector<16x64xi1>
    %857 = arith.select %856, %854, %841 : vector<16x64xi1>, vector<16x64xf32>
    %858 = vector.extract_strided_slice %808 {offsets = [0, 3], sizes = [16, 1], strides = [1, 1]} : vector<16x8xbf16> to vector<16x1xbf16>
    %cst_148 = arith.constant 0.000000e+00 : bf16
    %859 = vector.broadcast %cst_148 : bf16 to vector<16x1xbf16>
    %860 = arith.cmpf ogt, %858, %859 : vector<16x1xbf16>
    %861 = vector.extract_strided_slice %809 {offsets = [3, 0], sizes = [1, 64], strides = [1, 1]} : vector<8x64xf32> to vector<1x64xf32>
    %862 = vector.broadcast %861 : vector<1x64xf32> to vector<16x64xf32>
    %863 = arith.maximumf %850, %862 : vector<16x64xf32>
    %864 = vector.shape_cast %860 : vector<16x1xi1> to vector<16x1xi1>
    %865 = vector.broadcast %864 : vector<16x1xi1> to vector<16x64xi1>
    %866 = arith.select %865, %863, %850 : vector<16x64xi1>, vector<16x64xf32>
    %cst_149 = arith.constant 0.000000e+00 : f32
    %867 = vector.broadcast %cst_149 : f32 to vector<1x64xf32>
    %868 = arith.subf %867, %861 : vector<1x64xf32>
    %869 = vector.broadcast %868 : vector<1x64xf32> to vector<16x64xf32>
    %870 = arith.maximumf %857, %869 : vector<16x64xf32>
    %871 = vector.shape_cast %860 : vector<16x1xi1> to vector<16x1xi1>
    %872 = vector.broadcast %871 : vector<16x1xi1> to vector<16x64xi1>
    %873 = arith.select %872, %870, %857 : vector<16x64xi1>, vector<16x64xf32>
    %874 = vector.extract_strided_slice %808 {offsets = [0, 4], sizes = [16, 1], strides = [1, 1]} : vector<16x8xbf16> to vector<16x1xbf16>
    %cst_150 = arith.constant 0.000000e+00 : bf16
    %875 = vector.broadcast %cst_150 : bf16 to vector<16x1xbf16>
    %876 = arith.cmpf ogt, %874, %875 : vector<16x1xbf16>
    %877 = vector.extract_strided_slice %809 {offsets = [4, 0], sizes = [1, 64], strides = [1, 1]} : vector<8x64xf32> to vector<1x64xf32>
    %878 = vector.broadcast %877 : vector<1x64xf32> to vector<16x64xf32>
    %879 = arith.maximumf %866, %878 : vector<16x64xf32>
    %880 = vector.shape_cast %876 : vector<16x1xi1> to vector<16x1xi1>
    %881 = vector.broadcast %880 : vector<16x1xi1> to vector<16x64xi1>
    %882 = arith.select %881, %879, %866 : vector<16x64xi1>, vector<16x64xf32>
    %cst_151 = arith.constant 0.000000e+00 : f32
    %883 = vector.broadcast %cst_151 : f32 to vector<1x64xf32>
    %884 = arith.subf %883, %877 : vector<1x64xf32>
    %885 = vector.broadcast %884 : vector<1x64xf32> to vector<16x64xf32>
    %886 = arith.maximumf %873, %885 : vector<16x64xf32>
    %887 = vector.shape_cast %876 : vector<16x1xi1> to vector<16x1xi1>
    %888 = vector.broadcast %887 : vector<16x1xi1> to vector<16x64xi1>
    %889 = arith.select %888, %886, %873 : vector<16x64xi1>, vector<16x64xf32>
    %890 = vector.extract_strided_slice %808 {offsets = [0, 5], sizes = [16, 1], strides = [1, 1]} : vector<16x8xbf16> to vector<16x1xbf16>
    %cst_152 = arith.constant 0.000000e+00 : bf16
    %891 = vector.broadcast %cst_152 : bf16 to vector<16x1xbf16>
    %892 = arith.cmpf ogt, %890, %891 : vector<16x1xbf16>
    %893 = vector.extract_strided_slice %809 {offsets = [5, 0], sizes = [1, 64], strides = [1, 1]} : vector<8x64xf32> to vector<1x64xf32>
    %894 = vector.broadcast %893 : vector<1x64xf32> to vector<16x64xf32>
    %895 = arith.maximumf %882, %894 : vector<16x64xf32>
    %896 = vector.shape_cast %892 : vector<16x1xi1> to vector<16x1xi1>
    %897 = vector.broadcast %896 : vector<16x1xi1> to vector<16x64xi1>
    %898 = arith.select %897, %895, %882 : vector<16x64xi1>, vector<16x64xf32>
    %cst_153 = arith.constant 0.000000e+00 : f32
    %899 = vector.broadcast %cst_153 : f32 to vector<1x64xf32>
    %900 = arith.subf %899, %893 : vector<1x64xf32>
    %901 = vector.broadcast %900 : vector<1x64xf32> to vector<16x64xf32>
    %902 = arith.maximumf %889, %901 : vector<16x64xf32>
    %903 = vector.shape_cast %892 : vector<16x1xi1> to vector<16x1xi1>
    %904 = vector.broadcast %903 : vector<16x1xi1> to vector<16x64xi1>
    %905 = arith.select %904, %902, %889 : vector<16x64xi1>, vector<16x64xf32>
    %906 = vector.extract_strided_slice %808 {offsets = [0, 6], sizes = [16, 1], strides = [1, 1]} : vector<16x8xbf16> to vector<16x1xbf16>
    %cst_154 = arith.constant 0.000000e+00 : bf16
    %907 = vector.broadcast %cst_154 : bf16 to vector<16x1xbf16>
    %908 = arith.cmpf ogt, %906, %907 : vector<16x1xbf16>
    %909 = vector.extract_strided_slice %809 {offsets = [6, 0], sizes = [1, 64], strides = [1, 1]} : vector<8x64xf32> to vector<1x64xf32>
    %910 = vector.broadcast %909 : vector<1x64xf32> to vector<16x64xf32>
    %911 = arith.maximumf %898, %910 : vector<16x64xf32>
    %912 = vector.shape_cast %908 : vector<16x1xi1> to vector<16x1xi1>
    %913 = vector.broadcast %912 : vector<16x1xi1> to vector<16x64xi1>
    %914 = arith.select %913, %911, %898 : vector<16x64xi1>, vector<16x64xf32>
    %cst_155 = arith.constant 0.000000e+00 : f32
    %915 = vector.broadcast %cst_155 : f32 to vector<1x64xf32>
    %916 = arith.subf %915, %909 : vector<1x64xf32>
    %917 = vector.broadcast %916 : vector<1x64xf32> to vector<16x64xf32>
    %918 = arith.maximumf %905, %917 : vector<16x64xf32>
    %919 = vector.shape_cast %908 : vector<16x1xi1> to vector<16x1xi1>
    %920 = vector.broadcast %919 : vector<16x1xi1> to vector<16x64xi1>
    %921 = arith.select %920, %918, %905 : vector<16x64xi1>, vector<16x64xf32>
    %922 = vector.extract_strided_slice %808 {offsets = [0, 7], sizes = [16, 1], strides = [1, 1]} : vector<16x8xbf16> to vector<16x1xbf16>
    %cst_156 = arith.constant 0.000000e+00 : bf16
    %923 = vector.broadcast %cst_156 : bf16 to vector<16x1xbf16>
    %924 = arith.cmpf ogt, %922, %923 : vector<16x1xbf16>
    %925 = vector.extract_strided_slice %809 {offsets = [7, 0], sizes = [1, 64], strides = [1, 1]} : vector<8x64xf32> to vector<1x64xf32>
    %926 = vector.broadcast %925 : vector<1x64xf32> to vector<16x64xf32>
    %927 = arith.maximumf %914, %926 : vector<16x64xf32>
    %928 = vector.shape_cast %924 : vector<16x1xi1> to vector<16x1xi1>
    %929 = vector.broadcast %928 : vector<16x1xi1> to vector<16x64xi1>
    %930 = arith.select %929, %927, %914 : vector<16x64xi1>, vector<16x64xf32>
    %cst_157 = arith.constant 0.000000e+00 : f32
    %931 = vector.broadcast %cst_157 : f32 to vector<1x64xf32>
    %932 = arith.subf %931, %925 : vector<1x64xf32>
    %933 = vector.broadcast %932 : vector<1x64xf32> to vector<16x64xf32>
    %934 = arith.maximumf %921, %933 : vector<16x64xf32>
    %935 = vector.shape_cast %924 : vector<16x1xi1> to vector<16x1xi1>
    %936 = vector.broadcast %935 : vector<16x1xi1> to vector<16x64xi1>
    %937 = arith.select %936, %934, %921 : vector<16x64xi1>, vector<16x64xf32>
    %cst_158 = arith.constant 0.000000e+00 : f32
    %938 = vector.broadcast %cst_158 : f32 to vector<16x64xf32>
    %939 = arith.subf %938, %937 : vector<16x64xf32>
    %940 = vector.broadcast %2 : vector<16x1xf32> to vector<16x64xf32>
    %941 = arith.mulf %939, %940 : vector<16x64xf32>
    %942 = vector.broadcast %2 : vector<16x1xf32> to vector<16x64xf32>
    %943 = arith.mulf %930, %942 : vector<16x64xf32>
    %944 = tpu.concatenate %664, %941, %943, %675 in 1 : vector<16x64xf32>, vector<16x64xf32>, vector<16x64xf32>, vector<16x64xf32> -> vector<16x256xf32>
    %945 = vector.broadcast %3 : vector<16x1xf32> to vector<16x256xf32>
    %946 = arith.mulf %945, %944 : vector<16x256xf32>
    %947 = vector.broadcast %4 : vector<16x1xf32> to vector<16x256xf32>
    %948 = arith.mulf %947, %944 : vector<16x256xf32>
    %949 = tpu.concatenate %944, %946, %948 in 1 : vector<16x256xf32>, vector<16x256xf32>, vector<16x256xf32> -> vector<16x768xf32>
    %950 = arith.truncf %949 : vector<16x768xf32> to vector<16x768xbf16>
    %c0_159 = arith.constant 0 : index
    %c0_160 = arith.constant 0 : index
    %951 = vector.load %arg14[%c0_159, %c0_160] : memref<768x32xbf16, #tpu.memory_space<vmem>>, vector<768x32xbf16>
    %cst_161 = arith.constant dense<0.000000e+00> : vector<16x32xf32>
    %952 = tpu.matmul %950, %951, %cst_161 {dimension_numbers = #tpu.dot_dimension_numbers<[1], [0], [0], [1], [0, 0, 1, 1], [], []>} : vector<16x768xbf16>, vector<768x32xbf16>, vector<16x32xf32> -> vector<16x32xf32>
    %c0_162 = arith.constant 0 : index
    %c0_163 = arith.constant 0 : index
    %953 = vector.load %arg15[%c0_162, %c0_163] : memref<1x32xf32, #tpu.memory_space<vmem>>, vector<1x32xf32>
    %954 = vector.broadcast %953 : vector<1x32xf32> to vector<16x32xf32>
    %955 = arith.addf %952, %954 : vector<16x32xf32>
    %cst_164 = arith.constant 0.000000e+00 : f32
    %956 = vector.broadcast %cst_164 : f32 to vector<16x32xf32>
    %957 = arith.maximumf %955, %956 : vector<16x32xf32>
    %cst_165 = arith.constant dense<0.000000e+00> : vector<32xf32>
    %958 = vector.multi_reduction <add>, %957, %cst_165 [0] : vector<16x32xf32> to vector<32xf32>
    %959 = vector.shape_cast %958 : vector<32xf32> to vector<1x32xf32>
    %cst_166 = arith.constant 1.600000e+01 : f32
    %960 = vector.broadcast %cst_166 : f32 to vector<1x32xf32>
    %961 = arith.divf %959, %960 : vector<1x32xf32>
    %962 = arith.mulf %957, %957 : vector<16x32xf32>
    %cst_167 = arith.constant dense<0.000000e+00> : vector<32xf32>
    %963 = vector.multi_reduction <add>, %962, %cst_167 [0] : vector<16x32xf32> to vector<32xf32>
    %964 = vector.shape_cast %963 : vector<32xf32> to vector<1x32xf32>
    %cst_168 = arith.constant 1.600000e+01 : f32
    %965 = vector.broadcast %cst_168 : f32 to vector<1x32xf32>
    %966 = arith.divf %964, %965 : vector<1x32xf32>
    %967 = arith.mulf %961, %961 : vector<1x32xf32>
    %968 = arith.subf %966, %967 : vector<1x32xf32>
    %cst_169 = arith.constant 0.000000e+00 : f32
    %969 = vector.broadcast %cst_169 : f32 to vector<1x32xf32>
    %970 = arith.maximumf %968, %969 : vector<1x32xf32>
    %971 = vector.broadcast %961 : vector<1x32xf32> to vector<16x32xf32>
    %972 = arith.subf %957, %971 : vector<16x32xf32>
    %cst_170 = arith.constant 9.99999974E-6 : f32
    %973 = vector.broadcast %cst_170 : f32 to vector<1x32xf32>
    %974 = arith.addf %970, %973 : vector<1x32xf32>
    %975 = math.rsqrt %974 : vector<1x32xf32>
    %976 = vector.broadcast %975 : vector<1x32xf32> to vector<16x32xf32>
    %977 = arith.mulf %972, %976 : vector<16x32xf32>
    %c0_171 = arith.constant 0 : index
    %c0_172 = arith.constant 0 : index
    %978 = vector.load %arg16[%c0_171, %c0_172] : memref<1x32xf32, #tpu.memory_space<vmem>>, vector<1x32xf32>
    %979 = vector.broadcast %978 : vector<1x32xf32> to vector<16x32xf32>
    %980 = arith.mulf %977, %979 : vector<16x32xf32>
    %c0_173 = arith.constant 0 : index
    %c0_174 = arith.constant 0 : index
    %981 = vector.load %arg17[%c0_173, %c0_174] : memref<1x32xf32, #tpu.memory_space<vmem>>, vector<1x32xf32>
    %982 = vector.broadcast %981 : vector<1x32xf32> to vector<16x32xf32>
    %983 = arith.addf %980, %982 : vector<16x32xf32>
    %984 = arith.truncf %983 : vector<16x32xf32> to vector<16x32xbf16>
    %cst_175 = arith.constant dense<0.000000e+00> : vector<16x32xf32>
    %985 = tpu.matmul %0, %984, %cst_175 {dimension_numbers = #tpu.dot_dimension_numbers<[1], [0], [0], [1], [0, 0, 1, 1], [], []>} : vector<16x16xbf16>, vector<16x32xbf16>, vector<16x32xf32> -> vector<16x32xf32>
    %986 = arith.mulf %983, %983 : vector<16x32xf32>
    %987 = arith.truncf %986 : vector<16x32xf32> to vector<16x32xbf16>
    %cst_176 = arith.constant dense<0.000000e+00> : vector<16x32xf32>
    %988 = tpu.matmul %0, %987, %cst_176 {dimension_numbers = #tpu.dot_dimension_numbers<[1], [0], [0], [1], [0, 0, 1, 1], [], []>} : vector<16x16xbf16>, vector<16x32xbf16>, vector<16x32xf32> -> vector<16x32xf32>
    %989 = vector.broadcast %1 : vector<16x1xf32> to vector<16x32xf32>
    %990 = arith.mulf %985, %989 : vector<16x32xf32>
    %991 = vector.broadcast %1 : vector<16x1xf32> to vector<16x32xf32>
    %992 = arith.mulf %988, %991 : vector<16x32xf32>
    %993 = arith.mulf %990, %990 : vector<16x32xf32>
    %994 = arith.subf %992, %993 : vector<16x32xf32>
    %cst_177 = arith.constant 0.000000e+00 : f32
    %995 = vector.broadcast %cst_177 : f32 to vector<16x32xf32>
    %996 = arith.maximumf %994, %995 : vector<16x32xf32>
    %cst_178 = arith.constant 9.99999974E-6 : f32
    %997 = vector.broadcast %cst_178 : f32 to vector<16x32xf32>
    %998 = arith.addf %996, %997 : vector<16x32xf32>
    %999 = math.sqrt %998 : vector<16x32xf32>
    %1000 = vector.broadcast %2 : vector<16x1xf32> to vector<16x32xf32>
    %1001 = arith.mulf %999, %1000 : vector<16x32xf32>
    %cst_179 = arith.constant -1.000000e+30 : f32
    %1002 = vector.broadcast %cst_179 : f32 to vector<16x32xf32>
    %cst_180 = arith.constant -1.000000e+30 : f32
    %1003 = vector.broadcast %cst_180 : f32 to vector<16x32xf32>
    %1004 = vector.extract_strided_slice %0 {offsets = [0, 0], sizes = [16, 8], strides = [1, 1]} : vector<16x16xbf16> to vector<16x8xbf16>
    %1005 = vector.extract_strided_slice %983 {offsets = [0, 0], sizes = [8, 32], strides = [1, 1]} : vector<16x32xf32> to vector<8x32xf32>
    %1006 = vector.extract_strided_slice %1004 {offsets = [0, 0], sizes = [16, 1], strides = [1, 1]} : vector<16x8xbf16> to vector<16x1xbf16>
    %cst_181 = arith.constant 0.000000e+00 : bf16
    %1007 = vector.broadcast %cst_181 : bf16 to vector<16x1xbf16>
    %1008 = arith.cmpf ogt, %1006, %1007 : vector<16x1xbf16>
    %1009 = vector.extract_strided_slice %1005 {offsets = [0, 0], sizes = [1, 32], strides = [1, 1]} : vector<8x32xf32> to vector<1x32xf32>
    %1010 = vector.broadcast %1009 : vector<1x32xf32> to vector<16x32xf32>
    %1011 = arith.maximumf %1002, %1010 : vector<16x32xf32>
    %1012 = vector.shape_cast %1008 : vector<16x1xi1> to vector<16x1xi1>
    %1013 = vector.broadcast %1012 : vector<16x1xi1> to vector<16x32xi1>
    %1014 = arith.select %1013, %1011, %1002 : vector<16x32xi1>, vector<16x32xf32>
    %cst_182 = arith.constant 0.000000e+00 : f32
    %1015 = vector.broadcast %cst_182 : f32 to vector<1x32xf32>
    %1016 = arith.subf %1015, %1009 : vector<1x32xf32>
    %1017 = vector.broadcast %1016 : vector<1x32xf32> to vector<16x32xf32>
    %1018 = arith.maximumf %1003, %1017 : vector<16x32xf32>
    %1019 = vector.shape_cast %1008 : vector<16x1xi1> to vector<16x1xi1>
    %1020 = vector.broadcast %1019 : vector<16x1xi1> to vector<16x32xi1>
    %1021 = arith.select %1020, %1018, %1003 : vector<16x32xi1>, vector<16x32xf32>
    %1022 = vector.extract_strided_slice %1004 {offsets = [0, 1], sizes = [16, 1], strides = [1, 1]} : vector<16x8xbf16> to vector<16x1xbf16>
    %cst_183 = arith.constant 0.000000e+00 : bf16
    %1023 = vector.broadcast %cst_183 : bf16 to vector<16x1xbf16>
    %1024 = arith.cmpf ogt, %1022, %1023 : vector<16x1xbf16>
    %1025 = vector.extract_strided_slice %1005 {offsets = [1, 0], sizes = [1, 32], strides = [1, 1]} : vector<8x32xf32> to vector<1x32xf32>
    %1026 = vector.broadcast %1025 : vector<1x32xf32> to vector<16x32xf32>
    %1027 = arith.maximumf %1014, %1026 : vector<16x32xf32>
    %1028 = vector.shape_cast %1024 : vector<16x1xi1> to vector<16x1xi1>
    %1029 = vector.broadcast %1028 : vector<16x1xi1> to vector<16x32xi1>
    %1030 = arith.select %1029, %1027, %1014 : vector<16x32xi1>, vector<16x32xf32>
    %cst_184 = arith.constant 0.000000e+00 : f32
    %1031 = vector.broadcast %cst_184 : f32 to vector<1x32xf32>
    %1032 = arith.subf %1031, %1025 : vector<1x32xf32>
    %1033 = vector.broadcast %1032 : vector<1x32xf32> to vector<16x32xf32>
    %1034 = arith.maximumf %1021, %1033 : vector<16x32xf32>
    %1035 = vector.shape_cast %1024 : vector<16x1xi1> to vector<16x1xi1>
    %1036 = vector.broadcast %1035 : vector<16x1xi1> to vector<16x32xi1>
    %1037 = arith.select %1036, %1034, %1021 : vector<16x32xi1>, vector<16x32xf32>
    %1038 = vector.extract_strided_slice %1004 {offsets = [0, 2], sizes = [16, 1], strides = [1, 1]} : vector<16x8xbf16> to vector<16x1xbf16>
    %cst_185 = arith.constant 0.000000e+00 : bf16
    %1039 = vector.broadcast %cst_185 : bf16 to vector<16x1xbf16>
    %1040 = arith.cmpf ogt, %1038, %1039 : vector<16x1xbf16>
    %1041 = vector.extract_strided_slice %1005 {offsets = [2, 0], sizes = [1, 32], strides = [1, 1]} : vector<8x32xf32> to vector<1x32xf32>
    %1042 = vector.broadcast %1041 : vector<1x32xf32> to vector<16x32xf32>
    %1043 = arith.maximumf %1030, %1042 : vector<16x32xf32>
    %1044 = vector.shape_cast %1040 : vector<16x1xi1> to vector<16x1xi1>
    %1045 = vector.broadcast %1044 : vector<16x1xi1> to vector<16x32xi1>
    %1046 = arith.select %1045, %1043, %1030 : vector<16x32xi1>, vector<16x32xf32>
    %cst_186 = arith.constant 0.000000e+00 : f32
    %1047 = vector.broadcast %cst_186 : f32 to vector<1x32xf32>
    %1048 = arith.subf %1047, %1041 : vector<1x32xf32>
    %1049 = vector.broadcast %1048 : vector<1x32xf32> to vector<16x32xf32>
    %1050 = arith.maximumf %1037, %1049 : vector<16x32xf32>
    %1051 = vector.shape_cast %1040 : vector<16x1xi1> to vector<16x1xi1>
    %1052 = vector.broadcast %1051 : vector<16x1xi1> to vector<16x32xi1>
    %1053 = arith.select %1052, %1050, %1037 : vector<16x32xi1>, vector<16x32xf32>
    %1054 = vector.extract_strided_slice %1004 {offsets = [0, 3], sizes = [16, 1], strides = [1, 1]} : vector<16x8xbf16> to vector<16x1xbf16>
    %cst_187 = arith.constant 0.000000e+00 : bf16
    %1055 = vector.broadcast %cst_187 : bf16 to vector<16x1xbf16>
    %1056 = arith.cmpf ogt, %1054, %1055 : vector<16x1xbf16>
    %1057 = vector.extract_strided_slice %1005 {offsets = [3, 0], sizes = [1, 32], strides = [1, 1]} : vector<8x32xf32> to vector<1x32xf32>
    %1058 = vector.broadcast %1057 : vector<1x32xf32> to vector<16x32xf32>
    %1059 = arith.maximumf %1046, %1058 : vector<16x32xf32>
    %1060 = vector.shape_cast %1056 : vector<16x1xi1> to vector<16x1xi1>
    %1061 = vector.broadcast %1060 : vector<16x1xi1> to vector<16x32xi1>
    %1062 = arith.select %1061, %1059, %1046 : vector<16x32xi1>, vector<16x32xf32>
    %cst_188 = arith.constant 0.000000e+00 : f32
    %1063 = vector.broadcast %cst_188 : f32 to vector<1x32xf32>
    %1064 = arith.subf %1063, %1057 : vector<1x32xf32>
    %1065 = vector.broadcast %1064 : vector<1x32xf32> to vector<16x32xf32>
    %1066 = arith.maximumf %1053, %1065 : vector<16x32xf32>
    %1067 = vector.shape_cast %1056 : vector<16x1xi1> to vector<16x1xi1>
    %1068 = vector.broadcast %1067 : vector<16x1xi1> to vector<16x32xi1>
    %1069 = arith.select %1068, %1066, %1053 : vector<16x32xi1>, vector<16x32xf32>
    %1070 = vector.extract_strided_slice %1004 {offsets = [0, 4], sizes = [16, 1], strides = [1, 1]} : vector<16x8xbf16> to vector<16x1xbf16>
    %cst_189 = arith.constant 0.000000e+00 : bf16
    %1071 = vector.broadcast %cst_189 : bf16 to vector<16x1xbf16>
    %1072 = arith.cmpf ogt, %1070, %1071 : vector<16x1xbf16>
    %1073 = vector.extract_strided_slice %1005 {offsets = [4, 0], sizes = [1, 32], strides = [1, 1]} : vector<8x32xf32> to vector<1x32xf32>
    %1074 = vector.broadcast %1073 : vector<1x32xf32> to vector<16x32xf32>
    %1075 = arith.maximumf %1062, %1074 : vector<16x32xf32>
    %1076 = vector.shape_cast %1072 : vector<16x1xi1> to vector<16x1xi1>
    %1077 = vector.broadcast %1076 : vector<16x1xi1> to vector<16x32xi1>
    %1078 = arith.select %1077, %1075, %1062 : vector<16x32xi1>, vector<16x32xf32>
    %cst_190 = arith.constant 0.000000e+00 : f32
    %1079 = vector.broadcast %cst_190 : f32 to vector<1x32xf32>
    %1080 = arith.subf %1079, %1073 : vector<1x32xf32>
    %1081 = vector.broadcast %1080 : vector<1x32xf32> to vector<16x32xf32>
    %1082 = arith.maximumf %1069, %1081 : vector<16x32xf32>
    %1083 = vector.shape_cast %1072 : vector<16x1xi1> to vector<16x1xi1>
    %1084 = vector.broadcast %1083 : vector<16x1xi1> to vector<16x32xi1>
    %1085 = arith.select %1084, %1082, %1069 : vector<16x32xi1>, vector<16x32xf32>
    %1086 = vector.extract_strided_slice %1004 {offsets = [0, 5], sizes = [16, 1], strides = [1, 1]} : vector<16x8xbf16> to vector<16x1xbf16>
    %cst_191 = arith.constant 0.000000e+00 : bf16
    %1087 = vector.broadcast %cst_191 : bf16 to vector<16x1xbf16>
    %1088 = arith.cmpf ogt, %1086, %1087 : vector<16x1xbf16>
    %1089 = vector.extract_strided_slice %1005 {offsets = [5, 0], sizes = [1, 32], strides = [1, 1]} : vector<8x32xf32> to vector<1x32xf32>
    %1090 = vector.broadcast %1089 : vector<1x32xf32> to vector<16x32xf32>
    %1091 = arith.maximumf %1078, %1090 : vector<16x32xf32>
    %1092 = vector.shape_cast %1088 : vector<16x1xi1> to vector<16x1xi1>
    %1093 = vector.broadcast %1092 : vector<16x1xi1> to vector<16x32xi1>
    %1094 = arith.select %1093, %1091, %1078 : vector<16x32xi1>, vector<16x32xf32>
    %cst_192 = arith.constant 0.000000e+00 : f32
    %1095 = vector.broadcast %cst_192 : f32 to vector<1x32xf32>
    %1096 = arith.subf %1095, %1089 : vector<1x32xf32>
    %1097 = vector.broadcast %1096 : vector<1x32xf32> to vector<16x32xf32>
    %1098 = arith.maximumf %1085, %1097 : vector<16x32xf32>
    %1099 = vector.shape_cast %1088 : vector<16x1xi1> to vector<16x1xi1>
    %1100 = vector.broadcast %1099 : vector<16x1xi1> to vector<16x32xi1>
    %1101 = arith.select %1100, %1098, %1085 : vector<16x32xi1>, vector<16x32xf32>
    %1102 = vector.extract_strided_slice %1004 {offsets = [0, 6], sizes = [16, 1], strides = [1, 1]} : vector<16x8xbf16> to vector<16x1xbf16>
    %cst_193 = arith.constant 0.000000e+00 : bf16
    %1103 = vector.broadcast %cst_193 : bf16 to vector<16x1xbf16>
    %1104 = arith.cmpf ogt, %1102, %1103 : vector<16x1xbf16>
    %1105 = vector.extract_strided_slice %1005 {offsets = [6, 0], sizes = [1, 32], strides = [1, 1]} : vector<8x32xf32> to vector<1x32xf32>
    %1106 = vector.broadcast %1105 : vector<1x32xf32> to vector<16x32xf32>
    %1107 = arith.maximumf %1094, %1106 : vector<16x32xf32>
    %1108 = vector.shape_cast %1104 : vector<16x1xi1> to vector<16x1xi1>
    %1109 = vector.broadcast %1108 : vector<16x1xi1> to vector<16x32xi1>
    %1110 = arith.select %1109, %1107, %1094 : vector<16x32xi1>, vector<16x32xf32>
    %cst_194 = arith.constant 0.000000e+00 : f32
    %1111 = vector.broadcast %cst_194 : f32 to vector<1x32xf32>
    %1112 = arith.subf %1111, %1105 : vector<1x32xf32>
    %1113 = vector.broadcast %1112 : vector<1x32xf32> to vector<16x32xf32>
    %1114 = arith.maximumf %1101, %1113 : vector<16x32xf32>
    %1115 = vector.shape_cast %1104 : vector<16x1xi1> to vector<16x1xi1>
    %1116 = vector.broadcast %1115 : vector<16x1xi1> to vector<16x32xi1>
    %1117 = arith.select %1116, %1114, %1101 : vector<16x32xi1>, vector<16x32xf32>
    %1118 = vector.extract_strided_slice %1004 {offsets = [0, 7], sizes = [16, 1], strides = [1, 1]} : vector<16x8xbf16> to vector<16x1xbf16>
    %cst_195 = arith.constant 0.000000e+00 : bf16
    %1119 = vector.broadcast %cst_195 : bf16 to vector<16x1xbf16>
    %1120 = arith.cmpf ogt, %1118, %1119 : vector<16x1xbf16>
    %1121 = vector.extract_strided_slice %1005 {offsets = [7, 0], sizes = [1, 32], strides = [1, 1]} : vector<8x32xf32> to vector<1x32xf32>
    %1122 = vector.broadcast %1121 : vector<1x32xf32> to vector<16x32xf32>
    %1123 = arith.maximumf %1110, %1122 : vector<16x32xf32>
    %1124 = vector.shape_cast %1120 : vector<16x1xi1> to vector<16x1xi1>
    %1125 = vector.broadcast %1124 : vector<16x1xi1> to vector<16x32xi1>
    %1126 = arith.select %1125, %1123, %1110 : vector<16x32xi1>, vector<16x32xf32>
    %cst_196 = arith.constant 0.000000e+00 : f32
    %1127 = vector.broadcast %cst_196 : f32 to vector<1x32xf32>
    %1128 = arith.subf %1127, %1121 : vector<1x32xf32>
    %1129 = vector.broadcast %1128 : vector<1x32xf32> to vector<16x32xf32>
    %1130 = arith.maximumf %1117, %1129 : vector<16x32xf32>
    %1131 = vector.shape_cast %1120 : vector<16x1xi1> to vector<16x1xi1>
    %1132 = vector.broadcast %1131 : vector<16x1xi1> to vector<16x32xi1>
    %1133 = arith.select %1132, %1130, %1117 : vector<16x32xi1>, vector<16x32xf32>
    %1134 = vector.extract_strided_slice %0 {offsets = [0, 8], sizes = [16, 8], strides = [1, 1]} : vector<16x16xbf16> to vector<16x8xbf16>
    %1135 = vector.extract_strided_slice %983 {offsets = [8, 0], sizes = [8, 32], strides = [1, 1]} : vector<16x32xf32> to vector<8x32xf32>
    %1136 = vector.extract_strided_slice %1134 {offsets = [0, 0], sizes = [16, 1], strides = [1, 1]} : vector<16x8xbf16> to vector<16x1xbf16>
    %cst_197 = arith.constant 0.000000e+00 : bf16
    %1137 = vector.broadcast %cst_197 : bf16 to vector<16x1xbf16>
    %1138 = arith.cmpf ogt, %1136, %1137 : vector<16x1xbf16>
    %1139 = vector.extract_strided_slice %1135 {offsets = [0, 0], sizes = [1, 32], strides = [1, 1]} : vector<8x32xf32> to vector<1x32xf32>
    %1140 = vector.broadcast %1139 : vector<1x32xf32> to vector<16x32xf32>
    %1141 = arith.maximumf %1126, %1140 : vector<16x32xf32>
    %1142 = vector.shape_cast %1138 : vector<16x1xi1> to vector<16x1xi1>
    %1143 = vector.broadcast %1142 : vector<16x1xi1> to vector<16x32xi1>
    %1144 = arith.select %1143, %1141, %1126 : vector<16x32xi1>, vector<16x32xf32>
    %cst_198 = arith.constant 0.000000e+00 : f32
    %1145 = vector.broadcast %cst_198 : f32 to vector<1x32xf32>
    %1146 = arith.subf %1145, %1139 : vector<1x32xf32>
    %1147 = vector.broadcast %1146 : vector<1x32xf32> to vector<16x32xf32>
    %1148 = arith.maximumf %1133, %1147 : vector<16x32xf32>
    %1149 = vector.shape_cast %1138 : vector<16x1xi1> to vector<16x1xi1>
    %1150 = vector.broadcast %1149 : vector<16x1xi1> to vector<16x32xi1>
    %1151 = arith.select %1150, %1148, %1133 : vector<16x32xi1>, vector<16x32xf32>
    %1152 = vector.extract_strided_slice %1134 {offsets = [0, 1], sizes = [16, 1], strides = [1, 1]} : vector<16x8xbf16> to vector<16x1xbf16>
    %cst_199 = arith.constant 0.000000e+00 : bf16
    %1153 = vector.broadcast %cst_199 : bf16 to vector<16x1xbf16>
    %1154 = arith.cmpf ogt, %1152, %1153 : vector<16x1xbf16>
    %1155 = vector.extract_strided_slice %1135 {offsets = [1, 0], sizes = [1, 32], strides = [1, 1]} : vector<8x32xf32> to vector<1x32xf32>
    %1156 = vector.broadcast %1155 : vector<1x32xf32> to vector<16x32xf32>
    %1157 = arith.maximumf %1144, %1156 : vector<16x32xf32>
    %1158 = vector.shape_cast %1154 : vector<16x1xi1> to vector<16x1xi1>
    %1159 = vector.broadcast %1158 : vector<16x1xi1> to vector<16x32xi1>
    %1160 = arith.select %1159, %1157, %1144 : vector<16x32xi1>, vector<16x32xf32>
    %cst_200 = arith.constant 0.000000e+00 : f32
    %1161 = vector.broadcast %cst_200 : f32 to vector<1x32xf32>
    %1162 = arith.subf %1161, %1155 : vector<1x32xf32>
    %1163 = vector.broadcast %1162 : vector<1x32xf32> to vector<16x32xf32>
    %1164 = arith.maximumf %1151, %1163 : vector<16x32xf32>
    %1165 = vector.shape_cast %1154 : vector<16x1xi1> to vector<16x1xi1>
    %1166 = vector.broadcast %1165 : vector<16x1xi1> to vector<16x32xi1>
    %1167 = arith.select %1166, %1164, %1151 : vector<16x32xi1>, vector<16x32xf32>
    %1168 = vector.extract_strided_slice %1134 {offsets = [0, 2], sizes = [16, 1], strides = [1, 1]} : vector<16x8xbf16> to vector<16x1xbf16>
    %cst_201 = arith.constant 0.000000e+00 : bf16
    %1169 = vector.broadcast %cst_201 : bf16 to vector<16x1xbf16>
    %1170 = arith.cmpf ogt, %1168, %1169 : vector<16x1xbf16>
    %1171 = vector.extract_strided_slice %1135 {offsets = [2, 0], sizes = [1, 32], strides = [1, 1]} : vector<8x32xf32> to vector<1x32xf32>
    %1172 = vector.broadcast %1171 : vector<1x32xf32> to vector<16x32xf32>
    %1173 = arith.maximumf %1160, %1172 : vector<16x32xf32>
    %1174 = vector.shape_cast %1170 : vector<16x1xi1> to vector<16x1xi1>
    %1175 = vector.broadcast %1174 : vector<16x1xi1> to vector<16x32xi1>
    %1176 = arith.select %1175, %1173, %1160 : vector<16x32xi1>, vector<16x32xf32>
    %cst_202 = arith.constant 0.000000e+00 : f32
    %1177 = vector.broadcast %cst_202 : f32 to vector<1x32xf32>
    %1178 = arith.subf %1177, %1171 : vector<1x32xf32>
    %1179 = vector.broadcast %1178 : vector<1x32xf32> to vector<16x32xf32>
    %1180 = arith.maximumf %1167, %1179 : vector<16x32xf32>
    %1181 = vector.shape_cast %1170 : vector<16x1xi1> to vector<16x1xi1>
    %1182 = vector.broadcast %1181 : vector<16x1xi1> to vector<16x32xi1>
    %1183 = arith.select %1182, %1180, %1167 : vector<16x32xi1>, vector<16x32xf32>
    %1184 = vector.extract_strided_slice %1134 {offsets = [0, 3], sizes = [16, 1], strides = [1, 1]} : vector<16x8xbf16> to vector<16x1xbf16>
    %cst_203 = arith.constant 0.000000e+00 : bf16
    %1185 = vector.broadcast %cst_203 : bf16 to vector<16x1xbf16>
    %1186 = arith.cmpf ogt, %1184, %1185 : vector<16x1xbf16>
    %1187 = vector.extract_strided_slice %1135 {offsets = [3, 0], sizes = [1, 32], strides = [1, 1]} : vector<8x32xf32> to vector<1x32xf32>
    %1188 = vector.broadcast %1187 : vector<1x32xf32> to vector<16x32xf32>
    %1189 = arith.maximumf %1176, %1188 : vector<16x32xf32>
    %1190 = vector.shape_cast %1186 : vector<16x1xi1> to vector<16x1xi1>
    %1191 = vector.broadcast %1190 : vector<16x1xi1> to vector<16x32xi1>
    %1192 = arith.select %1191, %1189, %1176 : vector<16x32xi1>, vector<16x32xf32>
    %cst_204 = arith.constant 0.000000e+00 : f32
    %1193 = vector.broadcast %cst_204 : f32 to vector<1x32xf32>
    %1194 = arith.subf %1193, %1187 : vector<1x32xf32>
    %1195 = vector.broadcast %1194 : vector<1x32xf32> to vector<16x32xf32>
    %1196 = arith.maximumf %1183, %1195 : vector<16x32xf32>
    %1197 = vector.shape_cast %1186 : vector<16x1xi1> to vector<16x1xi1>
    %1198 = vector.broadcast %1197 : vector<16x1xi1> to vector<16x32xi1>
    %1199 = arith.select %1198, %1196, %1183 : vector<16x32xi1>, vector<16x32xf32>
    %1200 = vector.extract_strided_slice %1134 {offsets = [0, 4], sizes = [16, 1], strides = [1, 1]} : vector<16x8xbf16> to vector<16x1xbf16>
    %cst_205 = arith.constant 0.000000e+00 : bf16
    %1201 = vector.broadcast %cst_205 : bf16 to vector<16x1xbf16>
    %1202 = arith.cmpf ogt, %1200, %1201 : vector<16x1xbf16>
    %1203 = vector.extract_strided_slice %1135 {offsets = [4, 0], sizes = [1, 32], strides = [1, 1]} : vector<8x32xf32> to vector<1x32xf32>
    %1204 = vector.broadcast %1203 : vector<1x32xf32> to vector<16x32xf32>
    %1205 = arith.maximumf %1192, %1204 : vector<16x32xf32>
    %1206 = vector.shape_cast %1202 : vector<16x1xi1> to vector<16x1xi1>
    %1207 = vector.broadcast %1206 : vector<16x1xi1> to vector<16x32xi1>
    %1208 = arith.select %1207, %1205, %1192 : vector<16x32xi1>, vector<16x32xf32>
    %cst_206 = arith.constant 0.000000e+00 : f32
    %1209 = vector.broadcast %cst_206 : f32 to vector<1x32xf32>
    %1210 = arith.subf %1209, %1203 : vector<1x32xf32>
    %1211 = vector.broadcast %1210 : vector<1x32xf32> to vector<16x32xf32>
    %1212 = arith.maximumf %1199, %1211 : vector<16x32xf32>
    %1213 = vector.shape_cast %1202 : vector<16x1xi1> to vector<16x1xi1>
    %1214 = vector.broadcast %1213 : vector<16x1xi1> to vector<16x32xi1>
    %1215 = arith.select %1214, %1212, %1199 : vector<16x32xi1>, vector<16x32xf32>
    %1216 = vector.extract_strided_slice %1134 {offsets = [0, 5], sizes = [16, 1], strides = [1, 1]} : vector<16x8xbf16> to vector<16x1xbf16>
    %cst_207 = arith.constant 0.000000e+00 : bf16
    %1217 = vector.broadcast %cst_207 : bf16 to vector<16x1xbf16>
    %1218 = arith.cmpf ogt, %1216, %1217 : vector<16x1xbf16>
    %1219 = vector.extract_strided_slice %1135 {offsets = [5, 0], sizes = [1, 32], strides = [1, 1]} : vector<8x32xf32> to vector<1x32xf32>
    %1220 = vector.broadcast %1219 : vector<1x32xf32> to vector<16x32xf32>
    %1221 = arith.maximumf %1208, %1220 : vector<16x32xf32>
    %1222 = vector.shape_cast %1218 : vector<16x1xi1> to vector<16x1xi1>
    %1223 = vector.broadcast %1222 : vector<16x1xi1> to vector<16x32xi1>
    %1224 = arith.select %1223, %1221, %1208 : vector<16x32xi1>, vector<16x32xf32>
    %cst_208 = arith.constant 0.000000e+00 : f32
    %1225 = vector.broadcast %cst_208 : f32 to vector<1x32xf32>
    %1226 = arith.subf %1225, %1219 : vector<1x32xf32>
    %1227 = vector.broadcast %1226 : vector<1x32xf32> to vector<16x32xf32>
    %1228 = arith.maximumf %1215, %1227 : vector<16x32xf32>
    %1229 = vector.shape_cast %1218 : vector<16x1xi1> to vector<16x1xi1>
    %1230 = vector.broadcast %1229 : vector<16x1xi1> to vector<16x32xi1>
    %1231 = arith.select %1230, %1228, %1215 : vector<16x32xi1>, vector<16x32xf32>
    %1232 = vector.extract_strided_slice %1134 {offsets = [0, 6], sizes = [16, 1], strides = [1, 1]} : vector<16x8xbf16> to vector<16x1xbf16>
    %cst_209 = arith.constant 0.000000e+00 : bf16
    %1233 = vector.broadcast %cst_209 : bf16 to vector<16x1xbf16>
    %1234 = arith.cmpf ogt, %1232, %1233 : vector<16x1xbf16>
    %1235 = vector.extract_strided_slice %1135 {offsets = [6, 0], sizes = [1, 32], strides = [1, 1]} : vector<8x32xf32> to vector<1x32xf32>
    %1236 = vector.broadcast %1235 : vector<1x32xf32> to vector<16x32xf32>
    %1237 = arith.maximumf %1224, %1236 : vector<16x32xf32>
    %1238 = vector.shape_cast %1234 : vector<16x1xi1> to vector<16x1xi1>
    %1239 = vector.broadcast %1238 : vector<16x1xi1> to vector<16x32xi1>
    %1240 = arith.select %1239, %1237, %1224 : vector<16x32xi1>, vector<16x32xf32>
    %cst_210 = arith.constant 0.000000e+00 : f32
    %1241 = vector.broadcast %cst_210 : f32 to vector<1x32xf32>
    %1242 = arith.subf %1241, %1235 : vector<1x32xf32>
    %1243 = vector.broadcast %1242 : vector<1x32xf32> to vector<16x32xf32>
    %1244 = arith.maximumf %1231, %1243 : vector<16x32xf32>
    %1245 = vector.shape_cast %1234 : vector<16x1xi1> to vector<16x1xi1>
    %1246 = vector.broadcast %1245 : vector<16x1xi1> to vector<16x32xi1>
    %1247 = arith.select %1246, %1244, %1231 : vector<16x32xi1>, vector<16x32xf32>
    %1248 = vector.extract_strided_slice %1134 {offsets = [0, 7], sizes = [16, 1], strides = [1, 1]} : vector<16x8xbf16> to vector<16x1xbf16>
    %cst_211 = arith.constant 0.000000e+00 : bf16
    %1249 = vector.broadcast %cst_211 : bf16 to vector<16x1xbf16>
    %1250 = arith.cmpf ogt, %1248, %1249 : vector<16x1xbf16>
    %1251 = vector.extract_strided_slice %1135 {offsets = [7, 0], sizes = [1, 32], strides = [1, 1]} : vector<8x32xf32> to vector<1x32xf32>
    %1252 = vector.broadcast %1251 : vector<1x32xf32> to vector<16x32xf32>
    %1253 = arith.maximumf %1240, %1252 : vector<16x32xf32>
    %1254 = vector.shape_cast %1250 : vector<16x1xi1> to vector<16x1xi1>
    %1255 = vector.broadcast %1254 : vector<16x1xi1> to vector<16x32xi1>
    %1256 = arith.select %1255, %1253, %1240 : vector<16x32xi1>, vector<16x32xf32>
    %cst_212 = arith.constant 0.000000e+00 : f32
    %1257 = vector.broadcast %cst_212 : f32 to vector<1x32xf32>
    %1258 = arith.subf %1257, %1251 : vector<1x32xf32>
    %1259 = vector.broadcast %1258 : vector<1x32xf32> to vector<16x32xf32>
    %1260 = arith.maximumf %1247, %1259 : vector<16x32xf32>
    %1261 = vector.shape_cast %1250 : vector<16x1xi1> to vector<16x1xi1>
    %1262 = vector.broadcast %1261 : vector<16x1xi1> to vector<16x32xi1>
    %1263 = arith.select %1262, %1260, %1247 : vector<16x32xi1>, vector<16x32xf32>
    %cst_213 = arith.constant 0.000000e+00 : f32
    %1264 = vector.broadcast %cst_213 : f32 to vector<16x32xf32>
    %1265 = arith.subf %1264, %1263 : vector<16x32xf32>
    %1266 = vector.broadcast %2 : vector<16x1xf32> to vector<16x32xf32>
    %1267 = arith.mulf %1265, %1266 : vector<16x32xf32>
    %1268 = vector.broadcast %2 : vector<16x1xf32> to vector<16x32xf32>
    %1269 = arith.mulf %1256, %1268 : vector<16x32xf32>
    %1270 = tpu.concatenate %990, %1267, %1269, %1001 in 1 : vector<16x32xf32>, vector<16x32xf32>, vector<16x32xf32>, vector<16x32xf32> -> vector<16x128xf32>
    %1271 = vector.broadcast %3 : vector<16x1xf32> to vector<16x128xf32>
    %1272 = arith.mulf %1271, %1270 : vector<16x128xf32>
    %1273 = vector.broadcast %4 : vector<16x1xf32> to vector<16x128xf32>
    %1274 = arith.mulf %1273, %1270 : vector<16x128xf32>
    %1275 = tpu.concatenate %1270, %1272, %1274 in 1 : vector<16x128xf32>, vector<16x128xf32>, vector<16x128xf32> -> vector<16x384xf32>
    %1276 = arith.truncf %1275 : vector<16x384xf32> to vector<16x384xbf16>
    %c0_214 = arith.constant 0 : index
    %c0_215 = arith.constant 0 : index
    %1277 = vector.load %arg18[%c0_214, %c0_215] : memref<384x16xbf16, #tpu.memory_space<vmem>>, vector<384x16xbf16>
    %cst_216 = arith.constant dense<0.000000e+00> : vector<16x16xf32>
    %1278 = tpu.matmul %1276, %1277, %cst_216 {dimension_numbers = #tpu.dot_dimension_numbers<[1], [0], [0], [1], [0, 0, 1, 1], [], []>} : vector<16x384xbf16>, vector<384x16xbf16>, vector<16x16xf32> -> vector<16x16xf32>
    %c0_217 = arith.constant 0 : index
    %c0_218 = arith.constant 0 : index
    %1279 = vector.load %arg19[%c0_217, %c0_218] : memref<1x16xf32, #tpu.memory_space<vmem>>, vector<1x16xf32>
    %1280 = vector.broadcast %1279 : vector<1x16xf32> to vector<16x16xf32>
    %1281 = arith.addf %1278, %1280 : vector<16x16xf32>
    %cst_219 = arith.constant 0.000000e+00 : f32
    %1282 = vector.broadcast %cst_219 : f32 to vector<16x16xf32>
    %1283 = arith.maximumf %1281, %1282 : vector<16x16xf32>
    %cst_220 = arith.constant dense<0.000000e+00> : vector<16xf32>
    %1284 = vector.multi_reduction <add>, %1283, %cst_220 [0] : vector<16x16xf32> to vector<16xf32>
    %1285 = vector.shape_cast %1284 : vector<16xf32> to vector<1x16xf32>
    %cst_221 = arith.constant 1.600000e+01 : f32
    %1286 = vector.broadcast %cst_221 : f32 to vector<1x16xf32>
    %1287 = arith.divf %1285, %1286 : vector<1x16xf32>
    %1288 = arith.mulf %1283, %1283 : vector<16x16xf32>
    %cst_222 = arith.constant dense<0.000000e+00> : vector<16xf32>
    %1289 = vector.multi_reduction <add>, %1288, %cst_222 [0] : vector<16x16xf32> to vector<16xf32>
    %1290 = vector.shape_cast %1289 : vector<16xf32> to vector<1x16xf32>
    %cst_223 = arith.constant 1.600000e+01 : f32
    %1291 = vector.broadcast %cst_223 : f32 to vector<1x16xf32>
    %1292 = arith.divf %1290, %1291 : vector<1x16xf32>
    %1293 = arith.mulf %1287, %1287 : vector<1x16xf32>
    %1294 = arith.subf %1292, %1293 : vector<1x16xf32>
    %cst_224 = arith.constant 0.000000e+00 : f32
    %1295 = vector.broadcast %cst_224 : f32 to vector<1x16xf32>
    %1296 = arith.maximumf %1294, %1295 : vector<1x16xf32>
    %1297 = vector.broadcast %1287 : vector<1x16xf32> to vector<16x16xf32>
    %1298 = arith.subf %1283, %1297 : vector<16x16xf32>
    %cst_225 = arith.constant 9.99999974E-6 : f32
    %1299 = vector.broadcast %cst_225 : f32 to vector<1x16xf32>
    %1300 = arith.addf %1296, %1299 : vector<1x16xf32>
    %1301 = math.rsqrt %1300 : vector<1x16xf32>
    %1302 = vector.broadcast %1301 : vector<1x16xf32> to vector<16x16xf32>
    %1303 = arith.mulf %1298, %1302 : vector<16x16xf32>
    %c0_226 = arith.constant 0 : index
    %c0_227 = arith.constant 0 : index
    %1304 = vector.load %arg20[%c0_226, %c0_227] : memref<1x16xf32, #tpu.memory_space<vmem>>, vector<1x16xf32>
    %1305 = vector.broadcast %1304 : vector<1x16xf32> to vector<16x16xf32>
    %1306 = arith.mulf %1303, %1305 : vector<16x16xf32>
    %c0_228 = arith.constant 0 : index
    %c0_229 = arith.constant 0 : index
    %1307 = vector.load %arg21[%c0_228, %c0_229] : memref<1x16xf32, #tpu.memory_space<vmem>>, vector<1x16xf32>
    %1308 = vector.broadcast %1307 : vector<1x16xf32> to vector<16x16xf32>
    %1309 = arith.addf %1306, %1308 : vector<16x16xf32>
    %1310 = arith.truncf %1309 : vector<16x16xf32> to vector<16x16xbf16>
    %c0_230 = arith.constant 0 : index
    %c0_231 = arith.constant 0 : index
    %1311 = vector.load %arg22[%c0_230, %c0_231] : memref<16x128xbf16, #tpu.memory_space<vmem>>, vector<16x128xbf16>
    %cst_232 = arith.constant dense<0.000000e+00> : vector<16x128xf32>
    %1312 = tpu.matmul %1310, %1311, %cst_232 {dimension_numbers = #tpu.dot_dimension_numbers<[1], [0], [0], [1], [0, 0, 1, 1], [], []>} : vector<16x16xbf16>, vector<16x128xbf16>, vector<16x128xf32> -> vector<16x128xf32>
    %c0_233 = arith.constant 0 : index
    %c0_234 = arith.constant 0 : index
    %1313 = vector.load %arg23[%c0_233, %c0_234] : memref<1x128xf32, #tpu.memory_space<vmem>>, vector<1x128xf32>
    %1314 = vector.broadcast %1313 : vector<1x128xf32> to vector<16x128xf32>
    %1315 = arith.addf %1312, %1314 : vector<16x128xf32>
    %c0_235 = arith.constant 0 : index
    %c0_236 = arith.constant 0 : index
    %1316 = vector.load %arg24[%c0_235, %c0_236] : memref<16x128xf32, #tpu.memory_space<vmem>>, vector<16x128xf32>
    tpu.vector_store %arg24[%c0_235, %c0_236], %1315 {strides = array<i32>} : memref<16x128xf32, #tpu.memory_space<vmem>>, vector<16x128xf32>,
    return
  }
}

</mosaic_0001>

<llo_original>
// kernel: gcn_forward.1
$region0: #{gcn_forward.1}
  #allocation0 [shape = 'u32[]', space=smem, size = 0x4, offset = 0x4, fixed_abs, tag = 'smem constant byte address 0x4 - core index']
  #allocation1 [shape = 'u32[144,128]{1,0:T(1,128)}', space=vmem, size = 0x12000, scoped, tag = 'internal scratch']
  %s0 = inlined_call_operand.vmem [shape: bf16[16,16], index: 0, kind: input, shape index: {}]
  %s1 = inlined_call_operand.vmem [shape: f32[16,1], index: 1, kind: input, shape index: {}]
  %s2 = inlined_call_operand.vmem [shape: f32[16,1], index: 2, kind: input, shape index: {}]
  %s3 = inlined_call_operand.vmem [shape: f32[16,1], index: 3, kind: input, shape index: {}]
  %s4 = inlined_call_operand.vmem [shape: f32[16,1], index: 4, kind: input, shape index: {}]
  %s5 = inlined_call_operand.vmem [shape: f32[16,32], index: 5, kind: input, shape index: {}]
  %s6 = inlined_call_operand.vmem [shape: bf16[384,32], index: 6, kind: input, shape index: {}]
  %s7 = inlined_call_operand.vmem [shape: f32[1,32], index: 7, kind: input, shape index: {}]
  %s8 = inlined_call_operand.vmem [shape: f32[1,32], index: 8, kind: input, shape index: {}]
  %s9 = inlined_call_operand.vmem [shape: f32[1,32], index: 9, kind: input, shape index: {}]
  %s10 = inlined_call_operand.vmem [shape: bf16[384,64], index: 10, kind: input, shape index: {}]
  %s11 = inlined_call_operand.vmem [shape: f32[1,64], index: 11, kind: input, shape index: {}]
  %s12 = inlined_call_operand.vmem [shape: f32[1,64], index: 12, kind: input, shape index: {}]
  %s13 = inlined_call_operand.vmem [shape: f32[1,64], index: 13, kind: input, shape index: {}]
  %s14 = inlined_call_operand.vmem [shape: bf16[768,32], index: 14, kind: input, shape index: {}]
  %s15 = inlined_call_operand.vmem [shape: f32[1,32], index: 15, kind: input, shape index: {}]
  %s16 = inlined_call_operand.vmem [shape: f32[1,32], index: 16, kind: input, shape index: {}]
  %s17 = inlined_call_operand.vmem [shape: f32[1,32], index: 17, kind: input, shape index: {}]
  %s18 = inlined_call_operand.vmem [shape: bf16[384,16], index: 18, kind: input, shape index: {}]
  %s19 = inlined_call_operand.vmem [shape: f32[1,16], index: 19, kind: input, shape index: {}]
  %s20 = inlined_call_operand.vmem [shape: f32[1,16], index: 20, kind: input, shape index: {}]
  %s21 = inlined_call_operand.vmem [shape: f32[1,16], index: 21, kind: input, shape index: {}]
  %s22 = inlined_call_operand.vmem [shape: bf16[16,128], index: 22, kind: input, shape index: {}]
  %s23 = inlined_call_operand.vmem [shape: f32[1,128], index: 23, kind: input, shape index: {}]
  %s24 = inlined_call_operand.vmem [shape: f32[16,128], index: 24, kind: output, shape index: {}]
  %s25 = sld [smem:[#allocation0]]
  $region106: #{gcn_forward.1} parent=0
    _
  %s27 = ssub.s32 1, %s25
  %s28 = scalar_select 0, %s27, %s25
  // Predicated region
  $region2: #{gcn_forward.1} parent=0 // pred_check
    _
  $region3: #{gcn_forward.1} parent=0 // pred_check_branch
    %30 = sbr.rel (0) target = $region5
  $region4: #{gcn_forward.1} parent=0 // pred_region
    _
  $region5: #{gcn_forward.1} parent=0 // pred_fallthru
    _
  // Predicated region
  $region6: #{gcn_forward.1} parent=0 // pred_check
    _
  $region7: #{gcn_forward.1} parent=0 // pred_check_branch
    %32 = sbr.rel (0) target = $region9
  $region8: #{gcn_forward.1} parent=0 // pred_region
    _
  $region9: #{gcn_forward.1} parent=0 // pred_fallthru
    _
  // Predicated region
  $region10: #{gcn_forward.1} parent=0 // pred_check
    _
  $region11: #{gcn_forward.1} parent=0 // pred_check_branch
    %34 = sbr.rel (0) target = $region13
  $region12: #{gcn_forward.1} parent=0 // pred_region
    _
  $region13: #{gcn_forward.1} parent=0 // pred_fallthru
    _
  // Predicated region
  $region14: #{gcn_forward.1} parent=0 // pred_check
    _
  $region15: #{gcn_forward.1} parent=0 // pred_check_branch
    %36 = sbr.rel (0) target = $region17
  $region16: #{gcn_forward.1} parent=0 // pred_region
    _
  $region17: #{gcn_forward.1} parent=0 // pred_fallthru
    _
  // Predicated region
  $region18: #{gcn_forward.1} parent=0 // pred_check
    _
  $region19: #{gcn_forward.1} parent=0 // pred_check_branch
    %38 = sbr.rel (0) target = $region21
  $region20: #{gcn_forward.1} parent=0 // pred_region
    _
  $region21: #{gcn_forward.1} parent=0 // pred_fallthru
    _
  // Predicated region
  $region22: #{gcn_forward.1} parent=0 // pred_check
    _
  $region23: #{gcn_forward.1} parent=0 // pred_check_branch
    %40 = sbr.rel (0) target = $region25
  $region24: #{gcn_forward.1} parent=0 // pred_region
    _
  $region25: #{gcn_forward.1} parent=0 // pred_fallthru
    _
  // Predicated region
  $region26: #{gcn_forward.1} parent=0 // pred_check
    _
  $region27: #{gcn_forward.1} parent=0 // pred_check_branch
    %42 = sbr.rel (0) target = $region29
  $region28: #{gcn_forward.1} parent=0 // pred_region
    _
  $region29: #{gcn_forward.1} parent=0 // pred_fallthru
    _
  // Predicated region
  $region30: #{gcn_forward.1} parent=0 // pred_check
    _
  $region31: #{gcn_forward.1} parent=0 // pred_check_branch
    %44 = sbr.rel (0) target = $region33
  $region32: #{gcn_forward.1} parent=0 // pred_region
    _
  $region33: #{gcn_forward.1} parent=0 // pred_fallthru
    _
  // Predicated region
  $region34: #{gcn_forward.1} parent=0 // pred_check
    _
  $region35: #{gcn_forward.1} parent=0 // pred_check_branch
    %46 = sbr.rel (0) target = $region37
  $region36: #{gcn_forward.1} parent=0 // pred_region
    _
  $region37: #{gcn_forward.1} parent=0 // pred_fallthru
    _
  // Predicated region
  $region38: #{gcn_forward.1} parent=0 // pred_check
    _
  $region39: #{gcn_forward.1} parent=0 // pred_check_branch
    %48 = sbr.rel (0) target = $region41
  $region40: #{gcn_forward.1} parent=0 // pred_region
    _
  $region41: #{gcn_forward.1} parent=0 // pred_fallthru
    _
  // Predicated region
  $region42: #{gcn_forward.1} parent=0 // pred_check
    _
  $region43: #{gcn_forward.1} parent=0 // pred_check_branch
    %50 = sbr.rel (0) target = $region45
  $region44: #{gcn_forward.1} parent=0 // pred_region
    _
  $region45: #{gcn_forward.1} parent=0 // pred_fallthru
    _
  // Predicated region
  $region46: #{gcn_forward.1} parent=0 // pred_check
    _
  $region47: #{gcn_forward.1} parent=0 // pred_check_branch
    %52 = sbr.rel (0) target = $region49
  $region48: #{gcn_forward.1} parent=0 // pred_region
    _
  $region49: #{gcn_forward.1} parent=0 // pred_fallthru
    _
  // Predicated region
  $region50: #{gcn_forward.1} parent=0 // pred_check
    _
  $region51: #{gcn_forward.1} parent=0 // pred_check_branch
    %54 = sbr.rel (0) target = $region53
  $region52: #{gcn_forward.1} parent=0 // pred_region
    _
  $region53: #{gcn_forward.1} parent=0 // pred_fallthru
    _
  // Predicated region
  $region54: #{gcn_forward.1} parent=0 // pred_check
    _
  $region55: #{gcn_forward.1} parent=0 // pred_check_branch
    %56 = sbr.rel (0) target = $region57
  $region56: #{gcn_forward.1} parent=0 // pred_region
    _
  $region57: #{gcn_forward.1} parent=0 // pred_fallthru
    _
  // Predicated region
  $region58: #{gcn_forward.1} parent=0 // pred_check
    _
  $region59: #{gcn_forward.1} parent=0 // pred_check_branch
    %58 = sbr.rel (0) target = $region61
  $region60: #{gcn_forward.1} parent=0 // pred_region
    _
  $region61: #{gcn_forward.1} parent=0 // pred_fallthru
    _
  // Predicated region
  $region62: #{gcn_forward.1} parent=0 // pred_check
    _
  $region63: #{gcn_forward.1} parent=0 // pred_check_branch
    %60 = sbr.rel (0) target = $region65
  $region64: #{gcn_forward.1} parent=0 // pred_region
    _
  $region65: #{gcn_forward.1} parent=0 // pred_fallthru
    _
  // Predicated region
  $region66: #{gcn_forward.1} parent=0 // pred_check
    _
  $region67: #{gcn_forward.1} parent=0 // pred_check_branch
    %62 = sbr.rel (0) target = $region69
  $region68: #{gcn_forward.1} parent=0 // pred_region
    _
  $region69: #{gcn_forward.1} parent=0 // pred_fallthru
    _
  // Predicated region
  $region70: #{gcn_forward.1} parent=0 // pred_check
    _
  $region71: #{gcn_forward.1} parent=0 // pred_check_branch
    %64 = sbr.rel (0) target = $region73
  $region72: #{gcn_forward.1} parent=0 // pred_region
    _
  $region73: #{gcn_forward.1} parent=0 // pred_fallthru
    _
  // Predicated region
  $region74: #{gcn_forward.1} parent=0 // pred_check
    _
  $region75: #{gcn_forward.1} parent=0 // pred_check_branch
    %66 = sbr.rel (0) target = $region77
  $region76: #{gcn_forward.1} parent=0 // pred_region
    _
  $region77: #{gcn_forward.1} parent=0 // pred_fallthru
    _
  // Predicated region
  $region78: #{gcn_forward.1} parent=0 // pred_check
    _
  $region79: #{gcn_forward.1} parent=0 // pred_check_branch
    %68 = sbr.rel (0) target = $region81
  $region80: #{gcn_forward.1} parent=0 // pred_region
    _
  $region81: #{gcn_forward.1} parent=0 // pred_fallthru
    _
  // Predicated region
  $region82: #{gcn_forward.1} parent=0 // pred_check
    _
  $region83: #{gcn_forward.1} parent=0 // pred_check_branch
    %70 = sbr.rel (0) target = $region85
  $region84: #{gcn_forward.1} parent=0 // pred_region
    _
  $region85: #{gcn_forward.1} parent=0 // pred_fallthru
    _
  // Predicated region
  $region86: #{gcn_forward.1} parent=0 // pred_check
    _
  $region87: #{gcn_forward.1} parent=0 // pred_check_branch
    %72 = sbr.rel (0) target = $region89
  $region88: #{gcn_forward.1} parent=0 // pred_region
    _
  $region89: #{gcn_forward.1} parent=0 // pred_fallthru
    _
  // Predicated region
  $region90: #{gcn_forward.1} parent=0 // pred_check
    _
  $region91: #{gcn_forward.1} parent=0 // pred_check_branch
    %74 = sbr.rel (0) target = $region93
  $region92: #{gcn_forward.1} parent=0 // pred_region
    _
  $region93: #{gcn_forward.1} parent=0 // pred_fallthru
    _
  // Predicated region
  $region94: #{gcn_forward.1} parent=0 // pred_check
    _
  $region95: #{gcn_forward.1} parent=0 // pred_check_branch
    %76 = sbr.rel (0) target = $region97
  $region96: #{gcn_forward.1} parent=0 // pred_region
    _
  $region97: #{gcn_forward.1} parent=0 // pred_fallthru
    _
  %v80 = vld [vmem:[%s0] sm:$0xf]
  %v81 = vld [vmem:[%s0 + $0x4] sm:$0xf]
  %v82 = vld [vmem:[%s1] sm:$0xff]
  %v83 = vld [vmem:[%s1 + $0x8] sm:$0xff]
  %v84 = vld [vmem:[%s2] sm:$0xff]
  %v85 = vld [vmem:[%s2 + $0x8] sm:$0xff]
  %v86 = vld [vmem:[%s3] sm:$0xff]
  %v87 = vld [vmem:[%s3 + $0x8] sm:$0xff]
  %v88 = vld [vmem:[%s4] sm:$0xff]
  %v89 = vld [vmem:[%s4 + $0x8] sm:$0xff]
  %v90 = vld [vmem:[%s5] sm:$0xff]
  %v91 = vld [vmem:[%s5 + $0x8] sm:$0xff]
  %v92 = vpack.c.bf16 %v91, %v90
  %v95 = vunpack.c.l.b16 %v80
  %v96 = vunpack.c.l.b16 %v81
  %v97 = vpack.c.b16 %v96, %v95
  %vm98 = vcmask 130048
  %v100 = vsel %vm98, %v97, 0
  %102 = vmatprep.subr.bf16.mxu0 0
  %103 = vmatpush1.bf16.msra.mxu0 %v92
  %104 = vmatprep.subr.bf16.mxu0 0
  %105 = vmatpush1.bf16.msra.mxu0 0
  %106 = vmatprep.subr.bf16.mxu0 0
  %107 = vmatpush1.bf16.msra.mxu0 0
  %108 = vmatprep.subr.bf16.mxu0 0
  %109 = vmatpush1.bf16.msra.mxu0 0
  %110 = vmatprep.subr.bf16.mxu0 0
  %111 = vmatpush1.bf16.msra.mxu0 0
  %112 = vmatprep.subr.bf16.mxu0 0
  %113 = vmatpush1.bf16.msra.mxu0 0
  %114 = vmatprep.subr.bf16.mxu0 0
  %115 = vmatpush1.bf16.msra.mxu0 0
  %116 = vmatprep.subr.bf16.mxu0 0
  %117 = vmatpush1.bf16.msra.mxu0 0
  %118 = vmatprep.subr.bf16.mxu0 0
  %119 = vmatpush1.bf16.msra.mxu0 0
  %120 = vmatprep.subr.bf16.mxu0 0
  %121 = vmatpush1.bf16.msra.mxu0 0
  %122 = vmatprep.subr.bf16.mxu0 0
  %123 = vmatpush1.bf16.msra.mxu0 0
  %124 = vmatprep.subr.bf16.mxu0 0
  %125 = vmatpush1.bf16.msra.mxu0 0
  %126 = vmatprep.subr.bf16.mxu0 0
  %127 = vmatpush1.bf16.msra.mxu0 0
  %128 = vmatprep.subr.bf16.mxu0 0
  %129 = vmatpush1.bf16.msra.mxu0 0
  %130 = vmatprep.subr.bf16.mxu0 0
  %131 = vmatpush1.bf16.msra.mxu0 0
  %132 = vmatprep.subr.bf16.mxu0 0
  %133 = vmatpush1.bf16.msra.mxu0 0
  %134 = vmatprep.mubr.bf16.mxu0 0
  %135 = vmatmul.mubr.bf16.gmra.mrb[0].mxu0 %v100
  %v136 = vpop.f32.mrb[0].mxu0
  %v137 = vadd.f32 0.0, %v136
  %v138 = vpop.f32.mrb[0].mxu0
  %v139 = vpop.f32.mrb[0].mxu0
  %v140 = vadd.f32 0.0, %v139
  %v141 = vpop.f32.mrb[0].mxu0
  %142 = vdwg.mxu0
  %v143 = vmul.f32 %v90, %v90
  %v144 = vmul.f32 %v91, %v91
  %v145 = vpack.c.bf16 %v144, %v143
  %146 = vmatprep.subr.bf16.mxu0 0
  %147 = vmatpush1.bf16.msra.mxu0 %v145
  %148 = vmatprep.subr.bf16.mxu0 0
  %149 = vmatpush1.bf16.msra.mxu0 0
  %150 = vmatprep.subr.bf16.mxu0 0
  %151 = vmatpush1.bf16.msra.mxu0 0
  %152 = vmatprep.subr.bf16.mxu0 0
  %153 = vmatpush1.bf16.msra.mxu0 0
  %154 = vmatprep.subr.bf16.mxu0 0
  %155 = vmatpush1.bf16.msra.mxu0 0
  %156 = vmatprep.subr.bf16.mxu0 0
  %157 = vmatpush1.bf16.msra.mxu0 0
  %158 = vmatprep.subr.bf16.mxu0 0
  %159 = vmatpush1.bf16.msra.mxu0 0
  %160 = vmatprep.subr.bf16.mxu0 0
  %161 = vmatpush1.bf16.msra.mxu0 0
  %162 = vmatprep.subr.bf16.mxu0 0
  %163 = vmatpush1.bf16.msra.mxu0 0
  %164 = vmatprep.subr.bf16.mxu0 0
  %165 = vmatpush1.bf16.msra.mxu0 0
  %166 = vmatprep.subr.bf16.mxu0 0
  %167 = vmatpush1.bf16.msra.mxu0 0
  %168 = vmatprep.subr.bf16.mxu0 0
  %169 = vmatpush1.bf16.msra.mxu0 0
  %170 = vmatprep.subr.bf16.mxu0 0
  %171 = vmatpush1.bf16.msra.mxu0 0
  %172 = vmatprep.subr.bf16.mxu0 0
  %173 = vmatpush1.bf16.msra.mxu0 0
  %174 = vmatprep.subr.bf16.mxu0 0
  %175 = vmatpush1.bf16.msra.mxu0 0
  %176 = vmatprep.subr.bf16.mxu0 0
  %177 = vmatpush1.bf16.msra.mxu0 0
  %178 = vmatprep.mubr.bf16.mxu0 0
  %179 = vmatmul.mubr.bf16.gmra.mrb[0].mxu0 %v100
  %v180 = vpop.f32.mrb[0].mxu0
  %v181 = vadd.f32 0.0, %v180
  %v182 = vpop.f32.mrb[0].mxu0
  %v183 = vpop.f32.mrb[0].mxu0
  %v184 = vadd.f32 0.0, %v183
  %v185 = vpop.f32.mrb[0].mxu0
  %186 = vdwg.mxu0
  %188 = vset.pattern.permute.xlu0 0
  %189 = vperm.xlu0 %188, %v82
  %v190 = vpop.permute.xlu0 %189
  %193 = vset.pattern.permute.xlu0 0
  %194 = vperm.xlu0 %193, %v83
  %v195 = vpop.permute.xlu0 %194
  %v197 = vmul.f32 %v137, %v190
  %v198 = vmul.f32 %v140, %v195
  %v199 = vmul.f32 %v181, %v190
  %v200 = vmul.f32 %v184, %v195
  %v201 = vmul.f32 %v197, %v197
  %v202 = vmul.f32 %v198, %v198
  %v203 = vsub.f32 %v199, %v201
  %v204 = vsub.f32 %v200, %v202
  %v205 = vmax.f32 %v203, 0.0
  %v206 = vmax.f32 %v204, 0.0
  %v207 = vadd.f32 %v205, 1e-05
  %v208 = vadd.f32 %v206, 1e-05
  %v209 = vrsqrt.pop %v207
  %v210 = vmul.f32 %v207, %v209
  %vm211 = vcmp.eq.f32.partialorder %v207, inf
  %v212 = vsel %vm211, %v207, %v210
  %vm213 = vcmp.eq.f32.partialorder %v207, 0.0
  %v214 = vand.u32 %v207, 2147483648
  %v215 = vsel %vm213, %v214, %v212
  %v216 = vrsqrt.pop %v208
  %v217 = vmul.f32 %v208, %v216
  %vm218 = vcmp.eq.f32.partialorder %v208, inf
  %v219 = vsel %vm218, %v208, %v217
  %vm220 = vcmp.eq.f32.partialorder %v208, 0.0
  %v221 = vand.u32 %v208, 2147483648
  %v222 = vsel %vm220, %v221, %v219
  %224 = vset.pattern.permute.xlu0 0
  %225 = vperm.xlu0 %224, %v84
  %v226 = vpop.permute.xlu0 %225
  %229 = vset.pattern.permute.xlu0 0
  %230 = vperm.xlu0 %229, %v85
  %v231 = vpop.permute.xlu0 %230
  %v233 = vmul.f32 %v215, %v226
  %v234 = vmul.f32 %v222, %v231
  %vm235 = vcmp.gt.bf16.partialorder %v80, 0
  %vm236 = vcmp.gt.bf16.partialorder %v81, 0
  %v237 = vlaneseq
  %v238 = vshrl.u32 %v237, 7
  %v239 = vsub.s32 0, %v238
  %v240 = vrot.slane %v90, %v239
  %v241 = vmax.f32 %v240, -1e+30
  %v242 = vsel %vm235, 65537, 0
  %v243 = vsel %vm236, 65537, 0
  %v244 = vunpack.c.l.b16 %v242
  %v245 = vunpack.c.l.b16 %v243
  %vm246 = vcmp.ne.s32.totalorder %v244, 0
  %vm247 = vcmp.ne.s32.totalorder %v245, 0
  %v248 = vsel %vm246, 1, 0
  %v249 = vsel %vm247, 1, 0
  %250 = vset.pattern.permute.xlu0 0
  %251 = vperm.xlu0 %250, %v248
  %v252 = vpop.permute.xlu0 %251
  %253 = vset.pattern.permute.xlu0 0
  %254 = vperm.xlu0 %253, %v249
  %v255 = vpop.permute.xlu0 %254
  %vm256 = vcmp.eq.s32.totalorder %v252, 1
  %vm257 = vcmp.eq.s32.totalorder %v255, 1
  %v258 = vsel %vm256, %v241, -1e+30
  %v259 = vsel %vm257, %v241, -1e+30
  %v260 = vsub.f32 0.0, %v90
  %v261 = vlaneseq
  %v262 = vshrl.u32 %v261, 7
  %v263 = vsub.s32 0, %v262
  %v264 = vrot.slane %v260, %v263
  %v265 = vmax.f32 %v264, -1e+30
  %v266 = vsel %vm256, %v265, -1e+30
  %v267 = vsel %vm257, %v265, -1e+30
  %v268 = vlaneseq
  %v269 = vshrl.u32 %v268, 7
  %v270 = vsub.s32 1, %v269
  %v271 = vrot.slane %v90, %v270
  %v272 = vmax.f32 %v258, %v271
  %v273 = vmax.f32 %v259, %v271
  %274 = vrot.lane.b32.xlu0 %v248, 127
  %v275 = vpop.permute.xlu0 %274
  %276 = vrot.lane.b32.xlu0 %v249, 127
  %v277 = vpop.permute.xlu0 %276
  %vm278 = vcmp.ne.s32.totalorder %v275, 0
  %vm279 = vcmp.ne.s32.totalorder %v277, 0
  %v280 = vsel %vm278, 1, 0
  %v281 = vsel %vm279, 1, 0
  %282 = vset.pattern.permute.xlu0 0
  %283 = vperm.xlu0 %282, %v280
  %v284 = vpop.permute.xlu0 %283
  %285 = vset.pattern.permute.xlu0 0
  %286 = vperm.xlu0 %285, %v281
  %v287 = vpop.permute.xlu0 %286
  %vm288 = vcmp.eq.s32.totalorder %v284, 1
  %vm289 = vcmp.eq.s32.totalorder %v287, 1
  %v290 = vsel %vm288, %v272, %v258
  %v291 = vsel %vm289, %v273, %v259
  %v292 = vlaneseq
  %v293 = vshrl.u32 %v292, 7
  %v294 = vsub.s32 1, %v293
  %v295 = vrot.slane %v260, %v294
  %v296 = vmax.f32 %v266, %v295
  %v297 = vmax.f32 %v267, %v295
  %v298 = vsel %vm288, %v296, %v266
  %v299 = vsel %vm289, %v297, %v267
  %v300 = vlaneseq
  %v301 = vshrl.u32 %v300, 7
  %v302 = vsub.s32 2, %v301
  %v303 = vrot.slane %v90, %v302
  %v304 = vmax.f32 %v290, %v303
  %v305 = vmax.f32 %v291, %v303
  %306 = vrot.lane.b32.xlu0 %v248, 126
  %v307 = vpop.permute.xlu0 %306
  %308 = vrot.lane.b32.xlu0 %v249, 126
  %v309 = vpop.permute.xlu0 %308
  %vm310 = vcmp.ne.s32.totalorder %v307, 0
  %vm311 = vcmp.ne.s32.totalorder %v309, 0
  %v312 = vsel %vm310, 1, 0
  %v313 = vsel %vm311, 1, 0
  %314 = vset.pattern.permute.xlu0 0
  %315 = vperm.xlu0 %314, %v312
  %v316 = vpop.permute.xlu0 %315
  %317 = vset.pattern.permute.xlu0 0
  %318 = vperm.xlu0 %317, %v313
  %v319 = vpop.permute.xlu0 %318
  %vm320 = vcmp.eq.s32.totalorder %v316, 1
  %vm321 = vcmp.eq.s32.totalorder %v319, 1
  %v322 = vsel %vm320, %v304, %v290
  %v323 = vsel %vm321, %v305, %v291
  %v324 = vlaneseq
  %v325 = vshrl.u32 %v324, 7
  %v326 = vsub.s32 2, %v325
  %v327 = vrot.slane %v260, %v326
  %v328 = vmax.f32 %v298, %v327
  %v329 = vmax.f32 %v299, %v327
  %v330 = vsel %vm320, %v328, %v298
  %v331 = vsel %vm321, %v329, %v299
  %v332 = vlaneseq
  %v333 = vshrl.u32 %v332, 7
  %v334 = vsub.s32 3, %v333
  %v335 = vrot.slane %v90, %v334
  %v336 = vmax.f32 %v322, %v335
  %v337 = vmax.f32 %v323, %v335
  %338 = vrot.lane.b32.xlu0 %v248, 125
  %v339 = vpop.permute.xlu0 %338
  %340 = vrot.lane.b32.xlu0 %v249, 125
  %v341 = vpop.permute.xlu0 %340
  %vm342 = vcmp.ne.s32.totalorder %v339, 0
  %vm343 = vcmp.ne.s32.totalorder %v341, 0
  %v344 = vsel %vm342, 1, 0
  %v345 = vsel %vm343, 1, 0
  %346 = vset.pattern.permute.xlu0 0
  %347 = vperm.xlu0 %346, %v344
  %v348 = vpop.permute.xlu0 %347
  %349 = vset.pattern.permute.xlu0 0
  %350 = vperm.xlu0 %349, %v345
  %v351 = vpop.permute.xlu0 %350
  %vm352 = vcmp.eq.s32.totalorder %v348, 1
  %vm353 = vcmp.eq.s32.totalorder %v351, 1
  %v354 = vsel %vm352, %v336, %v322
  %v355 = vsel %vm353, %v337, %v323
  %v356 = vlaneseq
  %v357 = vshrl.u32 %v356, 7
  %v358 = vsub.s32 3, %v357
  %v359 = vrot.slane %v260, %v358
  %v360 = vmax.f32 %v330, %v359
  %v361 = vmax.f32 %v331, %v359
  %v362 = vsel %vm352, %v360, %v330
  %v363 = vsel %vm353, %v361, %v331
  %v364 = vlaneseq
  %v365 = vshrl.u32 %v364, 7
  %v366 = vsub.s32 4, %v365
  %v367 = vrot.slane %v90, %v366
  %v368 = vmax.f32 %v354, %v367
  %v369 = vmax.f32 %v355, %v367
  %370 = vrot.lane.b32.xlu0 %v248, 124
  %v371 = vpop.permute.xlu0 %370
  %372 = vrot.lane.b32.xlu0 %v249, 124
  %v373 = vpop.permute.xlu0 %372
  %vm374 = vcmp.ne.s32.totalorder %v371, 0
  %vm375 = vcmp.ne.s32.totalorder %v373, 0
  %v376 = vsel %vm374, 1, 0
  %v377 = vsel %vm375, 1, 0
  %378 = vset.pattern.permute.xlu0 0
  %379 = vperm.xlu0 %378, %v376
  %v380 = vpop.permute.xlu0 %379
  %381 = vset.pattern.permute.xlu0 0
  %382 = vperm.xlu0 %381, %v377
  %v383 = vpop.permute.xlu0 %382
  %vm384 = vcmp.eq.s32.totalorder %v380, 1
  %vm385 = vcmp.eq.s32.totalorder %v383, 1
  %v386 = vsel %vm384, %v368, %v354
  %v387 = vsel %vm385, %v369, %v355
  %v388 = vlaneseq
  %v389 = vshrl.u32 %v388, 7
  %v390 = vsub.s32 4, %v389
  %v391 = vrot.slane %v260, %v390
  %v392 = vmax.f32 %v362, %v391
  %v393 = vmax.f32 %v363, %v391
  %v394 = vsel %vm384, %v392, %v362
  %v395 = vsel %vm385, %v393, %v363
  %v396 = vlaneseq
  %v397 = vshrl.u32 %v396, 7
  %v398 = vsub.s32 5, %v397
  %v399 = vrot.slane %v90, %v398
  %v400 = vmax.f32 %v386, %v399
  %v401 = vmax.f32 %v387, %v399
  %402 = vrot.lane.b32.xlu0 %v248, 123
  %v403 = vpop.permute.xlu0 %402
  %404 = vrot.lane.b32.xlu0 %v249, 123
  %v405 = vpop.permute.xlu0 %404
  %vm406 = vcmp.ne.s32.totalorder %v403, 0
  %vm407 = vcmp.ne.s32.totalorder %v405, 0
  %v408 = vsel %vm406, 1, 0
  %v409 = vsel %vm407, 1, 0
  %410 = vset.pattern.permute.xlu0 0
  %411 = vperm.xlu0 %410, %v408
  %v412 = vpop.permute.xlu0 %411
  %413 = vset.pattern.permute.xlu0 0
  %414 = vperm.xlu0 %413, %v409
  %v415 = vpop.permute.xlu0 %414
  %vm416 = vcmp.eq.s32.totalorder %v412, 1
  %vm417 = vcmp.eq.s32.totalorder %v415, 1
  %v418 = vsel %vm416, %v400, %v386
  %v419 = vsel %vm417, %v401, %v387
  %v420 = vlaneseq
  %v421 = vshrl.u32 %v420, 7
  %v422 = vsub.s32 5, %v421
  %v423 = vrot.slane %v260, %v422
  %v424 = vmax.f32 %v394, %v423
  %v425 = vmax.f32 %v395, %v423
  %v426 = vsel %vm416, %v424, %v394
  %v427 = vsel %vm417, %v425, %v395
  %v428 = vlaneseq
  %v429 = vshrl.u32 %v428, 7
  %v430 = vsub.s32 6, %v429
  %v431 = vrot.slane %v90, %v430
  %v432 = vmax.f32 %v418, %v431
  %v433 = vmax.f32 %v419, %v431
  %434 = vrot.lane.b32.xlu0 %v248, 122
  %v435 = vpop.permute.xlu0 %434
  %436 = vrot.lane.b32.xlu0 %v249, 122
  %v437 = vpop.permute.xlu0 %436
  %vm438 = vcmp.ne.s32.totalorder %v435, 0
  %vm439 = vcmp.ne.s32.totalorder %v437, 0
  %v440 = vsel %vm438, 1, 0
  %v441 = vsel %vm439, 1, 0
  %442 = vset.pattern.permute.xlu0 0
  %443 = vperm.xlu0 %442, %v440
  %v444 = vpop.permute.xlu0 %443
  %445 = vset.pattern.permute.xlu0 0
  %446 = vperm.xlu0 %445, %v441
  %v447 = vpop.permute.xlu0 %446
  %vm448 = vcmp.eq.s32.totalorder %v444, 1
  %vm449 = vcmp.eq.s32.totalorder %v447, 1
  %v450 = vsel %vm448, %v432, %v418
  %v451 = vsel %vm449, %v433, %v419
  %v452 = vlaneseq
  %v453 = vshrl.u32 %v452, 7
  %v454 = vsub.s32 6, %v453
  %v455 = vrot.slane %v260, %v454
  %v456 = vmax.f32 %v426, %v455
  %v457 = vmax.f32 %v427, %v455
  %v458 = vsel %vm448, %v456, %v426
  %v459 = vsel %vm449, %v457, %v427
  %v460 = vlaneseq
  %v461 = vshrl.u32 %v460, 7
  %v462 = vsub.s32 7, %v461
  %v463 = vrot.slane %v90, %v462
  %v464 = vmax.f32 %v450, %v463
  %v465 = vmax.f32 %v451, %v463
  %466 = vrot.lane.b32.xlu0 %v248, 121
  %v467 = vpop.permute.xlu0 %466
  %468 = vrot.lane.b32.xlu0 %v249, 121
  %v469 = vpop.permute.xlu0 %468
  %vm470 = vcmp.ne.s32.totalorder %v467, 0
  %vm471 = vcmp.ne.s32.totalorder %v469, 0
  %v472 = vsel %vm470, 1, 0
  %v473 = vsel %vm471, 1, 0
  %474 = vset.pattern.permute.xlu0 0
  %475 = vperm.xlu0 %474, %v472
  %v476 = vpop.permute.xlu0 %475
  %477 = vset.pattern.permute.xlu0 0
  %478 = vperm.xlu0 %477, %v473
  %v479 = vpop.permute.xlu0 %478
  %vm480 = vcmp.eq.s32.totalorder %v476, 1
  %vm481 = vcmp.eq.s32.totalorder %v479, 1
  %v482 = vsel %vm480, %v464, %v450
  %v483 = vsel %vm481, %v465, %v451
  %v484 = vlaneseq
  %v485 = vshrl.u32 %v484, 7
  %v486 = vsub.s32 7, %v485
  %v487 = vrot.slane %v260, %v486
  %v488 = vmax.f32 %v458, %v487
  %v489 = vmax.f32 %v459, %v487
  %v490 = vsel %vm480, %v488, %v458
  %v491 = vsel %vm481, %v489, %v459
  %v492 = vlaneseq
  %v493 = vshrl.u32 %v492, 7
  %v494 = vsub.s32 0, %v493
  %v495 = vrot.slane %v91, %v494
  %v496 = vmax.f32 %v482, %v495
  %v497 = vmax.f32 %v483, %v495
  %498 = vrot.lane.b32.xlu0 %v248, 120
  %v499 = vpop.permute.xlu0 %498
  %500 = vrot.lane.b32.xlu0 %v249, 120
  %v501 = vpop.permute.xlu0 %500
  %vm502 = vcmp.ne.s32.totalorder %v499, 0
  %vm503 = vcmp.ne.s32.totalorder %v501, 0
  %v504 = vsel %vm502, 1, 0
  %v505 = vsel %vm503, 1, 0
  %506 = vset.pattern.permute.xlu0 0
  %507 = vperm.xlu0 %506, %v504
  %v508 = vpop.permute.xlu0 %507
  %509 = vset.pattern.permute.xlu0 0
  %510 = vperm.xlu0 %509, %v505
  %v511 = vpop.permute.xlu0 %510
  %vm512 = vcmp.eq.s32.totalorder %v508, 1
  %vm513 = vcmp.eq.s32.totalorder %v511, 1
  %v514 = vsel %vm512, %v496, %v482
  %v515 = vsel %vm513, %v497, %v483
  %v516 = vsub.f32 0.0, %v91
  %v517 = vlaneseq
  %v518 = vshrl.u32 %v517, 7
  %v519 = vsub.s32 0, %v518
  %v520 = vrot.slane %v516, %v519
  %v521 = vmax.f32 %v490, %v520
  %v522 = vmax.f32 %v491, %v520
  %v523 = vsel %vm512, %v521, %v490
  %v524 = vsel %vm513, %v522, %v491
  %v525 = vlaneseq
  %v526 = vshrl.u32 %v525, 7
  %v527 = vsub.s32 1, %v526
  %v528 = vrot.slane %v91, %v527
  %v529 = vmax.f32 %v514, %v528
  %v530 = vmax.f32 %v515, %v528
  %531 = vrot.lane.b32.xlu0 %v248, 119
  %v532 = vpop.permute.xlu0 %531
  %533 = vrot.lane.b32.xlu0 %v249, 119
  %v534 = vpop.permute.xlu0 %533
  %vm535 = vcmp.ne.s32.totalorder %v532, 0
  %vm536 = vcmp.ne.s32.totalorder %v534, 0
  %v537 = vsel %vm535, 1, 0
  %v538 = vsel %vm536, 1, 0
  %539 = vset.pattern.permute.xlu0 0
  %540 = vperm.xlu0 %539, %v537
  %v541 = vpop.permute.xlu0 %540
  %542 = vset.pattern.permute.xlu0 0
  %543 = vperm.xlu0 %542, %v538
  %v544 = vpop.permute.xlu0 %543
  %vm545 = vcmp.eq.s32.totalorder %v541, 1
  %vm546 = vcmp.eq.s32.totalorder %v544, 1
  %v547 = vsel %vm545, %v529, %v514
  %v548 = vsel %vm546, %v530, %v515
  %v549 = vlaneseq
  %v550 = vshrl.u32 %v549, 7
  %v551 = vsub.s32 1, %v550
  %v552 = vrot.slane %v516, %v551
  %v553 = vmax.f32 %v523, %v552
  %v554 = vmax.f32 %v524, %v552
  %v555 = vsel %vm545, %v553, %v523
  %v556 = vsel %vm546, %v554, %v524
  %v557 = vlaneseq
  %v558 = vshrl.u32 %v557, 7
  %v559 = vsub.s32 2, %v558
  %v560 = vrot.slane %v91, %v559
  %v561 = vmax.f32 %v547, %v560
  %v562 = vmax.f32 %v548, %v560
  %563 = vrot.lane.b32.xlu0 %v248, 118
  %v564 = vpop.permute.xlu0 %563
  %565 = vrot.lane.b32.xlu0 %v249, 118
  %v566 = vpop.permute.xlu0 %565
  %vm567 = vcmp.ne.s32.totalorder %v564, 0
  %vm568 = vcmp.ne.s32.totalorder %v566, 0
  %v569 = vsel %vm567, 1, 0
  %v570 = vsel %vm568, 1, 0
  %571 = vset.pattern.permute.xlu0 0
  %572 = vperm.xlu0 %571, %v569
  %v573 = vpop.permute.xlu0 %572
  %574 = vset.pattern.permute.xlu0 0
  %575 = vperm.xlu0 %574, %v570
  %v576 = vpop.permute.xlu0 %575
  %vm577 = vcmp.eq.s32.totalorder %v573, 1
  %vm578 = vcmp.eq.s32.totalorder %v576, 1
  %v579 = vsel %vm577, %v561, %v547
  %v580 = vsel %vm578, %v562, %v548
  %v581 = vlaneseq
  %v582 = vshrl.u32 %v581, 7
  %v583 = vsub.s32 2, %v582
  %v584 = vrot.slane %v516, %v583
  %v585 = vmax.f32 %v555, %v584
  %v586 = vmax.f32 %v556, %v584
  %v587 = vsel %vm577, %v585, %v555
  %v588 = vsel %vm578, %v586, %v556
  %v589 = vlaneseq
  %v590 = vshrl.u32 %v589, 7
  %v591 = vsub.s32 3, %v590
  %v592 = vrot.slane %v91, %v591
  %v593 = vmax.f32 %v579, %v592
  %v594 = vmax.f32 %v580, %v592
  %595 = vrot.lane.b32.xlu0 %v248, 117
  %v596 = vpop.permute.xlu0 %595
  %597 = vrot.lane.b32.xlu0 %v249, 117
  %v598 = vpop.permute.xlu0 %597
  %vm599 = vcmp.ne.s32.totalorder %v596, 0
  %vm600 = vcmp.ne.s32.totalorder %v598, 0
  %v601 = vsel %vm599, 1, 0
  %v602 = vsel %vm600, 1, 0
  %603 = vset.pattern.permute.xlu0 0
  %604 = vperm.xlu0 %603, %v601
  %v605 = vpop.permute.xlu0 %604
  %606 = vset.pattern.permute.xlu0 0
  %607 = vperm.xlu0 %606, %v602
  %v608 = vpop.permute.xlu0 %607
  %vm609 = vcmp.eq.s32.totalorder %v605, 1
  %vm610 = vcmp.eq.s32.totalorder %v608, 1
  %v611 = vsel %vm609, %v593, %v579
  %v612 = vsel %vm610, %v594, %v580
  %v613 = vlaneseq
  %v614 = vshrl.u32 %v613, 7
  %v615 = vsub.s32 3, %v614
  %v616 = vrot.slane %v516, %v615
  %v617 = vmax.f32 %v587, %v616
  %v618 = vmax.f32 %v588, %v616
  %v619 = vsel %vm609, %v617, %v587
  %v620 = vsel %vm610, %v618, %v588
  %v621 = vlaneseq
  %v622 = vshrl.u32 %v621, 7
  %v623 = vsub.s32 4, %v622
  %v624 = vrot.slane %v91, %v623
  %v625 = vmax.f32 %v611, %v624
  %v626 = vmax.f32 %v612, %v624
  %627 = vrot.lane.b32.xlu0 %v248, 116
  %v628 = vpop.permute.xlu0 %627
  %629 = vrot.lane.b32.xlu0 %v249, 116
  %v630 = vpop.permute.xlu0 %629
  %vm631 = vcmp.ne.s32.totalorder %v628, 0
  %vm632 = vcmp.ne.s32.totalorder %v630, 0
  %v633 = vsel %vm631, 1, 0
  %v634 = vsel %vm632, 1, 0
  %635 = vset.pattern.permute.xlu0 0
  %636 = vperm.xlu0 %635, %v633
  %v637 = vpop.permute.xlu0 %636
  %638 = vset.pattern.permute.xlu0 0
  %639 = vperm.xlu0 %638, %v634
  %v640 = vpop.permute.xlu0 %639
  %vm641 = vcmp.eq.s32.totalorder %v637, 1
  %vm642 = vcmp.eq.s32.totalorder %v640, 1
  %v643 = vsel %vm641, %v625, %v611
  %v644 = vsel %vm642, %v626, %v612
  %v645 = vlaneseq
  %v646 = vshrl.u32 %v645, 7
  %v647 = vsub.s32 4, %v646
  %v648 = vrot.slane %v516, %v647
  %v649 = vmax.f32 %v619, %v648
  %v650 = vmax.f32 %v620, %v648
  %v651 = vsel %vm641, %v649, %v619
  %v652 = vsel %vm642, %v650, %v620
  %v653 = vlaneseq
  %v654 = vshrl.u32 %v653, 7
  %v655 = vsub.s32 5, %v654
  %v656 = vrot.slane %v91, %v655
  %v657 = vmax.f32 %v643, %v656
  %v658 = vmax.f32 %v644, %v656
  %659 = vrot.lane.b32.xlu0 %v248, 115
  %v660 = vpop.permute.xlu0 %659
  %661 = vrot.lane.b32.xlu0 %v249, 115
  %v662 = vpop.permute.xlu0 %661
  %vm663 = vcmp.ne.s32.totalorder %v660, 0
  %vm664 = vcmp.ne.s32.totalorder %v662, 0
  %v665 = vsel %vm663, 1, 0
  %v666 = vsel %vm664, 1, 0
  %667 = vset.pattern.permute.xlu0 0
  %668 = vperm.xlu0 %667, %v665
  %v669 = vpop.permute.xlu0 %668
  %670 = vset.pattern.permute.xlu0 0
  %671 = vperm.xlu0 %670, %v666
  %v672 = vpop.permute.xlu0 %671
  %vm673 = vcmp.eq.s32.totalorder %v669, 1
  %vm674 = vcmp.eq.s32.totalorder %v672, 1
  %v675 = vsel %vm673, %v657, %v643
  %v676 = vsel %vm674, %v658, %v644
  %v677 = vlaneseq
  %v678 = vshrl.u32 %v677, 7
  %v679 = vsub.s32 5, %v678
  %v680 = vrot.slane %v516, %v679
  %v681 = vmax.f32 %v651, %v680
  %v682 = vmax.f32 %v652, %v680
  %v683 = vsel %vm673, %v681, %v651
  %v684 = vsel %vm674, %v682, %v652
  %v685 = vlaneseq
  %v686 = vshrl.u32 %v685, 7
  %v687 = vsub.s32 6, %v686
  %v688 = vrot.slane %v91, %v687
  %v689 = vmax.f32 %v675, %v688
  %v690 = vmax.f32 %v676, %v688
  %691 = vrot.lane.b32.xlu0 %v248, 114
  %v692 = vpop.permute.xlu0 %691
  %693 = vrot.lane.b32.xlu0 %v249, 114
  %v694 = vpop.permute.xlu0 %693
  %vm695 = vcmp.ne.s32.totalorder %v692, 0
  %vm696 = vcmp.ne.s32.totalorder %v694, 0
  %v697 = vsel %vm695, 1, 0
  %v698 = vsel %vm696, 1, 0
  %699 = vset.pattern.permute.xlu0 0
  %700 = vperm.xlu0 %699, %v697
  %v701 = vpop.permute.xlu0 %700
  %702 = vset.pattern.permute.xlu0 0
  %703 = vperm.xlu0 %702, %v698
  %v704 = vpop.permute.xlu0 %703
  %vm705 = vcmp.eq.s32.totalorder %v701, 1
  %vm706 = vcmp.eq.s32.totalorder %v704, 1
  %v707 = vsel %vm705, %v689, %v675
  %v708 = vsel %vm706, %v690, %v676
  %v709 = vlaneseq
  %v710 = vshrl.u32 %v709, 7
  %v711 = vsub.s32 6, %v710
  %v712 = vrot.slane %v516, %v711
  %v713 = vmax.f32 %v683, %v712
  %v714 = vmax.f32 %v684, %v712
  %v715 = vsel %vm705, %v713, %v683
  %v716 = vsel %vm706, %v714, %v684
  %v717 = vlaneseq
  %v718 = vshrl.u32 %v717, 7
  %v719 = vsub.s32 7, %v718
  %v720 = vrot.slane %v91, %v719
  %v721 = vmax.f32 %v707, %v720
  %v722 = vmax.f32 %v708, %v720
  %723 = vrot.lane.b32.xlu0 %v248, 113
  %v724 = vpop.permute.xlu0 %723
  %725 = vrot.lane.b32.xlu0 %v249, 113
  %v726 = vpop.permute.xlu0 %725
  %vm727 = vcmp.ne.s32.totalorder %v724, 0
  %vm728 = vcmp.ne.s32.totalorder %v726, 0
  %v729 = vsel %vm727, 1, 0
  %v730 = vsel %vm728, 1, 0
  %731 = vset.pattern.permute.xlu0 0
  %732 = vperm.xlu0 %731, %v729
  %v733 = vpop.permute.xlu0 %732
  %734 = vset.pattern.permute.xlu0 0
  %735 = vperm.xlu0 %734, %v730
  %v736 = vpop.permute.xlu0 %735
  %vm737 = vcmp.eq.s32.totalorder %v733, 1
  %vm738 = vcmp.eq.s32.totalorder %v736, 1
  %v739 = vsel %vm737, %v721, %v707
  %v740 = vsel %vm738, %v722, %v708
  %v741 = vlaneseq
  %v742 = vshrl.u32 %v741, 7
  %v743 = vsub.s32 7, %v742
  %v744 = vrot.slane %v516, %v743
  %v745 = vmax.f32 %v715, %v744
  %v746 = vmax.f32 %v716, %v744
  %v747 = vsel %vm737, %v745, %v715
  %v748 = vsel %vm738, %v746, %v716
  %v749 = vsub.f32 0.0, %v747
  %v750 = vsub.f32 0.0, %v748
  %v751 = vmul.f32 %v749, %v226
  %v752 = vmul.f32 %v750, %v231
  %v753 = vmul.f32 %v739, %v226
  %v754 = vmul.f32 %v740, %v231
  %757 = vrot.lane.b32.xlu0 %v751, 32
  %v758 = vpop.permute.xlu0 %757
  %759 = vrot.lane.b32.xlu0 %v752, 32
  %v760 = vpop.permute.xlu0 %759
  %765 = vrot.lane.b32.xlu0 %v753, 64
  %v766 = vpop.permute.xlu0 %765
  %767 = vrot.lane.b32.xlu0 %v754, 64
  %v768 = vpop.permute.xlu0 %767
  %773 = vrot.lane.b32.xlu0 %v233, 96
  %v774 = vpop.permute.xlu0 %773
  %775 = vrot.lane.b32.xlu0 %v234, 96
  %v776 = vpop.permute.xlu0 %775
  %vm779 = vcmask 261120
  %v780 = vsel %vm779, %v197, %v758
  %v781 = vsel %vm779, %v198, %v760
  %vm782 = vcmask 523264
  %v783 = vsel %vm782, %v780, %v766
  %v784 = vsel %vm782, %v781, %v768
  %vm785 = vcmask 785408
  %v786 = vsel %vm785, %v783, %v774
  %v787 = vsel %vm785, %v784, %v776
  %789 = vset.pattern.permute.xlu0 0
  %790 = vperm.xlu0 %789, %v86
  %v791 = vpop.permute.xlu0 %790
  %794 = vset.pattern.permute.xlu0 0
  %795 = vperm.xlu0 %794, %v87
  %v796 = vpop.permute.xlu0 %795
  %v798 = vmul.f32 %v791, %v786
  %v799 = vmul.f32 %v796, %v787
  %801 = vset.pattern.permute.xlu0 0
  %802 = vperm.xlu0 %801, %v88
  %v803 = vpop.permute.xlu0 %802
  %806 = vset.pattern.permute.xlu0 0
  %807 = vperm.xlu0 %806, %v89
  %v808 = vpop.permute.xlu0 %807
  %v810 = vmul.f32 %v803, %v786
  %v811 = vmul.f32 %v808, %v787
  %v812 = vpack.c.bf16 %v787, %v786
  %v813 = vpack.c.bf16 %v799, %v798
  %v814 = vpack.c.bf16 %v811, %v810
  %v815 = vld [vmem:[%s6] sm:$0xf]
  %v816 = vld [vmem:[%s6 + $0x4] sm:$0xf]
  %v817 = vld [vmem:[%s6 + $0x8] sm:$0xf]
  %v818 = vld [vmem:[%s6 + $0xc] sm:$0xf]
  %v819 = vld [vmem:[%s6 + $0x10] sm:$0xf]
  %v820 = vld [vmem:[%s6 + $0x14] sm:$0xf]
  %v821 = vld [vmem:[%s6 + $0x18] sm:$0xf]
  %v822 = vld [vmem:[%s6 + $0x1c] sm:$0xf]
  %v823 = vld [vmem:[%s6 + $0x20] sm:$0xf]
  %v824 = vld [vmem:[%s6 + $0x24] sm:$0xf]
  %v825 = vld [vmem:[%s6 + $0x28] sm:$0xf]
  %v826 = vld [vmem:[%s6 + $0x2c] sm:$0xf]
  %v827 = vld [vmem:[%s6 + $0x30] sm:$0xf]
  %v828 = vld [vmem:[%s6 + $0x34] sm:$0xf]
  %v829 = vld [vmem:[%s6 + $0x38] sm:$0xf]
  %v830 = vld [vmem:[%s6 + $0x3c] sm:$0xf]
  %v831 = vld [vmem:[%s6 + $0x40] sm:$0xf]
  %v832 = vld [vmem:[%s6 + $0x44] sm:$0xf]
  %v833 = vld [vmem:[%s6 + $0x48] sm:$0xf]
  %v834 = vld [vmem:[%s6 + $0x4c] sm:$0xf]
  %v835 = vld [vmem:[%s6 + $0x50] sm:$0xf]
  %v836 = vld [vmem:[%s6 + $0x54] sm:$0xf]
  %v837 = vld [vmem:[%s6 + $0x58] sm:$0xf]
  %v838 = vld [vmem:[%s6 + $0x5c] sm:$0xf]
  %v839 = vld [vmem:[%s6 + $0x60] sm:$0xf]
  %v840 = vld [vmem:[%s6 + $0x64] sm:$0xf]
  %v841 = vld [vmem:[%s6 + $0x68] sm:$0xf]
  %v842 = vld [vmem:[%s6 + $0x6c] sm:$0xf]
  %v843 = vld [vmem:[%s6 + $0x70] sm:$0xf]
  %v844 = vld [vmem:[%s6 + $0x74] sm:$0xf]
  %v845 = vld [vmem:[%s6 + $0x78] sm:$0xf]
  %v846 = vld [vmem:[%s6 + $0x7c] sm:$0xf]
  %v847 = vld [vmem:[%s6 + $0x80] sm:$0xf]
  %v848 = vld [vmem:[%s6 + $0x84] sm:$0xf]
  %v849 = vld [vmem:[%s6 + $0x88] sm:$0xf]
  %v850 = vld [vmem:[%s6 + $0x8c] sm:$0xf]
  %v851 = vld [vmem:[%s6 + $0x90] sm:$0xf]
  %v852 = vld [vmem:[%s6 + $0x94] sm:$0xf]
  %v853 = vld [vmem:[%s6 + $0x98] sm:$0xf]
  %v854 = vld [vmem:[%s6 + $0x9c] sm:$0xf]
  %v855 = vld [vmem:[%s6 + $0xa0] sm:$0xf]
  %v856 = vld [vmem:[%s6 + $0xa4] sm:$0xf]
  %v857 = vld [vmem:[%s6 + $0xa8] sm:$0xf]
  %v858 = vld [vmem:[%s6 + $0xac] sm:$0xf]
  %v859 = vld [vmem:[%s6 + $0xb0] sm:$0xf]
  %v860 = vld [vmem:[%s6 + $0xb4] sm:$0xf]
  %v861 = vld [vmem:[%s6 + $0xb8] sm:$0xf]
  %v862 = vld [vmem:[%s6 + $0xbc] sm:$0xf]
  %v863 = vld [vmem:[%s7] sm:$0x1]
  %v865 = vlaneseq
  %v866 = vshrl.u32 %v865, 7
  %v867 = vsub.s32 0, %v866
  %v868 = vrot.slane %v863, %v867
  %v918 = vunpack.c.l.b16 %v815
  %v919 = vunpack.c.l.b16 %v816
  %v920 = vunpack.c.l.b16 %v817
  %v921 = vunpack.c.l.b16 %v818
  %v922 = vunpack.c.l.b16 %v819
  %v923 = vunpack.c.l.b16 %v820
  %v924 = vunpack.c.l.b16 %v821
  %v925 = vunpack.c.l.b16 %v822
  %v926 = vunpack.c.l.b16 %v823
  %v927 = vunpack.c.l.b16 %v824
  %v928 = vunpack.c.l.b16 %v825
  %v929 = vunpack.c.l.b16 %v826
  %v930 = vunpack.c.l.b16 %v827
  %v931 = vunpack.c.l.b16 %v828
  %v932 = vunpack.c.l.b16 %v829
  %v933 = vunpack.c.l.b16 %v830
  %v934 = vunpack.c.l.b16 %v831
  %v935 = vunpack.c.l.b16 %v832
  %v936 = vunpack.c.l.b16 %v833
  %v937 = vunpack.c.l.b16 %v834
  %v938 = vunpack.c.l.b16 %v835
  %v939 = vunpack.c.l.b16 %v836
  %v940 = vunpack.c.l.b16 %v837
  %v941 = vunpack.c.l.b16 %v838
  %v942 = vunpack.c.l.b16 %v839
  %v943 = vunpack.c.l.b16 %v840
  %v944 = vunpack.c.l.b16 %v841
  %v945 = vunpack.c.l.b16 %v842
  %v946 = vunpack.c.l.b16 %v843
  %v947 = vunpack.c.l.b16 %v844
  %v948 = vunpack.c.l.b16 %v845
  %v949 = vunpack.c.l.b16 %v846
  %v950 = vunpack.c.l.b16 %v847
  %v951 = vunpack.c.l.b16 %v848
  %v952 = vunpack.c.l.b16 %v849
  %v953 = vunpack.c.l.b16 %v850
  %v954 = vunpack.c.l.b16 %v851
  %v955 = vunpack.c.l.b16 %v852
  %v956 = vunpack.c.l.b16 %v853
  %v957 = vunpack.c.l.b16 %v854
  %v958 = vunpack.c.l.b16 %v855
  %v959 = vunpack.c.l.b16 %v856
  %v960 = vunpack.c.l.b16 %v857
  %v961 = vunpack.c.l.b16 %v858
  %v962 = vunpack.c.l.b16 %v859
  %v963 = vunpack.c.l.b16 %v860
  %v964 = vunpack.c.l.b16 %v861
  %v965 = vunpack.c.l.b16 %v862
  %v966 = vpack.c.b16 %v919, %v918
  %v967 = vpack.c.b16 %v921, %v920
  %v968 = vpack.c.b16 %v923, %v922
  %v969 = vpack.c.b16 %v925, %v924
  %v970 = vpack.c.b16 %v927, %v926
  %v971 = vpack.c.b16 %v929, %v928
  %v972 = vpack.c.b16 %v931, %v930
  %v973 = vpack.c.b16 %v933, %v932
  %v974 = vpack.c.b16 %v935, %v934
  %v975 = vpack.c.b16 %v937, %v936
  %v976 = vpack.c.b16 %v939, %v938
  %v977 = vpack.c.b16 %v941, %v940
  %v978 = vpack.c.b16 %v943, %v942
  %v979 = vpack.c.b16 %v945, %v944
  %v980 = vpack.c.b16 %v947, %v946
  %v981 = vpack.c.b16 %v949, %v948
  %v982 = vpack.c.b16 %v951, %v950
  %v983 = vpack.c.b16 %v953, %v952
  %v984 = vpack.c.b16 %v955, %v954
  %v985 = vpack.c.b16 %v957, %v956
  %v986 = vpack.c.b16 %v959, %v958
  %v987 = vpack.c.b16 %v961, %v960
  %v988 = vpack.c.b16 %v963, %v962
  %v989 = vpack.c.b16 %v965, %v964
  %1014 = vmatprep.subr.bf16.mxu0 0
  %1015 = vmatpush1.bf16.msra.mxu0 %v966
  %1016 = vmatprep.subr.bf16.mxu0 0
  %1017 = vmatpush1.bf16.msra.mxu0 %v967
  %1018 = vmatprep.subr.bf16.mxu0 0
  %1019 = vmatpush1.bf16.msra.mxu0 %v968
  %1020 = vmatprep.subr.bf16.mxu0 0
  %1021 = vmatpush1.bf16.msra.mxu0 %v969
  %1022 = vmatprep.subr.bf16.mxu0 0
  %1023 = vmatpush1.bf16.msra.mxu0 %v970
  %1024 = vmatprep.subr.bf16.mxu0 0
  %1025 = vmatpush1.bf16.msra.mxu0 %v971
  %1026 = vmatprep.subr.bf16.mxu0 0
  %1027 = vmatpush1.bf16.msra.mxu0 %v972
  %1028 = vmatprep.subr.bf16.mxu0 0
  %1029 = vmatpush1.bf16.msra.mxu0 %v973
  %1030 = vmatprep.subr.bf16.mxu0 0
  %1031 = vmatpush1.bf16.msra.mxu0 %v974
  %1032 = vmatprep.subr.bf16.mxu0 0
  %1033 = vmatpush1.bf16.msra.mxu0 %v975
  %1034 = vmatprep.subr.bf16.mxu0 0
  %1035 = vmatpush1.bf16.msra.mxu0 %v976
  %1036 = vmatprep.subr.bf16.mxu0 0
  %1037 = vmatpush1.bf16.msra.mxu0 %v977
  %1038 = vmatprep.subr.bf16.mxu0 0
  %1039 = vmatpush1.bf16.msra.mxu0 %v978
  %1040 = vmatprep.subr.bf16.mxu0 0
  %1041 = vmatpush1.bf16.msra.mxu0 %v979
  %1042 = vmatprep.subr.bf16.mxu0 0
  %1043 = vmatpush1.bf16.msra.mxu0 %v980
  %1044 = vmatprep.subr.bf16.mxu0 0
  %1045 = vmatpush1.bf16.msra.mxu0 %v981
  %1046 = vmatprep.mubr.bf16.mxu0 %v813
  %1047 = vmatmul.mubr.bf16.gmra.mrb[0].mxu0 %v812
  %v1048 = vpop.f32.mrb[0].mxu0
  %v1049 = vadd.f32 %v868, %v1048
  %v1050 = vpop.f32.mrb[0].mxu0
  %v1051 = vpop.f32.mrb[0].mxu0
  %v1052 = vadd.f32 %v868, %v1051
  %v1053 = vpop.f32.mrb[0].mxu0
  %1054 = vdwg.mxu0
  %1055 = vmatprep.subr.bf16.mxu0 0
  %1056 = vmatpush1.bf16.msra.mxu0 %v982
  %1057 = vmatprep.subr.bf16.mxu0 0
  %1058 = vmatpush1.bf16.msra.mxu0 %v983
  %1059 = vmatprep.subr.bf16.mxu0 0
  %1060 = vmatpush1.bf16.msra.mxu0 %v984
  %1061 = vmatprep.subr.bf16.mxu0 0
  %1062 = vmatpush1.bf16.msra.mxu0 %v985
  %1063 = vmatprep.subr.bf16.mxu0 0
  %1064 = vmatpush1.bf16.msra.mxu0 %v986
  %1065 = vmatprep.subr.bf16.mxu0 0
  %1066 = vmatpush1.bf16.msra.mxu0 %v987
  %1067 = vmatprep.subr.bf16.mxu0 0
  %1068 = vmatpush1.bf16.msra.mxu0 %v988
  %1069 = vmatprep.subr.bf16.mxu0 0
  %1070 = vmatpush1.bf16.msra.mxu0 %v989
  %1071 = vmatprep.subr.bf16.mxu0 0
  %1072 = vmatpush1.bf16.msra.mxu0 0
  %1073 = vmatprep.subr.bf16.mxu0 0
  %1074 = vmatpush1.bf16.msra.mxu0 0
  %1075 = vmatprep.subr.bf16.mxu0 0
  %1076 = vmatpush1.bf16.msra.mxu0 0
  %1077 = vmatprep.subr.bf16.mxu0 0
  %1078 = vmatpush1.bf16.msra.mxu0 0
  %1079 = vmatprep.subr.bf16.mxu0 0
  %1080 = vmatpush1.bf16.msra.mxu0 0
  %1081 = vmatprep.subr.bf16.mxu0 0
  %1082 = vmatpush1.bf16.msra.mxu0 0
  %1083 = vmatprep.subr.bf16.mxu0 0
  %1084 = vmatpush1.bf16.msra.mxu0 0
  %1085 = vmatprep.subr.bf16.mxu0 0
  %1086 = vmatpush1.bf16.msra.mxu0 0
  %1087 = vmatprep.mubr.bf16.mxu0 0
  %1088 = vmatmul.mubr.bf16.gmra.mrb[0].mxu0 %v814
  %v1089 = vpop.f32.mrb[0].mxu0
  %v1090 = vadd.f32 %v1049, %v1089
  %v1091 = vpop.f32.mrb[0].mxu0
  %v1092 = vpop.f32.mrb[0].mxu0
  %v1093 = vadd.f32 %v1052, %v1092
  %v1094 = vpop.f32.mrb[0].mxu0
  %1095 = vdwg.mxu0
  %v1096 = vmax.f32 %v1090, 0.0
  %v1097 = vmax.f32 %v1093, 0.0
  %v1098 = vsel %vm779, %v1096, 0.0
  %v1099 = vsel %vm779, %v1097, 0.0
  %v1100 = vadd.f32 %v1098, %v1099
  %v1101 = vrot.slane %v1100, 4
  %v1102 = vadd.f32 %v1100, %v1101
  %v1103 = vrot.slane %v1102, 2
  %v1104 = vadd.f32 %v1102, %v1103
  %v1105 = vrot.slane %v1104, 1
  %v1106 = vadd.f32 %v1104, %v1105
  %v1107 = vrcp.pop 16.0
  %v1108 = vmul.f32 %v1106, %v1107
  %v1109 = vmul.f32 %v1096, %v1096
  %v1110 = vmul.f32 %v1097, %v1097
  %v1111 = vsel %vm779, %v1109, 0.0
  %v1112 = vsel %vm779, %v1110, 0.0
  %v1113 = vadd.f32 %v1111, %v1112
  %v1114 = vrot.slane %v1113, 4
  %v1115 = vadd.f32 %v1113, %v1114
  %v1116 = vrot.slane %v1115, 2
  %v1117 = vadd.f32 %v1115, %v1116
  %v1118 = vrot.slane %v1117, 1
  %v1119 = vadd.f32 %v1117, %v1118
  %v1120 = vmul.f32 %v1119, %v1107
  %v1121 = vmul.f32 %v1108, %v1108
  %v1122 = vsub.f32 %v1120, %v1121
  %v1123 = vmax.f32 %v1122, 0.0
  %v1124 = vsub.f32 %v1096, %v1108
  %v1125 = vsub.f32 %v1097, %v1108
  %v1126 = vadd.f32 %v1123, 1e-05
  %v1127 = vrsqrt.pop %v1126
  %v1128 = vmul.f32 %v1124, %v1127
  %v1129 = vmul.f32 %v1125, %v1127
  %v1130 = vld [vmem:[%s8] sm:$0x1]
  %v1132 = vlaneseq
  %v1133 = vshrl.u32 %v1132, 7
  %v1134 = vsub.s32 0, %v1133
  %v1135 = vrot.slane %v1130, %v1134
  %v1137 = vmul.f32 %v1128, %v1135
  %v1138 = vmul.f32 %v1129, %v1135
  %v1139 = vld [vmem:[%s9] sm:$0x1]
  %v1141 = vlaneseq
  %v1142 = vshrl.u32 %v1141, 7
  %v1143 = vsub.s32 0, %v1142
  %v1144 = vrot.slane %v1139, %v1143
  %v1146 = vadd.f32 %v1137, %v1144
  %v1147 = vadd.f32 %v1138, %v1144
  %v1148 = vpack.c.bf16 %v1147, %v1146
  %1149 = vmatprep.subr.bf16.mxu0 0
  %1150 = vmatpush1.bf16.msra.mxu0 %v1148
  %1151 = vmatprep.subr.bf16.mxu0 0
  %1152 = vmatpush1.bf16.msra.mxu0 0
  %1153 = vmatprep.subr.bf16.mxu0 0
  %1154 = vmatpush1.bf16.msra.mxu0 0
  %1155 = vmatprep.subr.bf16.mxu0 0
  %1156 = vmatpush1.bf16.msra.mxu0 0
  %1157 = vmatprep.subr.bf16.mxu0 0
  %1158 = vmatpush1.bf16.msra.mxu0 0
  %1159 = vmatprep.subr.bf16.mxu0 0
  %1160 = vmatpush1.bf16.msra.mxu0 0
  %1161 = vmatprep.subr.bf16.mxu0 0
  %1162 = vmatpush1.bf16.msra.mxu0 0
  %1163 = vmatprep.subr.bf16.mxu0 0
  %1164 = vmatpush1.bf16.msra.mxu0 0
  %1165 = vmatprep.subr.bf16.mxu0 0
  %1166 = vmatpush1.bf16.msra.mxu0 0
  %1167 = vmatprep.subr.bf16.mxu0 0
  %1168 = vmatpush1.bf16.msra.mxu0 0
  %1169 = vmatprep.subr.bf16.mxu0 0
  %1170 = vmatpush1.bf16.msra.mxu0 0
  %1171 = vmatprep.subr.bf16.mxu0 0
  %1172 = vmatpush1.bf16.msra.mxu0 0
  %1173 = vmatprep.subr.bf16.mxu0 0
  %1174 = vmatpush1.bf16.msra.mxu0 0
  %1175 = vmatprep.subr.bf16.mxu0 0
  %1176 = vmatpush1.bf16.msra.mxu0 0
  %1177 = vmatprep.subr.bf16.mxu0 0
  %1178 = vmatpush1.bf16.msra.mxu0 0
  %1179 = vmatprep.subr.bf16.mxu0 0
  %1180 = vmatpush1.bf16.msra.mxu0 0
  %1181 = vmatprep.mubr.bf16.mxu0 0
  %1182 = vmatmul.mubr.bf16.gmra.mrb[0].mxu0 %v100
  %v1183 = vpop.f32.mrb[0].mxu0
  %v1184 = vadd.f32 0.0, %v1183
  %v1185 = vpop.f32.mrb[0].mxu0
  %v1186 = vpop.f32.mrb[0].mxu0
  %v1187 = vadd.f32 0.0, %v1186
  %v1188 = vpop.f32.mrb[0].mxu0
  %1189 = vdwg.mxu0
  %v1190 = vmul.f32 %v1146, %v1146
  %v1191 = vmul.f32 %v1147, %v1147
  %v1192 = vpack.c.bf16 %v1191, %v1190
  %1193 = vmatprep.subr.bf16.mxu0 0
  %1194 = vmatpush1.bf16.msra.mxu0 %v1192
  %1195 = vmatprep.subr.bf16.mxu0 0
  %1196 = vmatpush1.bf16.msra.mxu0 0
  %1197 = vmatprep.subr.bf16.mxu0 0
  %1198 = vmatpush1.bf16.msra.mxu0 0
  %1199 = vmatprep.subr.bf16.mxu0 0
  %1200 = vmatpush1.bf16.msra.mxu0 0
  %1201 = vmatprep.subr.bf16.mxu0 0
  %1202 = vmatpush1.bf16.msra.mxu0 0
  %1203 = vmatprep.subr.bf16.mxu0 0
  %1204 = vmatpush1.bf16.msra.mxu0 0
  %1205 = vmatprep.subr.bf16.mxu0 0
  %1206 = vmatpush1.bf16.msra.mxu0 0
  %1207 = vmatprep.subr.bf16.mxu0 0
  %1208 = vmatpush1.bf16.msra.mxu0 0
  %1209 = vmatprep.subr.bf16.mxu0 0
  %1210 = vmatpush1.bf16.msra.mxu0 0
  %1211 = vmatprep.subr.bf16.mxu0 0
  %1212 = vmatpush1.bf16.msra.mxu0 0
  %1213 = vmatprep.subr.bf16.mxu0 0
  %1214 = vmatpush1.bf16.msra.mxu0 0
  %1215 = vmatprep.subr.bf16.mxu0 0
  %1216 = vmatpush1.bf16.msra.mxu0 0
  %1217 = vmatprep.subr.bf16.mxu0 0
  %1218 = vmatpush1.bf16.msra.mxu0 0
  %1219 = vmatprep.subr.bf16.mxu0 0
  %1220 = vmatpush1.bf16.msra.mxu0 0
  %1221 = vmatprep.subr.bf16.mxu0 0
  %1222 = vmatpush1.bf16.msra.mxu0 0
  %1223 = vmatprep.subr.bf16.mxu0 0
  %1224 = vmatpush1.bf16.msra.mxu0 0
  %1225 = vmatprep.mubr.bf16.mxu0 0
  %1226 = vmatmul.mubr.bf16.gmra.mrb[0].mxu0 %v100
  %v1227 = vpop.f32.mrb[0].mxu0
  %v1228 = vadd.f32 0.0, %v1227
  %v1229 = vpop.f32.mrb[0].mxu0
  %v1230 = vpop.f32.mrb[0].mxu0
  %v1231 = vadd.f32 0.0, %v1230
  %v1232 = vpop.f32.mrb[0].mxu0
  %1233 = vdwg.mxu0
  %v1234 = vmul.f32 %v1184, %v190
  %v1235 = vmul.f32 %v1187, %v195
  %v1236 = vmul.f32 %v1228, %v190
  %v1237 = vmul.f32 %v1231, %v195
  %v1238 = vmul.f32 %v1234, %v1234
  %v1239 = vmul.f32 %v1235, %v1235
  %v1240 = vsub.f32 %v1236, %v1238
  %v1241 = vsub.f32 %v1237, %v1239
  %v1242 = vmax.f32 %v1240, 0.0
  %v1243 = vmax.f32 %v1241, 0.0
  %v1244 = vadd.f32 %v1242, 1e-05
  %v1245 = vadd.f32 %v1243, 1e-05
  %v1246 = vrsqrt.pop %v1244
  %v1247 = vmul.f32 %v1244, %v1246
  %vm1248 = vcmp.eq.f32.partialorder %v1244, inf
  %v1249 = vsel %vm1248, %v1244, %v1247
  %vm1250 = vcmp.eq.f32.partialorder %v1244, 0.0
  %v1251 = vand.u32 %v1244, 2147483648
  %v1252 = vsel %vm1250, %v1251, %v1249
  %v1253 = vrsqrt.pop %v1245
  %v1254 = vmul.f32 %v1245, %v1253
  %vm1255 = vcmp.eq.f32.partialorder %v1245, inf
  %v1256 = vsel %vm1255, %v1245, %v1254
  %vm1257 = vcmp.eq.f32.partialorder %v1245, 0.0
  %v1258 = vand.u32 %v1245, 2147483648
  %v1259 = vsel %vm1257, %v1258, %v1256
  %v1260 = vmul.f32 %v1252, %v226
  %v1261 = vmul.f32 %v1259, %v231
  %v1262 = vlaneseq
  %v1263 = vshrl.u32 %v1262, 7
  %v1264 = vsub.s32 0, %v1263
  %v1265 = vrot.slane %v1146, %v1264
  %v1266 = vmax.f32 %v1265, -1e+30
  %v1267 = vsel %vm256, %v1266, -1e+30
  %v1268 = vsel %vm257, %v1266, -1e+30
  %v1269 = vsub.f32 0.0, %v1146
  %v1270 = vlaneseq
  %v1271 = vshrl.u32 %v1270, 7
  %v1272 = vsub.s32 0, %v1271
  %v1273 = vrot.slane %v1269, %v1272
  %v1274 = vmax.f32 %v1273, -1e+30
  %v1275 = vsel %vm256, %v1274, -1e+30
  %v1276 = vsel %vm257, %v1274, -1e+30
  %v1277 = vlaneseq
  %v1278 = vshrl.u32 %v1277, 7
  %v1279 = vsub.s32 1, %v1278
  %v1280 = vrot.slane %v1146, %v1279
  %v1281 = vmax.f32 %v1267, %v1280
  %v1282 = vmax.f32 %v1268, %v1280
  %v1283 = vsel %vm288, %v1281, %v1267
  %v1284 = vsel %vm289, %v1282, %v1268
  %v1285 = vlaneseq
  %v1286 = vshrl.u32 %v1285, 7
  %v1287 = vsub.s32 1, %v1286
  %v1288 = vrot.slane %v1269, %v1287
  %v1289 = vmax.f32 %v1275, %v1288
  %v1290 = vmax.f32 %v1276, %v1288
  %v1291 = vsel %vm288, %v1289, %v1275
  %v1292 = vsel %vm289, %v1290, %v1276
  %v1293 = vlaneseq
  %v1294 = vshrl.u32 %v1293, 7
  %v1295 = vsub.s32 2, %v1294
  %v1296 = vrot.slane %v1146, %v1295
  %v1297 = vmax.f32 %v1283, %v1296
  %v1298 = vmax.f32 %v1284, %v1296
  %v1299 = vsel %vm320, %v1297, %v1283
  %v1300 = vsel %vm321, %v1298, %v1284
  %v1301 = vlaneseq
  %v1302 = vshrl.u32 %v1301, 7
  %v1303 = vsub.s32 2, %v1302
  %v1304 = vrot.slane %v1269, %v1303
  %v1305 = vmax.f32 %v1291, %v1304
  %v1306 = vmax.f32 %v1292, %v1304
  %v1307 = vsel %vm320, %v1305, %v1291
  %v1308 = vsel %vm321, %v1306, %v1292
  %v1309 = vlaneseq
  %v1310 = vshrl.u32 %v1309, 7
  %v1311 = vsub.s32 3, %v1310
  %v1312 = vrot.slane %v1146, %v1311
  %v1313 = vmax.f32 %v1299, %v1312
  %v1314 = vmax.f32 %v1300, %v1312
  %v1315 = vsel %vm352, %v1313, %v1299
  %v1316 = vsel %vm353, %v1314, %v1300
  %v1317 = vlaneseq
  %v1318 = vshrl.u32 %v1317, 7
  %v1319 = vsub.s32 3, %v1318
  %v1320 = vrot.slane %v1269, %v1319
  %v1321 = vmax.f32 %v1307, %v1320
  %v1322 = vmax.f32 %v1308, %v1320
  %v1323 = vsel %vm352, %v1321, %v1307
  %v1324 = vsel %vm353, %v1322, %v1308
  %v1325 = vlaneseq
  %v1326 = vshrl.u32 %v1325, 7
  %v1327 = vsub.s32 4, %v1326
  %v1328 = vrot.slane %v1146, %v1327
  %v1329 = vmax.f32 %v1315, %v1328
  %v1330 = vmax.f32 %v1316, %v1328
  %v1331 = vsel %vm384, %v1329, %v1315
  %v1332 = vsel %vm385, %v1330, %v1316
  %v1333 = vlaneseq
  %v1334 = vshrl.u32 %v1333, 7
  %v1335 = vsub.s32 4, %v1334
  %v1336 = vrot.slane %v1269, %v1335
  %v1337 = vmax.f32 %v1323, %v1336
  %v1338 = vmax.f32 %v1324, %v1336
  %v1339 = vsel %vm384, %v1337, %v1323
  %v1340 = vsel %vm385, %v1338, %v1324
  %v1341 = vlaneseq
  %v1342 = vshrl.u32 %v1341, 7
  %v1343 = vsub.s32 5, %v1342
  %v1344 = vrot.slane %v1146, %v1343
  %v1345 = vmax.f32 %v1331, %v1344
  %v1346 = vmax.f32 %v1332, %v1344
  %v1347 = vsel %vm416, %v1345, %v1331
  %v1348 = vsel %vm417, %v1346, %v1332
  %v1349 = vlaneseq
  %v1350 = vshrl.u32 %v1349, 7
  %v1351 = vsub.s32 5, %v1350
  %v1352 = vrot.slane %v1269, %v1351
  %v1353 = vmax.f32 %v1339, %v1352
  %v1354 = vmax.f32 %v1340, %v1352
  %v1355 = vsel %vm416, %v1353, %v1339
  %v1356 = vsel %vm417, %v1354, %v1340
  %v1357 = vlaneseq
  %v1358 = vshrl.u32 %v1357, 7
  %v1359 = vsub.s32 6, %v1358
  %v1360 = vrot.slane %v1146, %v1359
  %v1361 = vmax.f32 %v1347, %v1360
  %v1362 = vmax.f32 %v1348, %v1360
  %v1363 = vsel %vm448, %v1361, %v1347
  %v1364 = vsel %vm449, %v1362, %v1348
  %v1365 = vlaneseq
  %v1366 = vshrl.u32 %v1365, 7
  %v1367 = vsub.s32 6, %v1366
  %v1368 = vrot.slane %v1269, %v1367
  %v1369 = vmax.f32 %v1355, %v1368
  %v1370 = vmax.f32 %v1356, %v1368
  %v1371 = vsel %vm448, %v1369, %v1355
  %v1372 = vsel %vm449, %v1370, %v1356
  %v1373 = vlaneseq
  %v1374 = vshrl.u32 %v1373, 7
  %v1375 = vsub.s32 7, %v1374
  %v1376 = vrot.slane %v1146, %v1375
  %v1377 = vmax.f32 %v1363, %v1376
  %v1378 = vmax.f32 %v1364, %v1376
  %v1379 = vsel %vm480, %v1377, %v1363
  %v1380 = vsel %vm481, %v1378, %v1364
  %v1381 = vlaneseq
  %v1382 = vshrl.u32 %v1381, 7
  %v1383 = vsub.s32 7, %v1382
  %v1384 = vrot.slane %v1269, %v1383
  %v1385 = vmax.f32 %v1371, %v1384
  %v1386 = vmax.f32 %v1372, %v1384
  %v1387 = vsel %vm480, %v1385, %v1371
  %v1388 = vsel %vm481, %v1386, %v1372
  %v1389 = vlaneseq
  %v1390 = vshrl.u32 %v1389, 7
  %v1391 = vsub.s32 0, %v1390
  %v1392 = vrot.slane %v1147, %v1391
  %v1393 = vmax.f32 %v1379, %v1392
  %v1394 = vmax.f32 %v1380, %v1392
  %v1395 = vsel %vm512, %v1393, %v1379
  %v1396 = vsel %vm513, %v1394, %v1380
  %v1397 = vsub.f32 0.0, %v1147
  %v1398 = vlaneseq
  %v1399 = vshrl.u32 %v1398, 7
  %v1400 = vsub.s32 0, %v1399
  %v1401 = vrot.slane %v1397, %v1400
  %v1402 = vmax.f32 %v1387, %v1401
  %v1403 = vmax.f32 %v1388, %v1401
  %v1404 = vsel %vm512, %v1402, %v1387
  %v1405 = vsel %vm513, %v1403, %v1388
  %v1406 = vlaneseq
  %v1407 = vshrl.u32 %v1406, 7
  %v1408 = vsub.s32 1, %v1407
  %v1409 = vrot.slane %v1147, %v1408
  %v1410 = vmax.f32 %v1395, %v1409
  %v1411 = vmax.f32 %v1396, %v1409
  %v1412 = vsel %vm545, %v1410, %v1395
  %v1413 = vsel %vm546, %v1411, %v1396
  %v1414 = vlaneseq
  %v1415 = vshrl.u32 %v1414, 7
  %v1416 = vsub.s32 1, %v1415
  %v1417 = vrot.slane %v1397, %v1416
  %v1418 = vmax.f32 %v1404, %v1417
  %v1419 = vmax.f32 %v1405, %v1417
  %v1420 = vsel %vm545, %v1418, %v1404
  %v1421 = vsel %vm546, %v1419, %v1405
  %v1422 = vlaneseq
  %v1423 = vshrl.u32 %v1422, 7
  %v1424 = vsub.s32 2, %v1423
  %v1425 = vrot.slane %v1147, %v1424
  %v1426 = vmax.f32 %v1412, %v1425
  %v1427 = vmax.f32 %v1413, %v1425
  %v1428 = vsel %vm577, %v1426, %v1412
  %v1429 = vsel %vm578, %v1427, %v1413
  %v1430 = vlaneseq
  %v1431 = vshrl.u32 %v1430, 7
  %v1432 = vsub.s32 2, %v1431
  %v1433 = vrot.slane %v1397, %v1432
  %v1434 = vmax.f32 %v1420, %v1433
  %v1435 = vmax.f32 %v1421, %v1433
  %v1436 = vsel %vm577, %v1434, %v1420
  %v1437 = vsel %vm578, %v1435, %v1421
  %v1438 = vlaneseq
  %v1439 = vshrl.u32 %v1438, 7
  %v1440 = vsub.s32 3, %v1439
  %v1441 = vrot.slane %v1147, %v1440
  %v1442 = vmax.f32 %v1428, %v1441
  %v1443 = vmax.f32 %v1429, %v1441
  %v1444 = vsel %vm609, %v1442, %v1428
  %v1445 = vsel %vm610, %v1443, %v1429
  %v1446 = vlaneseq
  %v1447 = vshrl.u32 %v1446, 7
  %v1448 = vsub.s32 3, %v1447
  %v1449 = vrot.slane %v1397, %v1448
  %v1450 = vmax.f32 %v1436, %v1449
  %v1451 = vmax.f32 %v1437, %v1449
  %v1452 = vsel %vm609, %v1450, %v1436
  %v1453 = vsel %vm610, %v1451, %v1437
  %v1454 = vlaneseq
  %v1455 = vshrl.u32 %v1454, 7
  %v1456 = vsub.s32 4, %v1455
  %v1457 = vrot.slane %v1147, %v1456
  %v1458 = vmax.f32 %v1444, %v1457
  %v1459 = vmax.f32 %v1445, %v1457
  %v1460 = vsel %vm641, %v1458, %v1444
  %v1461 = vsel %vm642, %v1459, %v1445
  %v1462 = vlaneseq
  %v1463 = vshrl.u32 %v1462, 7
  %v1464 = vsub.s32 4, %v1463
  %v1465 = vrot.slane %v1397, %v1464
  %v1466 = vmax.f32 %v1452, %v1465
  %v1467 = vmax.f32 %v1453, %v1465
  %v1468 = vsel %vm641, %v1466, %v1452
  %v1469 = vsel %vm642, %v1467, %v1453
  %v1470 = vlaneseq
  %v1471 = vshrl.u32 %v1470, 7
  %v1472 = vsub.s32 5, %v1471
  %v1473 = vrot.slane %v1147, %v1472
  %v1474 = vmax.f32 %v1460, %v1473
  %v1475 = vmax.f32 %v1461, %v1473
  %v1476 = vsel %vm673, %v1474, %v1460
  %v1477 = vsel %vm674, %v1475, %v1461
  %v1478 = vlaneseq
  %v1479 = vshrl.u32 %v1478, 7
  %v1480 = vsub.s32 5, %v1479
  %v1481 = vrot.slane %v1397, %v1480
  %v1482 = vmax.f32 %v1468, %v1481
  %v1483 = vmax.f32 %v1469, %v1481
  %v1484 = vsel %vm673, %v1482, %v1468
  %v1485 = vsel %vm674, %v1483, %v1469
  %v1486 = vlaneseq
  %v1487 = vshrl.u32 %v1486, 7
  %v1488 = vsub.s32 6, %v1487
  %v1489 = vrot.slane %v1147, %v1488
  %v1490 = vmax.f32 %v1476, %v1489
  %v1491 = vmax.f32 %v1477, %v1489
  %v1492 = vsel %vm705, %v1490, %v1476
  %v1493 = vsel %vm706, %v1491, %v1477
  %v1494 = vlaneseq
  %v1495 = vshrl.u32 %v1494, 7
  %v1496 = vsub.s32 6, %v1495
  %v1497 = vrot.slane %v1397, %v1496
  %v1498 = vmax.f32 %v1484, %v1497
  %v1499 = vmax.f32 %v1485, %v1497
  %v1500 = vsel %vm705, %v1498, %v1484
  %v1501 = vsel %vm706, %v1499, %v1485
  %v1502 = vlaneseq
  %v1503 = vshrl.u32 %v1502, 7
  %v1504 = vsub.s32 7, %v1503
  %v1505 = vrot.slane %v1147, %v1504
  %v1506 = vmax.f32 %v1492, %v1505
  %v1507 = vmax.f32 %v1493, %v1505
  %v1508 = vsel %vm737, %v1506, %v1492
  %v1509 = vsel %vm738, %v1507, %v1493
  %v1510 = vlaneseq
  %v1511 = vshrl.u32 %v1510, 7
  %v1512 = vsub.s32 7, %v1511
  %v1513 = vrot.slane %v1397, %v1512
  %v1514 = vmax.f32 %v1500, %v1513
  %v1515 = vmax.f32 %v1501, %v1513
  %v1516 = vsel %vm737, %v1514, %v1500
  %v1517 = vsel %vm738, %v1515, %v1501
  %v1518 = vsub.f32 0.0, %v1516
  %v1519 = vsub.f32 0.0, %v1517
  %v1520 = vmul.f32 %v1518, %v226
  %v1521 = vmul.f32 %v1519, %v231
  %v1522 = vmul.f32 %v1508, %v226
  %v1523 = vmul.f32 %v1509, %v231
  %1526 = vrot.lane.b32.xlu0 %v1520, 32
  %v1527 = vpop.permute.xlu0 %1526
  %1528 = vrot.lane.b32.xlu0 %v1521, 32
  %v1529 = vpop.permute.xlu0 %1528
  %1534 = vrot.lane.b32.xlu0 %v1522, 64
  %v1535 = vpop.permute.xlu0 %1534
  %1536 = vrot.lane.b32.xlu0 %v1523, 64
  %v1537 = vpop.permute.xlu0 %1536
  %1542 = vrot.lane.b32.xlu0 %v1260, 96
  %v1543 = vpop.permute.xlu0 %1542
  %1544 = vrot.lane.b32.xlu0 %v1261, 96
  %v1545 = vpop.permute.xlu0 %1544
  %v1548 = vsel %vm779, %v1234, %v1527
  %v1549 = vsel %vm779, %v1235, %v1529
  %v1550 = vsel %vm782, %v1548, %v1535
  %v1551 = vsel %vm782, %v1549, %v1537
  %v1552 = vsel %vm785, %v1550, %v1543
  %v1553 = vsel %vm785, %v1551, %v1545
  %v1554 = vmul.f32 %v791, %v1552
  %v1555 = vmul.f32 %v796, %v1553
  %v1556 = vmul.f32 %v803, %v1552
  %v1557 = vmul.f32 %v808, %v1553
  %v1558 = vpack.c.bf16 %v1553, %v1552
  %v1559 = vpack.c.bf16 %v1555, %v1554
  %v1560 = vpack.c.bf16 %v1557, %v1556
  %v1561 = vld [vmem:[%s10] sm:$0xf]
  %v1562 = vld [vmem:[%s10 + $0x4] sm:$0xf]
  %v1563 = vld [vmem:[%s10 + $0x8] sm:$0xf]
  %v1564 = vld [vmem:[%s10 + $0xc] sm:$0xf]
  %v1565 = vld [vmem:[%s10 + $0x10] sm:$0xf]
  %v1566 = vld [vmem:[%s10 + $0x14] sm:$0xf]
  %v1567 = vld [vmem:[%s10 + $0x18] sm:$0xf]
  %v1568 = vld [vmem:[%s10 + $0x1c] sm:$0xf]
  %v1569 = vld [vmem:[%s10 + $0x20] sm:$0xf]
  %v1570 = vld [vmem:[%s10 + $0x24] sm:$0xf]
  %v1571 = vld [vmem:[%s10 + $0x28] sm:$0xf]
  %v1572 = vld [vmem:[%s10 + $0x2c] sm:$0xf]
  %v1573 = vld [vmem:[%s10 + $0x30] sm:$0xf]
  %v1574 = vld [vmem:[%s10 + $0x34] sm:$0xf]
  %v1575 = vld [vmem:[%s10 + $0x38] sm:$0xf]
  %v1576 = vld [vmem:[%s10 + $0x3c] sm:$0xf]
  %v1577 = vld [vmem:[%s10 + $0x40] sm:$0xf]
  %v1578 = vld [vmem:[%s10 + $0x44] sm:$0xf]
  %v1579 = vld [vmem:[%s10 + $0x48] sm:$0xf]
  %v1580 = vld [vmem:[%s10 + $0x4c] sm:$0xf]
  %v1581 = vld [vmem:[%s10 + $0x50] sm:$0xf]
  %v1582 = vld [vmem:[%s10 + $0x54] sm:$0xf]
  %v1583 = vld [vmem:[%s10 + $0x58] sm:$0xf]
  %v1584 = vld [vmem:[%s10 + $0x5c] sm:$0xf]
  %v1585 = vld [vmem:[%s10 + $0x60] sm:$0xf]
  %v1586 = vld [vmem:[%s10 + $0x64] sm:$0xf]
  %v1587 = vld [vmem:[%s10 + $0x68] sm:$0xf]
  %v1588 = vld [vmem:[%s10 + $0x6c] sm:$0xf]
  %v1589 = vld [vmem:[%s10 + $0x70] sm:$0xf]
  %v1590 = vld [vmem:[%s10 + $0x74] sm:$0xf]
  %v1591 = vld [vmem:[%s10 + $0x78] sm:$0xf]
  %v1592 = vld [vmem:[%s10 + $0x7c] sm:$0xf]
  %v1593 = vld [vmem:[%s10 + $0x80] sm:$0xf]
  %v1594 = vld [vmem:[%s10 + $0x84] sm:$0xf]
  %v1595 = vld [vmem:[%s10 + $0x88] sm:$0xf]
  %v1596 = vld [vmem:[%s10 + $0x8c] sm:$0xf]
  %v1597 = vld [vmem:[%s10 + $0x90] sm:$0xf]
  %v1598 = vld [vmem:[%s10 + $0x94] sm:$0xf]
  %v1599 = vld [vmem:[%s10 + $0x98] sm:$0xf]
  %v1600 = vld [vmem:[%s10 + $0x9c] sm:$0xf]
  %v1601 = vld [vmem:[%s10 + $0xa0] sm:$0xf]
  %v1602 = vld [vmem:[%s10 + $0xa4] sm:$0xf]
  %v1603 = vld [vmem:[%s10 + $0xa8] sm:$0xf]
  %v1604 = vld [vmem:[%s10 + $0xac] sm:$0xf]
  %v1605 = vld [vmem:[%s10 + $0xb0] sm:$0xf]
  %v1606 = vld [vmem:[%s10 + $0xb4] sm:$0xf]
  %v1607 = vld [vmem:[%s10 + $0xb8] sm:$0xf]
  %v1608 = vld [vmem:[%s10 + $0xbc] sm:$0xf]
  %v1609 = vld [vmem:[%s11] sm:$0x1]
  %v1611 = vlaneseq
  %v1612 = vshrl.u32 %v1611, 7
  %v1613 = vsub.s32 0, %v1612
  %v1614 = vrot.slane %v1609, %v1613
  %v1664 = vunpack.c.l.b16 %v1561
  %v1665 = vunpack.c.l.b16 %v1562
  %v1666 = vunpack.c.l.b16 %v1563
  %v1667 = vunpack.c.l.b16 %v1564
  %v1668 = vunpack.c.l.b16 %v1565
  %v1669 = vunpack.c.l.b16 %v1566
  %v1670 = vunpack.c.l.b16 %v1567
  %v1671 = vunpack.c.l.b16 %v1568
  %v1672 = vunpack.c.l.b16 %v1569
  %v1673 = vunpack.c.l.b16 %v1570
  %v1674 = vunpack.c.l.b16 %v1571
  %v1675 = vunpack.c.l.b16 %v1572
  %v1676 = vunpack.c.l.b16 %v1573
  %v1677 = vunpack.c.l.b16 %v1574
  %v1678 = vunpack.c.l.b16 %v1575
  %v1679 = vunpack.c.l.b16 %v1576
  %v1680 = vunpack.c.l.b16 %v1577
  %v1681 = vunpack.c.l.b16 %v1578
  %v1682 = vunpack.c.l.b16 %v1579
  %v1683 = vunpack.c.l.b16 %v1580
  %v1684 = vunpack.c.l.b16 %v1581
  %v1685 = vunpack.c.l.b16 %v1582
  %v1686 = vunpack.c.l.b16 %v1583
  %v1687 = vunpack.c.l.b16 %v1584
  %v1688 = vunpack.c.l.b16 %v1585
  %v1689 = vunpack.c.l.b16 %v1586
  %v1690 = vunpack.c.l.b16 %v1587
  %v1691 = vunpack.c.l.b16 %v1588
  %v1692 = vunpack.c.l.b16 %v1589
  %v1693 = vunpack.c.l.b16 %v1590
  %v1694 = vunpack.c.l.b16 %v1591
  %v1695 = vunpack.c.l.b16 %v1592
  %v1696 = vunpack.c.l.b16 %v1593
  %v1697 = vunpack.c.l.b16 %v1594
  %v1698 = vunpack.c.l.b16 %v1595
  %v1699 = vunpack.c.l.b16 %v1596
  %v1700 = vunpack.c.l.b16 %v1597
  %v1701 = vunpack.c.l.b16 %v1598
  %v1702 = vunpack.c.l.b16 %v1599
  %v1703 = vunpack.c.l.b16 %v1600
  %v1704 = vunpack.c.l.b16 %v1601
  %v1705 = vunpack.c.l.b16 %v1602
  %v1706 = vunpack.c.l.b16 %v1603
  %v1707 = vunpack.c.l.b16 %v1604
  %v1708 = vunpack.c.l.b16 %v1605
  %v1709 = vunpack.c.l.b16 %v1606
  %v1710 = vunpack.c.l.b16 %v1607
  %v1711 = vunpack.c.l.b16 %v1608
  %v1712 = vpack.c.b16 %v1665, %v1664
  %v1713 = vpack.c.b16 %v1667, %v1666
  %v1714 = vpack.c.b16 %v1669, %v1668
  %v1715 = vpack.c.b16 %v1671, %v1670
  %v1716 = vpack.c.b16 %v1673, %v1672
  %v1717 = vpack.c.b16 %v1675, %v1674
  %v1718 = vpack.c.b16 %v1677, %v1676
  %v1719 = vpack.c.b16 %v1679, %v1678
  %v1720 = vpack.c.b16 %v1681, %v1680
  %v1721 = vpack.c.b16 %v1683, %v1682
  %v1722 = vpack.c.b16 %v1685, %v1684
  %v1723 = vpack.c.b16 %v1687, %v1686
  %v1724 = vpack.c.b16 %v1689, %v1688
  %v1725 = vpack.c.b16 %v1691, %v1690
  %v1726 = vpack.c.b16 %v1693, %v1692
  %v1727 = vpack.c.b16 %v1695, %v1694
  %v1728 = vpack.c.b16 %v1697, %v1696
  %v1729 = vpack.c.b16 %v1699, %v1698
  %v1730 = vpack.c.b16 %v1701, %v1700
  %v1731 = vpack.c.b16 %v1703, %v1702
  %v1732 = vpack.c.b16 %v1705, %v1704
  %v1733 = vpack.c.b16 %v1707, %v1706
  %v1734 = vpack.c.b16 %v1709, %v1708
  %v1735 = vpack.c.b16 %v1711, %v1710
  %1760 = vmatprep.subr.bf16.mxu0 0
  %1761 = vmatpush1.bf16.msra.mxu0 %v1712
  %1762 = vmatprep.subr.bf16.mxu0 0
  %1763 = vmatpush1.bf16.msra.mxu0 %v1713
  %1764 = vmatprep.subr.bf16.mxu0 0
  %1765 = vmatpush1.bf16.msra.mxu0 %v1714
  %1766 = vmatprep.subr.bf16.mxu0 0
  %1767 = vmatpush1.bf16.msra.mxu0 %v1715
  %1768 = vmatprep.subr.bf16.mxu0 0
  %1769 = vmatpush1.bf16.msra.mxu0 %v1716
  %1770 = vmatprep.subr.bf16.mxu0 0
  %1771 = vmatpush1.bf16.msra.mxu0 %v1717
  %1772 = vmatprep.subr.bf16.mxu0 0
  %1773 = vmatpush1.bf16.msra.mxu0 %v1718
  %1774 = vmatprep.subr.bf16.mxu0 0
  %1775 = vmatpush1.bf16.msra.mxu0 %v1719
  %1776 = vmatprep.subr.bf16.mxu0 0
  %1777 = vmatpush1.bf16.msra.mxu0 %v1720
  %1778 = vmatprep.subr.bf16.mxu0 0
  %1779 = vmatpush1.bf16.msra.mxu0 %v1721
  %1780 = vmatprep.subr.bf16.mxu0 0
  %1781 = vmatpush1.bf16.msra.mxu0 %v1722
  %1782 = vmatprep.subr.bf16.mxu0 0
  %1783 = vmatpush1.bf16.msra.mxu0 %v1723
  %1784 = vmatprep.subr.bf16.mxu0 0
  %1785 = vmatpush1.bf16.msra.mxu0 %v1724
  %1786 = vmatprep.subr.bf16.mxu0 0
  %1787 = vmatpush1.bf16.msra.mxu0 %v1725
  %1788 = vmatprep.subr.bf16.mxu0 0
  %1789 = vmatpush1.bf16.msra.mxu0 %v1726
  %1790 = vmatprep.subr.bf16.mxu0 0
  %1791 = vmatpush1.bf16.msra.mxu0 %v1727
  %1792 = vmatprep.mubr.bf16.mxu0 %v1559
  %1793 = vmatmul.mubr.bf16.gmra.mrb[0].mxu0 %v1558
  %v1794 = vpop.f32.mrb[0].mxu0
  %v1795 = vadd.f32 %v1614, %v1794
  %v1796 = vpop.f32.mrb[0].mxu0
  %v1797 = vpop.f32.mrb[0].mxu0
  %v1798 = vadd.f32 %v1614, %v1797
  %v1799 = vpop.f32.mrb[0].mxu0
  %1800 = vdwg.mxu0
  %1801 = vmatprep.subr.bf16.mxu0 0
  %1802 = vmatpush1.bf16.msra.mxu0 %v1728
  %1803 = vmatprep.subr.bf16.mxu0 0
  %1804 = vmatpush1.bf16.msra.mxu0 %v1729
  %1805 = vmatprep.subr.bf16.mxu0 0
  %1806 = vmatpush1.bf16.msra.mxu0 %v1730
  %1807 = vmatprep.subr.bf16.mxu0 0
  %1808 = vmatpush1.bf16.msra.mxu0 %v1731
  %1809 = vmatprep.subr.bf16.mxu0 0
  %1810 = vmatpush1.bf16.msra.mxu0 %v1732
  %1811 = vmatprep.subr.bf16.mxu0 0
  %1812 = vmatpush1.bf16.msra.mxu0 %v1733
  %1813 = vmatprep.subr.bf16.mxu0 0
  %1814 = vmatpush1.bf16.msra.mxu0 %v1734
  %1815 = vmatprep.subr.bf16.mxu0 0
  %1816 = vmatpush1.bf16.msra.mxu0 %v1735
  %1817 = vmatprep.subr.bf16.mxu0 0
  %1818 = vmatpush1.bf16.msra.mxu0 0
  %1819 = vmatprep.subr.bf16.mxu0 0
  %1820 = vmatpush1.bf16.msra.mxu0 0
  %1821 = vmatprep.subr.bf16.mxu0 0
  %1822 = vmatpush1.bf16.msra.mxu0 0
  %1823 = vmatprep.subr.bf16.mxu0 0
  %1824 = vmatpush1.bf16.msra.mxu0 0
  %1825 = vmatprep.subr.bf16.mxu0 0
  %1826 = vmatpush1.bf16.msra.mxu0 0
  %1827 = vmatprep.subr.bf16.mxu0 0
  %1828 = vmatpush1.bf16.msra.mxu0 0
  %1829 = vmatprep.subr.bf16.mxu0 0
  %1830 = vmatpush1.bf16.msra.mxu0 0
  %1831 = vmatprep.subr.bf16.mxu0 0
  %1832 = vmatpush1.bf16.msra.mxu0 0
  %1833 = vmatprep.mubr.bf16.mxu0 0
  %1834 = vmatmul.mubr.bf16.gmra.mrb[0].mxu0 %v1560
  %v1835 = vpop.f32.mrb[0].mxu0
  %v1836 = vadd.f32 %v1795, %v1835
  %v1837 = vpop.f32.mrb[0].mxu0
  %v1838 = vpop.f32.mrb[0].mxu0
  %v1839 = vadd.f32 %v1798, %v1838
  %v1840 = vpop.f32.mrb[0].mxu0
  %1841 = vdwg.mxu0
  %v1842 = vmax.f32 %v1836, 0.0
  %v1843 = vmax.f32 %v1839, 0.0
  %v1844 = vsel %vm782, %v1842, 0.0
  %v1845 = vsel %vm782, %v1843, 0.0
  %v1846 = vadd.f32 %v1844, %v1845
  %v1847 = vrot.slane %v1846, 4
  %v1848 = vadd.f32 %v1846, %v1847
  %v1849 = vrot.slane %v1848, 2
  %v1850 = vadd.f32 %v1848, %v1849
  %v1851 = vrot.slane %v1850, 1
  %v1852 = vadd.f32 %v1850, %v1851
  %v1853 = vmul.f32 %v1852, %v1107
  %v1854 = vmul.f32 %v1842, %v1842
  %v1855 = vmul.f32 %v1843, %v1843
  %v1856 = vsel %vm782, %v1854, 0.0
  %v1857 = vsel %vm782, %v1855, 0.0
  %v1858 = vadd.f32 %v1856, %v1857
  %v1859 = vrot.slane %v1858, 4
  %v1860 = vadd.f32 %v1858, %v1859
  %v1861 = vrot.slane %v1860, 2
  %v1862 = vadd.f32 %v1860, %v1861
  %v1863 = vrot.slane %v1862, 1
  %v1864 = vadd.f32 %v1862, %v1863
  %v1865 = vmul.f32 %v1864, %v1107
  %v1866 = vmul.f32 %v1853, %v1853
  %v1867 = vsub.f32 %v1865, %v1866
  %v1868 = vmax.f32 %v1867, 0.0
  %v1869 = vsub.f32 %v1842, %v1853
  %v1870 = vsub.f32 %v1843, %v1853
  %v1871 = vadd.f32 %v1868, 1e-05
  %v1872 = vrsqrt.pop %v1871
  %v1873 = vmul.f32 %v1869, %v1872
  %v1874 = vmul.f32 %v1870, %v1872
  %v1875 = vld [vmem:[%s12] sm:$0x1]
  %v1877 = vlaneseq
  %v1878 = vshrl.u32 %v1877, 7
  %v1879 = vsub.s32 0, %v1878
  %v1880 = vrot.slane %v1875, %v1879
  %v1882 = vmul.f32 %v1873, %v1880
  %v1883 = vmul.f32 %v1874, %v1880
  %v1884 = vld [vmem:[%s13] sm:$0x1]
  %v1886 = vlaneseq
  %v1887 = vshrl.u32 %v1886, 7
  %v1888 = vsub.s32 0, %v1887
  %v1889 = vrot.slane %v1884, %v1888
  %v1891 = vadd.f32 %v1882, %v1889
  %v1892 = vadd.f32 %v1883, %v1889
  %v1893 = vpack.c.bf16 %v1892, %v1891
  %1894 = vmatprep.subr.bf16.mxu0 0
  %1895 = vmatpush1.bf16.msra.mxu0 %v1893
  %1896 = vmatprep.subr.bf16.mxu0 0
  %1897 = vmatpush1.bf16.msra.mxu0 0
  %1898 = vmatprep.subr.bf16.mxu0 0
  %1899 = vmatpush1.bf16.msra.mxu0 0
  %1900 = vmatprep.subr.bf16.mxu0 0
  %1901 = vmatpush1.bf16.msra.mxu0 0
  %1902 = vmatprep.subr.bf16.mxu0 0
  %1903 = vmatpush1.bf16.msra.mxu0 0
  %1904 = vmatprep.subr.bf16.mxu0 0
  %1905 = vmatpush1.bf16.msra.mxu0 0
  %1906 = vmatprep.subr.bf16.mxu0 0
  %1907 = vmatpush1.bf16.msra.mxu0 0
  %1908 = vmatprep.subr.bf16.mxu0 0
  %1909 = vmatpush1.bf16.msra.mxu0 0
  %1910 = vmatprep.subr.bf16.mxu0 0
  %1911 = vmatpush1.bf16.msra.mxu0 0
  %1912 = vmatprep.subr.bf16.mxu0 0
  %1913 = vmatpush1.bf16.msra.mxu0 0
  %1914 = vmatprep.subr.bf16.mxu0 0
  %1915 = vmatpush1.bf16.msra.mxu0 0
  %1916 = vmatprep.subr.bf16.mxu0 0
  %1917 = vmatpush1.bf16.msra.mxu0 0
  %1918 = vmatprep.subr.bf16.mxu0 0
  %1919 = vmatpush1.bf16.msra.mxu0 0
  %1920 = vmatprep.subr.bf16.mxu0 0
  %1921 = vmatpush1.bf16.msra.mxu0 0
  %1922 = vmatprep.subr.bf16.mxu0 0
  %1923 = vmatpush1.bf16.msra.mxu0 0
  %1924 = vmatprep.subr.bf16.mxu0 0
  %1925 = vmatpush1.bf16.msra.mxu0 0
  %1926 = vmatprep.mubr.bf16.mxu0 0
  %1927 = vmatmul.mubr.bf16.gmra.mrb[0].mxu0 %v100
  %v1928 = vpop.f32.mrb[0].mxu0
  %v1929 = vadd.f32 0.0, %v1928
  %v1930 = vpop.f32.mrb[0].mxu0
  %v1931 = vpop.f32.mrb[0].mxu0
  %v1932 = vadd.f32 0.0, %v1931
  %v1933 = vpop.f32.mrb[0].mxu0
  %1934 = vdwg.mxu0
  %v1935 = vmul.f32 %v1891, %v1891
  %v1936 = vmul.f32 %v1892, %v1892
  %v1937 = vpack.c.bf16 %v1936, %v1935
  %1938 = vmatprep.subr.bf16.mxu0 0
  %1939 = vmatpush1.bf16.msra.mxu0 %v1937
  %1940 = vmatprep.subr.bf16.mxu0 0
  %1941 = vmatpush1.bf16.msra.mxu0 0
  %1942 = vmatprep.subr.bf16.mxu0 0
  %1943 = vmatpush1.bf16.msra.mxu0 0
  %1944 = vmatprep.subr.bf16.mxu0 0
  %1945 = vmatpush1.bf16.msra.mxu0 0
  %1946 = vmatprep.subr.bf16.mxu0 0
  %1947 = vmatpush1.bf16.msra.mxu0 0
  %1948 = vmatprep.subr.bf16.mxu0 0
  %1949 = vmatpush1.bf16.msra.mxu0 0
  %1950 = vmatprep.subr.bf16.mxu0 0
  %1951 = vmatpush1.bf16.msra.mxu0 0
  %1952 = vmatprep.subr.bf16.mxu0 0
  %1953 = vmatpush1.bf16.msra.mxu0 0
  %1954 = vmatprep.subr.bf16.mxu0 0
  %1955 = vmatpush1.bf16.msra.mxu0 0
  %1956 = vmatprep.subr.bf16.mxu0 0
  %1957 = vmatpush1.bf16.msra.mxu0 0
  %1958 = vmatprep.subr.bf16.mxu0 0
  %1959 = vmatpush1.bf16.msra.mxu0 0
  %1960 = vmatprep.subr.bf16.mxu0 0
  %1961 = vmatpush1.bf16.msra.mxu0 0
  %1962 = vmatprep.subr.bf16.mxu0 0
  %1963 = vmatpush1.bf16.msra.mxu0 0
  %1964 = vmatprep.subr.bf16.mxu0 0
  %1965 = vmatpush1.bf16.msra.mxu0 0
  %1966 = vmatprep.subr.bf16.mxu0 0
  %1967 = vmatpush1.bf16.msra.mxu0 0
  %1968 = vmatprep.subr.bf16.mxu0 0
  %1969 = vmatpush1.bf16.msra.mxu0 0
  %1970 = vmatprep.mubr.bf16.mxu0 0
  %1971 = vmatmul.mubr.bf16.gmra.mrb[0].mxu0 %v100
  %v1972 = vpop.f32.mrb[0].mxu0
  %v1973 = vadd.f32 0.0, %v1972
  %v1974 = vpop.f32.mrb[0].mxu0
  %v1975 = vpop.f32.mrb[0].mxu0
  %v1976 = vadd.f32 0.0, %v1975
  %v1977 = vpop.f32.mrb[0].mxu0
  %1978 = vdwg.mxu0
  %v1979 = vmul.f32 %v1929, %v190
  %v1980 = vmul.f32 %v1932, %v195
  %v1981 = vmul.f32 %v1973, %v190
  %v1982 = vmul.f32 %v1976, %v195
  %v1983 = vmul.f32 %v1979, %v1979
  %v1984 = vmul.f32 %v1980, %v1980
  %v1985 = vsub.f32 %v1981, %v1983
  %v1986 = vsub.f32 %v1982, %v1984
  %v1987 = vmax.f32 %v1985, 0.0
  %v1988 = vmax.f32 %v1986, 0.0
  %v1989 = vadd.f32 %v1987, 1e-05
  %v1990 = vadd.f32 %v1988, 1e-05
  %v1991 = vrsqrt.pop %v1989
  %v1992 = vmul.f32 %v1989, %v1991
  %vm1993 = vcmp.eq.f32.partialorder %v1989, inf
  %v1994 = vsel %vm1993, %v1989, %v1992
  %vm1995 = vcmp.eq.f32.partialorder %v1989, 0.0
  %v1996 = vand.u32 %v1989, 2147483648
  %v1997 = vsel %vm1995, %v1996, %v1994
  %v1998 = vrsqrt.pop %v1990
  %v1999 = vmul.f32 %v1990, %v1998
  %vm2000 = vcmp.eq.f32.partialorder %v1990, inf
  %v2001 = vsel %vm2000, %v1990, %v1999
  %vm2002 = vcmp.eq.f32.partialorder %v1990, 0.0
  %v2003 = vand.u32 %v1990, 2147483648
  %v2004 = vsel %vm2002, %v2003, %v2001
  %v2005 = vmul.f32 %v1997, %v226
  %v2006 = vmul.f32 %v2004, %v231
  %v2007 = vlaneseq
  %v2008 = vshrl.u32 %v2007, 7
  %v2009 = vsub.s32 0, %v2008
  %v2010 = vrot.slane %v1891, %v2009
  %v2011 = vmax.f32 %v2010, -1e+30
  %v2012 = vsel %vm256, %v2011, -1e+30
  %v2013 = vsel %vm257, %v2011, -1e+30
  %v2014 = vsub.f32 0.0, %v1891
  %v2015 = vlaneseq
  %v2016 = vshrl.u32 %v2015, 7
  %v2017 = vsub.s32 0, %v2016
  %v2018 = vrot.slane %v2014, %v2017
  %v2019 = vmax.f32 %v2018, -1e+30
  %v2020 = vsel %vm256, %v2019, -1e+30
  %v2021 = vsel %vm257, %v2019, -1e+30
  %v2022 = vlaneseq
  %v2023 = vshrl.u32 %v2022, 7
  %v2024 = vsub.s32 1, %v2023
  %v2025 = vrot.slane %v1891, %v2024
  %v2026 = vmax.f32 %v2012, %v2025
  %v2027 = vmax.f32 %v2013, %v2025
  %v2028 = vsel %vm288, %v2026, %v2012
  %v2029 = vsel %vm289, %v2027, %v2013
  %v2030 = vlaneseq
  %v2031 = vshrl.u32 %v2030, 7
  %v2032 = vsub.s32 1, %v2031
  %v2033 = vrot.slane %v2014, %v2032
  %v2034 = vmax.f32 %v2020, %v2033
  %v2035 = vmax.f32 %v2021, %v2033
  %v2036 = vsel %vm288, %v2034, %v2020
  %v2037 = vsel %vm289, %v2035, %v2021
  %v2038 = vlaneseq
  %v2039 = vshrl.u32 %v2038, 7
  %v2040 = vsub.s32 2, %v2039
  %v2041 = vrot.slane %v1891, %v2040
  %v2042 = vmax.f32 %v2028, %v2041
  %v2043 = vmax.f32 %v2029, %v2041
  %v2044 = vsel %vm320, %v2042, %v2028
  %v2045 = vsel %vm321, %v2043, %v2029
  %v2046 = vlaneseq
  %v2047 = vshrl.u32 %v2046, 7
  %v2048 = vsub.s32 2, %v2047
  %v2049 = vrot.slane %v2014, %v2048
  %v2050 = vmax.f32 %v2036, %v2049
  %v2051 = vmax.f32 %v2037, %v2049
  %v2052 = vsel %vm320, %v2050, %v2036
  %v2053 = vsel %vm321, %v2051, %v2037
  %v2054 = vlaneseq
  %v2055 = vshrl.u32 %v2054, 7
  %v2056 = vsub.s32 3, %v2055
  %v2057 = vrot.slane %v1891, %v2056
  %v2058 = vmax.f32 %v2044, %v2057
  %v2059 = vmax.f32 %v2045, %v2057
  %v2060 = vsel %vm352, %v2058, %v2044
  %v2061 = vsel %vm353, %v2059, %v2045
  %v2062 = vlaneseq
  %v2063 = vshrl.u32 %v2062, 7
  %v2064 = vsub.s32 3, %v2063
  %v2065 = vrot.slane %v2014, %v2064
  %v2066 = vmax.f32 %v2052, %v2065
  %v2067 = vmax.f32 %v2053, %v2065
  %v2068 = vsel %vm352, %v2066, %v2052
  %v2069 = vsel %vm353, %v2067, %v2053
  %v2070 = vlaneseq
  %v2071 = vshrl.u32 %v2070, 7
  %v2072 = vsub.s32 4, %v2071
  %v2073 = vrot.slane %v1891, %v2072
  %v2074 = vmax.f32 %v2060, %v2073
  %v2075 = vmax.f32 %v2061, %v2073
  %v2076 = vsel %vm384, %v2074, %v2060
  %v2077 = vsel %vm385, %v2075, %v2061
  %v2078 = vlaneseq
  %v2079 = vshrl.u32 %v2078, 7
  %v2080 = vsub.s32 4, %v2079
  %v2081 = vrot.slane %v2014, %v2080
  %v2082 = vmax.f32 %v2068, %v2081
  %v2083 = vmax.f32 %v2069, %v2081
  %v2084 = vsel %vm384, %v2082, %v2068
  %v2085 = vsel %vm385, %v2083, %v2069
  %v2086 = vlaneseq
  %v2087 = vshrl.u32 %v2086, 7
  %v2088 = vsub.s32 5, %v2087
  %v2089 = vrot.slane %v1891, %v2088
  %v2090 = vmax.f32 %v2076, %v2089
  %v2091 = vmax.f32 %v2077, %v2089
  %v2092 = vsel %vm416, %v2090, %v2076
  %v2093 = vsel %vm417, %v2091, %v2077
  %v2094 = vlaneseq
  %v2095 = vshrl.u32 %v2094, 7
  %v2096 = vsub.s32 5, %v2095
  %v2097 = vrot.slane %v2014, %v2096
  %v2098 = vmax.f32 %v2084, %v2097
  %v2099 = vmax.f32 %v2085, %v2097
  %v2100 = vsel %vm416, %v2098, %v2084
  %v2101 = vsel %vm417, %v2099, %v2085
  %v2102 = vlaneseq
  %v2103 = vshrl.u32 %v2102, 7
  %v2104 = vsub.s32 6, %v2103
  %v2105 = vrot.slane %v1891, %v2104
  %v2106 = vmax.f32 %v2092, %v2105
  %v2107 = vmax.f32 %v2093, %v2105
  %v2108 = vsel %vm448, %v2106, %v2092
  %v2109 = vsel %vm449, %v2107, %v2093
  %v2110 = vlaneseq
  %v2111 = vshrl.u32 %v2110, 7
  %v2112 = vsub.s32 6, %v2111
  %v2113 = vrot.slane %v2014, %v2112
  %v2114 = vmax.f32 %v2100, %v2113
  %v2115 = vmax.f32 %v2101, %v2113
  %v2116 = vsel %vm448, %v2114, %v2100
  %v2117 = vsel %vm449, %v2115, %v2101
  %v2118 = vlaneseq
  %v2119 = vshrl.u32 %v2118, 7
  %v2120 = vsub.s32 7, %v2119
  %v2121 = vrot.slane %v1891, %v2120
  %v2122 = vmax.f32 %v2108, %v2121
  %v2123 = vmax.f32 %v2109, %v2121
  %v2124 = vsel %vm480, %v2122, %v2108
  %v2125 = vsel %vm481, %v2123, %v2109
  %v2126 = vlaneseq
  %v2127 = vshrl.u32 %v2126, 7
  %v2128 = vsub.s32 7, %v2127
  %v2129 = vrot.slane %v2014, %v2128
  %v2130 = vmax.f32 %v2116, %v2129
  %v2131 = vmax.f32 %v2117, %v2129
  %v2132 = vsel %vm480, %v2130, %v2116
  %v2133 = vsel %vm481, %v2131, %v2117
  %v2134 = vlaneseq
  %v2135 = vshrl.u32 %v2134, 7
  %v2136 = vsub.s32 0, %v2135
  %v2137 = vrot.slane %v1892, %v2136
  %v2138 = vmax.f32 %v2124, %v2137
  %v2139 = vmax.f32 %v2125, %v2137
  %v2140 = vsel %vm512, %v2138, %v2124
  %v2141 = vsel %vm513, %v2139, %v2125
  %v2142 = vsub.f32 0.0, %v1892
  %v2143 = vlaneseq
  %v2144 = vshrl.u32 %v2143, 7
  %v2145 = vsub.s32 0, %v2144
  %v2146 = vrot.slane %v2142, %v2145
  %v2147 = vmax.f32 %v2132, %v2146
  %v2148 = vmax.f32 %v2133, %v2146
  %v2149 = vsel %vm512, %v2147, %v2132
  %v2150 = vsel %vm513, %v2148, %v2133
  %v2151 = vlaneseq
  %v2152 = vshrl.u32 %v2151, 7
  %v2153 = vsub.s32 1, %v2152
  %v2154 = vrot.slane %v1892, %v2153
  %v2155 = vmax.f32 %v2140, %v2154
  %v2156 = vmax.f32 %v2141, %v2154
  %v2157 = vsel %vm545, %v2155, %v2140
  %v2158 = vsel %vm546, %v2156, %v2141
  %v2159 = vlaneseq
  %v2160 = vshrl.u32 %v2159, 7
  %v2161 = vsub.s32 1, %v2160
  %v2162 = vrot.slane %v2142, %v2161
  %v2163 = vmax.f32 %v2149, %v2162
  %v2164 = vmax.f32 %v2150, %v2162
  %v2165 = vsel %vm545, %v2163, %v2149
  %v2166 = vsel %vm546, %v2164, %v2150
  %v2167 = vlaneseq
  %v2168 = vshrl.u32 %v2167, 7
  %v2169 = vsub.s32 2, %v2168
  %v2170 = vrot.slane %v1892, %v2169
  %v2171 = vmax.f32 %v2157, %v2170
  %v2172 = vmax.f32 %v2158, %v2170
  %v2173 = vsel %vm577, %v2171, %v2157
  %v2174 = vsel %vm578, %v2172, %v2158
  %v2175 = vlaneseq
  %v2176 = vshrl.u32 %v2175, 7
  %v2177 = vsub.s32 2, %v2176
  %v2178 = vrot.slane %v2142, %v2177
  %v2179 = vmax.f32 %v2165, %v2178
  %v2180 = vmax.f32 %v2166, %v2178
  %v2181 = vsel %vm577, %v2179, %v2165
  %v2182 = vsel %vm578, %v2180, %v2166
  %v2183 = vlaneseq
  %v2184 = vshrl.u32 %v2183, 7
  %v2185 = vsub.s32 3, %v2184
  %v2186 = vrot.slane %v1892, %v2185
  %v2187 = vmax.f32 %v2173, %v2186
  %v2188 = vmax.f32 %v2174, %v2186
  %v2189 = vsel %vm609, %v2187, %v2173
  %v2190 = vsel %vm610, %v2188, %v2174
  %v2191 = vlaneseq
  %v2192 = vshrl.u32 %v2191, 7
  %v2193 = vsub.s32 3, %v2192
  %v2194 = vrot.slane %v2142, %v2193
  %v2195 = vmax.f32 %v2181, %v2194
  %v2196 = vmax.f32 %v2182, %v2194
  %v2197 = vsel %vm609, %v2195, %v2181
  %v2198 = vsel %vm610, %v2196, %v2182
  %v2199 = vlaneseq
  %v2200 = vshrl.u32 %v2199, 7
  %v2201 = vsub.s32 4, %v2200
  %v2202 = vrot.slane %v1892, %v2201
  %v2203 = vmax.f32 %v2189, %v2202
  %v2204 = vmax.f32 %v2190, %v2202
  %v2205 = vsel %vm641, %v2203, %v2189
  %v2206 = vsel %vm642, %v2204, %v2190
  %v2207 = vlaneseq
  %v2208 = vshrl.u32 %v2207, 7
  %v2209 = vsub.s32 4, %v2208
  %v2210 = vrot.slane %v2142, %v2209
  %v2211 = vmax.f32 %v2197, %v2210
  %v2212 = vmax.f32 %v2198, %v2210
  %v2213 = vsel %vm641, %v2211, %v2197
  %v2214 = vsel %vm642, %v2212, %v2198
  %v2215 = vlaneseq
  %v2216 = vshrl.u32 %v2215, 7
  %v2217 = vsub.s32 5, %v2216
  %v2218 = vrot.slane %v1892, %v2217
  %v2219 = vmax.f32 %v2205, %v2218
  %v2220 = vmax.f32 %v2206, %v2218
  %v2221 = vsel %vm673, %v2219, %v2205
  %v2222 = vsel %vm674, %v2220, %v2206
  %v2223 = vlaneseq
  %v2224 = vshrl.u32 %v2223, 7
  %v2225 = vsub.s32 5, %v2224
  %v2226 = vrot.slane %v2142, %v2225
  %v2227 = vmax.f32 %v2213, %v2226
  %v2228 = vmax.f32 %v2214, %v2226
  %v2229 = vsel %vm673, %v2227, %v2213
  %v2230 = vsel %vm674, %v2228, %v2214
  %v2231 = vlaneseq
  %v2232 = vshrl.u32 %v2231, 7
  %v2233 = vsub.s32 6, %v2232
  %v2234 = vrot.slane %v1892, %v2233
  %v2235 = vmax.f32 %v2221, %v2234
  %v2236 = vmax.f32 %v2222, %v2234
  %v2237 = vsel %vm705, %v2235, %v2221
  %v2238 = vsel %vm706, %v2236, %v2222
  %v2239 = vlaneseq
  %v2240 = vshrl.u32 %v2239, 7
  %v2241 = vsub.s32 6, %v2240
  %v2242 = vrot.slane %v2142, %v2241
  %v2243 = vmax.f32 %v2229, %v2242
  %v2244 = vmax.f32 %v2230, %v2242
  %v2245 = vsel %vm705, %v2243, %v2229
  %v2246 = vsel %vm706, %v2244, %v2230
  %v2247 = vlaneseq
  %v2248 = vshrl.u32 %v2247, 7
  %v2249 = vsub.s32 7, %v2248
  %v2250 = vrot.slane %v1892, %v2249
  %v2251 = vmax.f32 %v2237, %v2250
  %v2252 = vmax.f32 %v2238, %v2250
  %v2253 = vsel %vm737, %v2251, %v2237
  %v2254 = vsel %vm738, %v2252, %v2238
  %v2255 = vlaneseq
  %v2256 = vshrl.u32 %v2255, 7
  %v2257 = vsub.s32 7, %v2256
  %v2258 = vrot.slane %v2142, %v2257
  %v2259 = vmax.f32 %v2245, %v2258
  %v2260 = vmax.f32 %v2246, %v2258
  %v2261 = vsel %vm737, %v2259, %v2245
  %v2262 = vsel %vm738, %v2260, %v2246
  %v2263 = vsub.f32 0.0, %v2261
  %v2264 = vsub.f32 0.0, %v2262
  %v2265 = vmul.f32 %v2263, %v226
  %v2266 = vmul.f32 %v2264, %v231
  %v2267 = vmul.f32 %v2253, %v226
  %v2268 = vmul.f32 %v2254, %v231
  %2271 = vrot.lane.b32.xlu0 %v2265, 64
  %v2272 = vpop.permute.xlu0 %2271
  %2273 = vrot.lane.b32.xlu0 %v2266, 64
  %v2274 = vpop.permute.xlu0 %2273
  %2279 = vrot.lane.b32.xlu0 %v2005, 64
  %v2280 = vpop.permute.xlu0 %2279
  %2281 = vrot.lane.b32.xlu0 %v2006, 64
  %v2282 = vpop.permute.xlu0 %2281
  %v2285 = vsel %vm782, %v1979, %v2272
  %v2286 = vsel %vm782, %v1980, %v2274
  %v2287 = vsel %vm782, %v2267, %v2280
  %v2288 = vsel %vm782, %v2268, %v2282
  %v2289 = vmul.f32 %v791, %v2285
  %v2290 = vmul.f32 %v791, %v2287
  %v2291 = vmul.f32 %v796, %v2286
  %v2292 = vmul.f32 %v796, %v2288
  %v2293 = vmul.f32 %v803, %v2285
  %v2294 = vmul.f32 %v803, %v2287
  %v2295 = vmul.f32 %v808, %v2286
  %v2296 = vmul.f32 %v808, %v2288
  %v2297 = vpack.c.bf16 %v2286, %v2285
  %v2298 = vpack.c.bf16 %v2288, %v2287
  %v2299 = vpack.c.bf16 %v2291, %v2289
  %v2300 = vpack.c.bf16 %v2292, %v2290
  %v2301 = vpack.c.bf16 %v2295, %v2293
  %v2302 = vpack.c.bf16 %v2296, %v2294
  %v2303 = vld [vmem:[%s14] sm:$0xf]
  %v2304 = vld [vmem:[%s14 + $0x4] sm:$0xf]
  %v2305 = vld [vmem:[%s14 + $0x8] sm:$0xf]
  %v2306 = vld [vmem:[%s14 + $0xc] sm:$0xf]
  %v2307 = vld [vmem:[%s14 + $0x10] sm:$0xf]
  %v2308 = vld [vmem:[%s14 + $0x14] sm:$0xf]
  %v2309 = vld [vmem:[%s14 + $0x18] sm:$0xf]
  %v2310 = vld [vmem:[%s14 + $0x1c] sm:$0xf]
  %v2311 = vld [vmem:[%s14 + $0x20] sm:$0xf]
  %v2312 = vld [vmem:[%s14 + $0x24] sm:$0xf]
  %v2313 = vld [vmem:[%s14 + $0x28] sm:$0xf]
  %v2314 = vld [vmem:[%s14 + $0x2c] sm:$0xf]
  %v2315 = vld [vmem:[%s14 + $0x30] sm:$0xf]
  %v2316 = vld [vmem:[%s14 + $0x34] sm:$0xf]
  %v2317 = vld [vmem:[%s14 + $0x38] sm:$0xf]
  %v2318 = vld [vmem:[%s14 + $0x3c] sm:$0xf]
  %v2319 = vld [vmem:[%s14 + $0x40] sm:$0xf]
  %v2320 = vld [vmem:[%s14 + $0x44] sm:$0xf]
  %v2321 = vld [vmem:[%s14 + $0x48] sm:$0xf]
  %v2322 = vld [vmem:[%s14 + $0x4c] sm:$0xf]
  %v2323 = vld [vmem:[%s14 + $0x50] sm:$0xf]
  %v2324 = vld [vmem:[%s14 + $0x54] sm:$0xf]
  %v2325 = vld [vmem:[%s14 + $0x58] sm:$0xf]
  %v2326 = vld [vmem:[%s14 + $0x5c] sm:$0xf]
  %v2327 = vld [vmem:[%s14 + $0x60] sm:$0xf]
  %v2328 = vld [vmem:[%s14 + $0x64] sm:$0xf]
  %v2329 = vld [vmem:[%s14 + $0x68] sm:$0xf]
  %v2330 = vld [vmem:[%s14 + $0x6c] sm:$0xf]
  %v2331 = vld [vmem:[%s14 + $0x70] sm:$0xf]
  %v2332 = vld [vmem:[%s14 + $0x74] sm:$0xf]
  %v2333 = vld [vmem:[%s14 + $0x78] sm:$0xf]
  %v2334 = vld [vmem:[%s14 + $0x7c] sm:$0xf]
  %v2335 = vld [vmem:[%s14 + $0x80] sm:$0xf]
  %v2336 = vld [vmem:[%s14 + $0x84] sm:$0xf]
  %v2337 = vld [vmem:[%s14 + $0x88] sm:$0xf]
  %v2338 = vld [vmem:[%s14 + $0x8c] sm:$0xf]
  %v2339 = vld [vmem:[%s14 + $0x90] sm:$0xf]
  %v2340 = vld [vmem:[%s14 + $0x94] sm:$0xf]
  %v2341 = vld [vmem:[%s14 + $0x98] sm:$0xf]
  %v2342 = vld [vmem:[%s14 + $0x9c] sm:$0xf]
  %v2343 = vld [vmem:[%s14 + $0xa0] sm:$0xf]
  %v2344 = vld [vmem:[%s14 + $0xa4] sm:$0xf]
  %v2345 = vld [vmem:[%s14 + $0xa8] sm:$0xf]
  %v2346 = vld [vmem:[%s14 + $0xac] sm:$0xf]
  %v2347 = vld [vmem:[%s14 + $0xb0] sm:$0xf]
  %v2348 = vld [vmem:[%s14 + $0xb4] sm:$0xf]
  %v2349 = vld [vmem:[%s14 + $0xb8] sm:$0xf]
  %v2350 = vld [vmem:[%s14 + $0xbc] sm:$0xf]
  %v2351 = vld [vmem:[%s14 + $0xc0] sm:$0xf]
  %v2352 = vld [vmem:[%s14 + $0xc4] sm:$0xf]
  %v2353 = vld [vmem:[%s14 + $0xc8] sm:$0xf]
  %v2354 = vld [vmem:[%s14 + $0xcc] sm:$0xf]
  %v2355 = vld [vmem:[%s14 + $0xd0] sm:$0xf]
  %v2356 = vld [vmem:[%s14 + $0xd4] sm:$0xf]
  %v2357 = vld [vmem:[%s14 + $0xd8] sm:$0xf]
  %v2358 = vld [vmem:[%s14 + $0xdc] sm:$0xf]
  %v2359 = vld [vmem:[%s14 + $0xe0] sm:$0xf]
  %v2360 = vld [vmem:[%s14 + $0xe4] sm:$0xf]
  %v2361 = vld [vmem:[%s14 + $0xe8] sm:$0xf]
  %v2362 = vld [vmem:[%s14 + $0xec] sm:$0xf]
  %v2363 = vld [vmem:[%s14 + $0xf0] sm:$0xf]
  %v2364 = vld [vmem:[%s14 + $0xf4] sm:$0xf]
  %v2365 = vld [vmem:[%s14 + $0xf8] sm:$0xf]
  %v2366 = vld [vmem:[%s14 + $0xfc] sm:$0xf]
  %v2367 = vld [vmem:[%s14 + $0x100] sm:$0xf]
  %v2368 = vld [vmem:[%s14 + $0x104] sm:$0xf]
  %v2369 = vld [vmem:[%s14 + $0x108] sm:$0xf]
  %v2370 = vld [vmem:[%s14 + $0x10c] sm:$0xf]
  %v2371 = vld [vmem:[%s14 + $0x110] sm:$0xf]
  %v2372 = vld [vmem:[%s14 + $0x114] sm:$0xf]
  %v2373 = vld [vmem:[%s14 + $0x118] sm:$0xf]
  %v2374 = vld [vmem:[%s14 + $0x11c] sm:$0xf]
  %v2375 = vld [vmem:[%s14 + $0x120] sm:$0xf]
  %v2376 = vld [vmem:[%s14 + $0x124] sm:$0xf]
  %v2377 = vld [vmem:[%s14 + $0x128] sm:$0xf]
  %v2378 = vld [vmem:[%s14 + $0x12c] sm:$0xf]
  %v2379 = vld [vmem:[%s14 + $0x130] sm:$0xf]
  %v2380 = vld [vmem:[%s14 + $0x134] sm:$0xf]
  %v2381 = vld [vmem:[%s14 + $0x138] sm:$0xf]
  %v2382 = vld [vmem:[%s14 + $0x13c] sm:$0xf]
  %v2383 = vld [vmem:[%s14 + $0x140] sm:$0xf]
  %v2384 = vld [vmem:[%s14 + $0x144] sm:$0xf]
  %v2385 = vld [vmem:[%s14 + $0x148] sm:$0xf]
  %v2386 = vld [vmem:[%s14 + $0x14c] sm:$0xf]
  %v2387 = vld [vmem:[%s14 + $0x150] sm:$0xf]
  %v2388 = vld [vmem:[%s14 + $0x154] sm:$0xf]
  %v2389 = vld [vmem:[%s14 + $0x158] sm:$0xf]
  %v2390 = vld [vmem:[%s14 + $0x15c] sm:$0xf]
  %v2391 = vld [vmem:[%s14 + $0x160] sm:$0xf]
  %v2392 = vld [vmem:[%s14 + $0x164] sm:$0xf]
  %v2393 = vld [vmem:[%s14 + $0x168] sm:$0xf]
  %v2394 = vld [vmem:[%s14 + $0x16c] sm:$0xf]
  %v2395 = vld [vmem:[%s14 + $0x170] sm:$0xf]
  %v2396 = vld [vmem:[%s14 + $0x174] sm:$0xf]
  %v2397 = vld [vmem:[%s14 + $0x178] sm:$0xf]
  %v2398 = vld [vmem:[%s14 + $0x17c] sm:$0xf]
  %v2399 = vld [vmem:[%s15] sm:$0x1]
  %v2401 = vlaneseq
  %v2402 = vshrl.u32 %v2401, 7
  %v2403 = vsub.s32 0, %v2402
  %v2404 = vrot.slane %v2399, %v2403
  %v2502 = vunpack.c.l.b16 %v2303
  %v2503 = vunpack.c.l.b16 %v2304
  %v2504 = vunpack.c.l.b16 %v2305
  %v2505 = vunpack.c.l.b16 %v2306
  %v2506 = vunpack.c.l.b16 %v2307
  %v2507 = vunpack.c.l.b16 %v2308
  %v2508 = vunpack.c.l.b16 %v2309
  %v2509 = vunpack.c.l.b16 %v2310
  %v2510 = vunpack.c.l.b16 %v2311
  %v2511 = vunpack.c.l.b16 %v2312
  %v2512 = vunpack.c.l.b16 %v2313
  %v2513 = vunpack.c.l.b16 %v2314
  %v2514 = vunpack.c.l.b16 %v2315
  %v2515 = vunpack.c.l.b16 %v2316
  %v2516 = vunpack.c.l.b16 %v2317
  %v2517 = vunpack.c.l.b16 %v2318
  %v2518 = vunpack.c.l.b16 %v2319
  %v2519 = vunpack.c.l.b16 %v2320
  %v2520 = vunpack.c.l.b16 %v2321
  %v2521 = vunpack.c.l.b16 %v2322
  %v2522 = vunpack.c.l.b16 %v2323
  %v2523 = vunpack.c.l.b16 %v2324
  %v2524 = vunpack.c.l.b16 %v2325
  %v2525 = vunpack.c.l.b16 %v2326
  %v2526 = vunpack.c.l.b16 %v2327
  %v2527 = vunpack.c.l.b16 %v2328
  %v2528 = vunpack.c.l.b16 %v2329
  %v2529 = vunpack.c.l.b16 %v2330
  %v2530 = vunpack.c.l.b16 %v2331
  %v2531 = vunpack.c.l.b16 %v2332
  %v2532 = vunpack.c.l.b16 %v2333
  %v2533 = vunpack.c.l.b16 %v2334
  %v2534 = vunpack.c.l.b16 %v2335
  %v2535 = vunpack.c.l.b16 %v2336
  %v2536 = vunpack.c.l.b16 %v2337
  %v2537 = vunpack.c.l.b16 %v2338
  %v2538 = vunpack.c.l.b16 %v2339
  %v2539 = vunpack.c.l.b16 %v2340
  %v2540 = vunpack.c.l.b16 %v2341
  %v2541 = vunpack.c.l.b16 %v2342
  %v2542 = vunpack.c.l.b16 %v2343
  %v2543 = vunpack.c.l.b16 %v2344
  %v2544 = vunpack.c.l.b16 %v2345
  %v2545 = vunpack.c.l.b16 %v2346
  %v2546 = vunpack.c.l.b16 %v2347
  %v2547 = vunpack.c.l.b16 %v2348
  %v2548 = vunpack.c.l.b16 %v2349
  %v2549 = vunpack.c.l.b16 %v2350
  %v2550 = vunpack.c.l.b16 %v2351
  %v2551 = vunpack.c.l.b16 %v2352
  %v2552 = vunpack.c.l.b16 %v2353
  %v2553 = vunpack.c.l.b16 %v2354
  %v2554 = vunpack.c.l.b16 %v2355
  %v2555 = vunpack.c.l.b16 %v2356
  %v2556 = vunpack.c.l.b16 %v2357
  %v2557 = vunpack.c.l.b16 %v2358
  %v2558 = vunpack.c.l.b16 %v2359
  %v2559 = vunpack.c.l.b16 %v2360
  %v2560 = vunpack.c.l.b16 %v2361
  %v2561 = vunpack.c.l.b16 %v2362
  %v2562 = vunpack.c.l.b16 %v2363
  %v2563 = vunpack.c.l.b16 %v2364
  %v2564 = vunpack.c.l.b16 %v2365
  %v2565 = vunpack.c.l.b16 %v2366
  %v2566 = vunpack.c.l.b16 %v2367
  %v2567 = vunpack.c.l.b16 %v2368
  %v2568 = vunpack.c.l.b16 %v2369
  %v2569 = vunpack.c.l.b16 %v2370
  %v2570 = vunpack.c.l.b16 %v2371
  %v2571 = vunpack.c.l.b16 %v2372
  %v2572 = vunpack.c.l.b16 %v2373
  %v2573 = vunpack.c.l.b16 %v2374
  %v2574 = vunpack.c.l.b16 %v2375
  %v2575 = vunpack.c.l.b16 %v2376
  %v2576 = vunpack.c.l.b16 %v2377
  %v2577 = vunpack.c.l.b16 %v2378
  %v2578 = vunpack.c.l.b16 %v2379
  %v2579 = vunpack.c.l.b16 %v2380
  %v2580 = vunpack.c.l.b16 %v2381
  %v2581 = vunpack.c.l.b16 %v2382
  %v2582 = vunpack.c.l.b16 %v2383
  %v2583 = vunpack.c.l.b16 %v2384
  %v2584 = vunpack.c.l.b16 %v2385
  %v2585 = vunpack.c.l.b16 %v2386
  %v2586 = vunpack.c.l.b16 %v2387
  %v2587 = vunpack.c.l.b16 %v2388
  %v2588 = vunpack.c.l.b16 %v2389
  %v2589 = vunpack.c.l.b16 %v2390
  %v2590 = vunpack.c.l.b16 %v2391
  %v2591 = vunpack.c.l.b16 %v2392
  %v2592 = vunpack.c.l.b16 %v2393
  %v2593 = vunpack.c.l.b16 %v2394
  %v2594 = vunpack.c.l.b16 %v2395
  %v2595 = vunpack.c.l.b16 %v2396
  %v2596 = vunpack.c.l.b16 %v2397
  %v2597 = vunpack.c.l.b16 %v2398
  %v2598 = vpack.c.b16 %v2503, %v2502
  %v2599 = vpack.c.b16 %v2505, %v2504
  %v2600 = vpack.c.b16 %v2507, %v2506
  %v2601 = vpack.c.b16 %v2509, %v2508
  %v2602 = vpack.c.b16 %v2511, %v2510
  %v2603 = vpack.c.b16 %v2513, %v2512
  %v2604 = vpack.c.b16 %v2515, %v2514
  %v2605 = vpack.c.b16 %v2517, %v2516
  %v2606 = vpack.c.b16 %v2519, %v2518
  %v2607 = vpack.c.b16 %v2521, %v2520
  %v2608 = vpack.c.b16 %v2523, %v2522
  %v2609 = vpack.c.b16 %v2525, %v2524
  %v2610 = vpack.c.b16 %v2527, %v2526
  %v2611 = vpack.c.b16 %v2529, %v2528
  %v2612 = vpack.c.b16 %v2531, %v2530
  %v2613 = vpack.c.b16 %v2533, %v2532
  %v2614 = vpack.c.b16 %v2535, %v2534
  %v2615 = vpack.c.b16 %v2537, %v2536
  %v2616 = vpack.c.b16 %v2539, %v2538
  %v2617 = vpack.c.b16 %v2541, %v2540
  %v2618 = vpack.c.b16 %v2543, %v2542
  %v2619 = vpack.c.b16 %v2545, %v2544
  %v2620 = vpack.c.b16 %v2547, %v2546
  %v2621 = vpack.c.b16 %v2549, %v2548
  %v2622 = vpack.c.b16 %v2551, %v2550
  %v2623 = vpack.c.b16 %v2553, %v2552
  %v2624 = vpack.c.b16 %v2555, %v2554
  %v2625 = vpack.c.b16 %v2557, %v2556
  %v2626 = vpack.c.b16 %v2559, %v2558
  %v2627 = vpack.c.b16 %v2561, %v2560
  %v2628 = vpack.c.b16 %v2563, %v2562
  %v2629 = vpack.c.b16 %v2565, %v2564
  %v2630 = vpack.c.b16 %v2567, %v2566
  %v2631 = vpack.c.b16 %v2569, %v2568
  %v2632 = vpack.c.b16 %v2571, %v2570
  %v2633 = vpack.c.b16 %v2573, %v2572
  %v2634 = vpack.c.b16 %v2575, %v2574
  %v2635 = vpack.c.b16 %v2577, %v2576
  %v2636 = vpack.c.b16 %v2579, %v2578
  %v2637 = vpack.c.b16 %v2581, %v2580
  %v2638 = vpack.c.b16 %v2583, %v2582
  %v2639 = vpack.c.b16 %v2585, %v2584
  %v2640 = vpack.c.b16 %v2587, %v2586
  %v2641 = vpack.c.b16 %v2589, %v2588
  %v2642 = vpack.c.b16 %v2591, %v2590
  %v2643 = vpack.c.b16 %v2593, %v2592
  %v2644 = vpack.c.b16 %v2595, %v2594
  %v2645 = vpack.c.b16 %v2597, %v2596
  %2694 = vmatprep.subr.bf16.mxu0 0
  %2695 = vmatpush1.bf16.msra.mxu0 %v2598
  %2696 = vmatprep.subr.bf16.mxu0 0
  %2697 = vmatpush1.bf16.msra.mxu0 %v2599
  %2698 = vmatprep.subr.bf16.mxu0 0
  %2699 = vmatpush1.bf16.msra.mxu0 %v2600
  %2700 = vmatprep.subr.bf16.mxu0 0
  %2701 = vmatpush1.bf16.msra.mxu0 %v2601
  %2702 = vmatprep.subr.bf16.mxu0 0
  %2703 = vmatpush1.bf16.msra.mxu0 %v2602
  %2704 = vmatprep.subr.bf16.mxu0 0
  %2705 = vmatpush1.bf16.msra.mxu0 %v2603
  %2706 = vmatprep.subr.bf16.mxu0 0
  %2707 = vmatpush1.bf16.msra.mxu0 %v2604
  %2708 = vmatprep.subr.bf16.mxu0 0
  %2709 = vmatpush1.bf16.msra.mxu0 %v2605
  %2710 = vmatprep.subr.bf16.mxu0 0
  %2711 = vmatpush1.bf16.msra.mxu0 %v2606
  %2712 = vmatprep.subr.bf16.mxu0 0
  %2713 = vmatpush1.bf16.msra.mxu0 %v2607
  %2714 = vmatprep.subr.bf16.mxu0 0
  %2715 = vmatpush1.bf16.msra.mxu0 %v2608
  %2716 = vmatprep.subr.bf16.mxu0 0
  %2717 = vmatpush1.bf16.msra.mxu0 %v2609
  %2718 = vmatprep.subr.bf16.mxu0 0
  %2719 = vmatpush1.bf16.msra.mxu0 %v2610
  %2720 = vmatprep.subr.bf16.mxu0 0
  %2721 = vmatpush1.bf16.msra.mxu0 %v2611
  %2722 = vmatprep.subr.bf16.mxu0 0
  %2723 = vmatpush1.bf16.msra.mxu0 %v2612
  %2724 = vmatprep.subr.bf16.mxu0 0
  %2725 = vmatpush1.bf16.msra.mxu0 %v2613
  %2726 = vmatprep.mubr.bf16.mxu0 %v2298
  %2727 = vmatmul.mubr.bf16.gmra.mrb[0].mxu0 %v2297
  %v2728 = vpop.f32.mrb[0].mxu0
  %v2729 = vadd.f32 %v2404, %v2728
  %v2730 = vpop.f32.mrb[0].mxu0
  %v2731 = vpop.f32.mrb[0].mxu0
  %v2732 = vadd.f32 %v2404, %v2731
  %v2733 = vpop.f32.mrb[0].mxu0
  %2734 = vdwg.mxu0
  %2735 = vmatprep.subr.bf16.mxu0 0
  %2736 = vmatpush1.bf16.msra.mxu0 %v2614
  %2737 = vmatprep.subr.bf16.mxu0 0
  %2738 = vmatpush1.bf16.msra.mxu0 %v2615
  %2739 = vmatprep.subr.bf16.mxu0 0
  %2740 = vmatpush1.bf16.msra.mxu0 %v2616
  %2741 = vmatprep.subr.bf16.mxu0 0
  %2742 = vmatpush1.bf16.msra.mxu0 %v2617
  %2743 = vmatprep.subr.bf16.mxu0 0
  %2744 = vmatpush1.bf16.msra.mxu0 %v2618
  %2745 = vmatprep.subr.bf16.mxu0 0
  %2746 = vmatpush1.bf16.msra.mxu0 %v2619
  %2747 = vmatprep.subr.bf16.mxu0 0
  %2748 = vmatpush1.bf16.msra.mxu0 %v2620
  %2749 = vmatprep.subr.bf16.mxu0 0
  %2750 = vmatpush1.bf16.msra.mxu0 %v2621
  %2751 = vmatprep.subr.bf16.mxu0 0
  %2752 = vmatpush1.bf16.msra.mxu0 %v2622
  %2753 = vmatprep.subr.bf16.mxu0 0
  %2754 = vmatpush1.bf16.msra.mxu0 %v2623
  %2755 = vmatprep.subr.bf16.mxu0 0
  %2756 = vmatpush1.bf16.msra.mxu0 %v2624
  %2757 = vmatprep.subr.bf16.mxu0 0
  %2758 = vmatpush1.bf16.msra.mxu0 %v2625
  %2759 = vmatprep.subr.bf16.mxu0 0
  %2760 = vmatpush1.bf16.msra.mxu0 %v2626
  %2761 = vmatprep.subr.bf16.mxu0 0
  %2762 = vmatpush1.bf16.msra.mxu0 %v2627
  %2763 = vmatprep.subr.bf16.mxu0 0
  %2764 = vmatpush1.bf16.msra.mxu0 %v2628
  %2765 = vmatprep.subr.bf16.mxu0 0
  %2766 = vmatpush1.bf16.msra.mxu0 %v2629
  %2767 = vmatprep.mubr.bf16.mxu0 %v2300
  %2768 = vmatmul.mubr.bf16.gmra.mrb[0].mxu0 %v2299
  %v2769 = vpop.f32.mrb[0].mxu0
  %v2770 = vadd.f32 %v2729, %v2769
  %v2771 = vpop.f32.mrb[0].mxu0
  %v2772 = vpop.f32.mrb[0].mxu0
  %v2773 = vadd.f32 %v2732, %v2772
  %v2774 = vpop.f32.mrb[0].mxu0
  %2775 = vdwg.mxu0
  %2776 = vmatprep.subr.bf16.mxu0 0
  %2777 = vmatpush1.bf16.msra.mxu0 %v2630
  %2778 = vmatprep.subr.bf16.mxu0 0
  %2779 = vmatpush1.bf16.msra.mxu0 %v2631
  %2780 = vmatprep.subr.bf16.mxu0 0
  %2781 = vmatpush1.bf16.msra.mxu0 %v2632
  %2782 = vmatprep.subr.bf16.mxu0 0
  %2783 = vmatpush1.bf16.msra.mxu0 %v2633
  %2784 = vmatprep.subr.bf16.mxu0 0
  %2785 = vmatpush1.bf16.msra.mxu0 %v2634
  %2786 = vmatprep.subr.bf16.mxu0 0
  %2787 = vmatpush1.bf16.msra.mxu0 %v2635
  %2788 = vmatprep.subr.bf16.mxu0 0
  %2789 = vmatpush1.bf16.msra.mxu0 %v2636
  %2790 = vmatprep.subr.bf16.mxu0 0
  %2791 = vmatpush1.bf16.msra.mxu0 %v2637
  %2792 = vmatprep.subr.bf16.mxu0 0
  %2793 = vmatpush1.bf16.msra.mxu0 %v2638
  %2794 = vmatprep.subr.bf16.mxu0 0
  %2795 = vmatpush1.bf16.msra.mxu0 %v2639
  %2796 = vmatprep.subr.bf16.mxu0 0
  %2797 = vmatpush1.bf16.msra.mxu0 %v2640
  %2798 = vmatprep.subr.bf16.mxu0 0
  %2799 = vmatpush1.bf16.msra.mxu0 %v2641
  %2800 = vmatprep.subr.bf16.mxu0 0
  %2801 = vmatpush1.bf16.msra.mxu0 %v2642
  %2802 = vmatprep.subr.bf16.mxu0 0
  %2803 = vmatpush1.bf16.msra.mxu0 %v2643
  %2804 = vmatprep.subr.bf16.mxu0 0
  %2805 = vmatpush1.bf16.msra.mxu0 %v2644
  %2806 = vmatprep.subr.bf16.mxu0 0
  %2807 = vmatpush1.bf16.msra.mxu0 %v2645
  %2808 = vmatprep.mubr.bf16.mxu0 %v2302
  %2809 = vmatmul.mubr.bf16.gmra.mrb[0].mxu0 %v2301
  %v2810 = vpop.f32.mrb[0].mxu0
  %v2811 = vadd.f32 %v2770, %v2810
  %v2812 = vpop.f32.mrb[0].mxu0
  %v2813 = vpop.f32.mrb[0].mxu0
  %v2814 = vadd.f32 %v2773, %v2813
  %v2815 = vpop.f32.mrb[0].mxu0
  %2816 = vdwg.mxu0
  %v2817 = vmax.f32 %v2811, 0.0
  %v2818 = vmax.f32 %v2814, 0.0
  %v2819 = vsel %vm779, %v2817, 0.0
  %v2820 = vsel %vm779, %v2818, 0.0
  %v2821 = vadd.f32 %v2819, %v2820
  %v2822 = vrot.slane %v2821, 4
  %v2823 = vadd.f32 %v2821, %v2822
  %v2824 = vrot.slane %v2823, 2
  %v2825 = vadd.f32 %v2823, %v2824
  %v2826 = vrot.slane %v2825, 1
  %v2827 = vadd.f32 %v2825, %v2826
  %v2828 = vmul.f32 %v2827, %v1107
  %v2829 = vmul.f32 %v2817, %v2817
  %v2830 = vmul.f32 %v2818, %v2818
  %v2831 = vsel %vm779, %v2829, 0.0
  %v2832 = vsel %vm779, %v2830, 0.0
  %v2833 = vadd.f32 %v2831, %v2832
  %v2834 = vrot.slane %v2833, 4
  %v2835 = vadd.f32 %v2833, %v2834
  %v2836 = vrot.slane %v2835, 2
  %v2837 = vadd.f32 %v2835, %v2836
  %v2838 = vrot.slane %v2837, 1
  %v2839 = vadd.f32 %v2837, %v2838
  %v2840 = vmul.f32 %v2839, %v1107
  %v2841 = vmul.f32 %v2828, %v2828
  %v2842 = vsub.f32 %v2840, %v2841
  %v2843 = vmax.f32 %v2842, 0.0
  %v2844 = vsub.f32 %v2817, %v2828
  %v2845 = vsub.f32 %v2818, %v2828
  %v2846 = vadd.f32 %v2843, 1e-05
  %v2847 = vrsqrt.pop %v2846
  %v2848 = vmul.f32 %v2844, %v2847
  %v2849 = vmul.f32 %v2845, %v2847
  %v2850 = vld [vmem:[%s16] sm:$0x1]
  %v2852 = vlaneseq
  %v2853 = vshrl.u32 %v2852, 7
  %v2854 = vsub.s32 0, %v2853
  %v2855 = vrot.slane %v2850, %v2854
  %v2857 = vmul.f32 %v2848, %v2855
  %v2858 = vmul.f32 %v2849, %v2855
  %v2859 = vld [vmem:[%s17] sm:$0x1]
  %v2861 = vlaneseq
  %v2862 = vshrl.u32 %v2861, 7
  %v2863 = vsub.s32 0, %v2862
  %v2864 = vrot.slane %v2859, %v2863
  %v2866 = vadd.f32 %v2857, %v2864
  %v2867 = vadd.f32 %v2858, %v2864
  %v2868 = vpack.c.bf16 %v2867, %v2866
  %2869 = vmatprep.subr.bf16.mxu0 0
  %2870 = vmatpush1.bf16.msra.mxu0 %v2868
  %2871 = vmatprep.subr.bf16.mxu0 0
  %2872 = vmatpush1.bf16.msra.mxu0 0
  %2873 = vmatprep.subr.bf16.mxu0 0
  %2874 = vmatpush1.bf16.msra.mxu0 0
  %2875 = vmatprep.subr.bf16.mxu0 0
  %2876 = vmatpush1.bf16.msra.mxu0 0
  %2877 = vmatprep.subr.bf16.mxu0 0
  %2878 = vmatpush1.bf16.msra.mxu0 0
  %2879 = vmatprep.subr.bf16.mxu0 0
  %2880 = vmatpush1.bf16.msra.mxu0 0
  %2881 = vmatprep.subr.bf16.mxu0 0
  %2882 = vmatpush1.bf16.msra.mxu0 0
  %2883 = vmatprep.subr.bf16.mxu0 0
  %2884 = vmatpush1.bf16.msra.mxu0 0
  %2885 = vmatprep.subr.bf16.mxu0 0
  %2886 = vmatpush1.bf16.msra.mxu0 0
  %2887 = vmatprep.subr.bf16.mxu0 0
  %2888 = vmatpush1.bf16.msra.mxu0 0
  %2889 = vmatprep.subr.bf16.mxu0 0
  %2890 = vmatpush1.bf16.msra.mxu0 0
  %2891 = vmatprep.subr.bf16.mxu0 0
  %2892 = vmatpush1.bf16.msra.mxu0 0
  %2893 = vmatprep.subr.bf16.mxu0 0
  %2894 = vmatpush1.bf16.msra.mxu0 0
  %2895 = vmatprep.subr.bf16.mxu0 0
  %2896 = vmatpush1.bf16.msra.mxu0 0
  %2897 = vmatprep.subr.bf16.mxu0 0
  %2898 = vmatpush1.bf16.msra.mxu0 0
  %2899 = vmatprep.subr.bf16.mxu0 0
  %2900 = vmatpush1.bf16.msra.mxu0 0
  %2901 = vmatprep.mubr.bf16.mxu0 0
  %2902 = vmatmul.mubr.bf16.gmra.mrb[0].mxu0 %v100
  %v2903 = vpop.f32.mrb[0].mxu0
  %v2904 = vadd.f32 0.0, %v2903
  %v2905 = vpop.f32.mrb[0].mxu0
  %v2906 = vpop.f32.mrb[0].mxu0
  %v2907 = vadd.f32 0.0, %v2906
  %v2908 = vpop.f32.mrb[0].mxu0
  %2909 = vdwg.mxu0
  %v2910 = vmul.f32 %v2866, %v2866
  %v2911 = vmul.f32 %v2867, %v2867
  %v2912 = vpack.c.bf16 %v2911, %v2910
  %2913 = vmatprep.subr.bf16.mxu0 0
  %2914 = vmatpush1.bf16.msra.mxu0 %v2912
  %2915 = vmatprep.subr.bf16.mxu0 0
  %2916 = vmatpush1.bf16.msra.mxu0 0
  %2917 = vmatprep.subr.bf16.mxu0 0
  %2918 = vmatpush1.bf16.msra.mxu0 0
  %2919 = vmatprep.subr.bf16.mxu0 0
  %2920 = vmatpush1.bf16.msra.mxu0 0
  %2921 = vmatprep.subr.bf16.mxu0 0
  %2922 = vmatpush1.bf16.msra.mxu0 0
  %2923 = vmatprep.subr.bf16.mxu0 0
  %2924 = vmatpush1.bf16.msra.mxu0 0
  %2925 = vmatprep.subr.bf16.mxu0 0
  %2926 = vmatpush1.bf16.msra.mxu0 0
  %2927 = vmatprep.subr.bf16.mxu0 0
  %2928 = vmatpush1.bf16.msra.mxu0 0
  %2929 = vmatprep.subr.bf16.mxu0 0
  %2930 = vmatpush1.bf16.msra.mxu0 0
  %2931 = vmatprep.subr.bf16.mxu0 0
  %2932 = vmatpush1.bf16.msra.mxu0 0
  %2933 = vmatprep.subr.bf16.mxu0 0
  %2934 = vmatpush1.bf16.msra.mxu0 0
  %2935 = vmatprep.subr.bf16.mxu0 0
  %2936 = vmatpush1.bf16.msra.mxu0 0
  %2937 = vmatprep.subr.bf16.mxu0 0
  %2938 = vmatpush1.bf16.msra.mxu0 0
  %2939 = vmatprep.subr.bf16.mxu0 0
  %2940 = vmatpush1.bf16.msra.mxu0 0
  %2941 = vmatprep.subr.bf16.mxu0 0
  %2942 = vmatpush1.bf16.msra.mxu0 0
  %2943 = vmatprep.subr.bf16.mxu0 0
  %2944 = vmatpush1.bf16.msra.mxu0 0
  %2945 = vmatprep.mubr.bf16.mxu0 0
  %2946 = vmatmul.mubr.bf16.gmra.mrb[0].mxu0 %v100
  %v2947 = vpop.f32.mrb[0].mxu0
  %v2948 = vadd.f32 0.0, %v2947
  %v2949 = vpop.f32.mrb[0].mxu0
  %v2950 = vpop.f32.mrb[0].mxu0
  %v2951 = vadd.f32 0.0, %v2950
  %v2952 = vpop.f32.mrb[0].mxu0
  %2953 = vdwg.mxu0
  %v2954 = vmul.f32 %v2904, %v190
  %v2955 = vmul.f32 %v2907, %v195
  %v2956 = vmul.f32 %v2948, %v190
  %v2957 = vmul.f32 %v2951, %v195
  %v2958 = vmul.f32 %v2954, %v2954
  %v2959 = vmul.f32 %v2955, %v2955
  %v2960 = vsub.f32 %v2956, %v2958
  %v2961 = vsub.f32 %v2957, %v2959
  %v2962 = vmax.f32 %v2960, 0.0
  %v2963 = vmax.f32 %v2961, 0.0
  %v2964 = vadd.f32 %v2962, 1e-05
  %v2965 = vadd.f32 %v2963, 1e-05
  %v2966 = vrsqrt.pop %v2964
  %v2967 = vmul.f32 %v2964, %v2966
  %vm2968 = vcmp.eq.f32.partialorder %v2964, inf
  %v2969 = vsel %vm2968, %v2964, %v2967
  %vm2970 = vcmp.eq.f32.partialorder %v2964, 0.0
  %v2971 = vand.u32 %v2964, 2147483648
  %v2972 = vsel %vm2970, %v2971, %v2969
  %v2973 = vrsqrt.pop %v2965
  %v2974 = vmul.f32 %v2965, %v2973
  %vm2975 = vcmp.eq.f32.partialorder %v2965, inf
  %v2976 = vsel %vm2975, %v2965, %v2974
  %vm2977 = vcmp.eq.f32.partialorder %v2965, 0.0
  %v2978 = vand.u32 %v2965, 2147483648
  %v2979 = vsel %vm2977, %v2978, %v2976
  %v2980 = vmul.f32 %v2972, %v226
  %v2981 = vmul.f32 %v2979, %v231
  %v2982 = vlaneseq
  %v2983 = vshrl.u32 %v2982, 7
  %v2984 = vsub.s32 0, %v2983
  %v2985 = vrot.slane %v2866, %v2984
  %v2986 = vmax.f32 %v2985, -1e+30
  %v2987 = vsel %vm256, %v2986, -1e+30
  %v2988 = vsel %vm257, %v2986, -1e+30
  %v2989 = vsub.f32 0.0, %v2866
  %v2990 = vlaneseq
  %v2991 = vshrl.u32 %v2990, 7
  %v2992 = vsub.s32 0, %v2991
  %v2993 = vrot.slane %v2989, %v2992
  %v2994 = vmax.f32 %v2993, -1e+30
  %v2995 = vsel %vm256, %v2994, -1e+30
  %v2996 = vsel %vm257, %v2994, -1e+30
  %v2997 = vlaneseq
  %v2998 = vshrl.u32 %v2997, 7
  %v2999 = vsub.s32 1, %v2998
  %v3000 = vrot.slane %v2866, %v2999
  %v3001 = vmax.f32 %v2987, %v3000
  %v3002 = vmax.f32 %v2988, %v3000
  %v3003 = vsel %vm288, %v3001, %v2987
  %v3004 = vsel %vm289, %v3002, %v2988
  %v3005 = vlaneseq
  %v3006 = vshrl.u32 %v3005, 7
  %v3007 = vsub.s32 1, %v3006
  %v3008 = vrot.slane %v2989, %v3007
  %v3009 = vmax.f32 %v2995, %v3008
  %v3010 = vmax.f32 %v2996, %v3008
  %v3011 = vsel %vm288, %v3009, %v2995
  %v3012 = vsel %vm289, %v3010, %v2996
  %v3013 = vlaneseq
  %v3014 = vshrl.u32 %v3013, 7
  %v3015 = vsub.s32 2, %v3014
  %v3016 = vrot.slane %v2866, %v3015
  %v3017 = vmax.f32 %v3003, %v3016
  %v3018 = vmax.f32 %v3004, %v3016
  %v3019 = vsel %vm320, %v3017, %v3003
  %v3020 = vsel %vm321, %v3018, %v3004
  %v3021 = vlaneseq
  %v3022 = vshrl.u32 %v3021, 7
  %v3023 = vsub.s32 2, %v3022
  %v3024 = vrot.slane %v2989, %v3023
  %v3025 = vmax.f32 %v3011, %v3024
  %v3026 = vmax.f32 %v3012, %v3024
  %v3027 = vsel %vm320, %v3025, %v3011
  %v3028 = vsel %vm321, %v3026, %v3012
  %v3029 = vlaneseq
  %v3030 = vshrl.u32 %v3029, 7
  %v3031 = vsub.s32 3, %v3030
  %v3032 = vrot.slane %v2866, %v3031
  %v3033 = vmax.f32 %v3019, %v3032
  %v3034 = vmax.f32 %v3020, %v3032
  %v3035 = vsel %vm352, %v3033, %v3019
  %v3036 = vsel %vm353, %v3034, %v3020
  %v3037 = vlaneseq
  %v3038 = vshrl.u32 %v3037, 7
  %v3039 = vsub.s32 3, %v3038
  %v3040 = vrot.slane %v2989, %v3039
  %v3041 = vmax.f32 %v3027, %v3040
  %v3042 = vmax.f32 %v3028, %v3040
  %v3043 = vsel %vm352, %v3041, %v3027
  %v3044 = vsel %vm353, %v3042, %v3028
  %v3045 = vlaneseq
  %v3046 = vshrl.u32 %v3045, 7
  %v3047 = vsub.s32 4, %v3046
  %v3048 = vrot.slane %v2866, %v3047
  %v3049 = vmax.f32 %v3035, %v3048
  %v3050 = vmax.f32 %v3036, %v3048
  %v3051 = vsel %vm384, %v3049, %v3035
  %v3052 = vsel %vm385, %v3050, %v3036
  %v3053 = vlaneseq
  %v3054 = vshrl.u32 %v3053, 7
  %v3055 = vsub.s32 4, %v3054
  %v3056 = vrot.slane %v2989, %v3055
  %v3057 = vmax.f32 %v3043, %v3056
  %v3058 = vmax.f32 %v3044, %v3056
  %v3059 = vsel %vm384, %v3057, %v3043
  %v3060 = vsel %vm385, %v3058, %v3044
  %v3061 = vlaneseq
  %v3062 = vshrl.u32 %v3061, 7
  %v3063 = vsub.s32 5, %v3062
  %v3064 = vrot.slane %v2866, %v3063
  %v3065 = vmax.f32 %v3051, %v3064
  %v3066 = vmax.f32 %v3052, %v3064
  %v3067 = vsel %vm416, %v3065, %v3051
  %v3068 = vsel %vm417, %v3066, %v3052
  %v3069 = vlaneseq
  %v3070 = vshrl.u32 %v3069, 7
  %v3071 = vsub.s32 5, %v3070
  %v3072 = vrot.slane %v2989, %v3071
  %v3073 = vmax.f32 %v3059, %v3072
  %v3074 = vmax.f32 %v3060, %v3072
  %v3075 = vsel %vm416, %v3073, %v3059
  %v3076 = vsel %vm417, %v3074, %v3060
  %v3077 = vlaneseq
  %v3078 = vshrl.u32 %v3077, 7
  %v3079 = vsub.s32 6, %v3078
  %v3080 = vrot.slane %v2866, %v3079
  %v3081 = vmax.f32 %v3067, %v3080
  %v3082 = vmax.f32 %v3068, %v3080
  %v3083 = vsel %vm448, %v3081, %v3067
  %v3084 = vsel %vm449, %v3082, %v3068
  %v3085 = vlaneseq
  %v3086 = vshrl.u32 %v3085, 7
  %v3087 = vsub.s32 6, %v3086
  %v3088 = vrot.slane %v2989, %v3087
  %v3089 = vmax.f32 %v3075, %v3088
  %v3090 = vmax.f32 %v3076, %v3088
  %v3091 = vsel %vm448, %v3089, %v3075
  %v3092 = vsel %vm449, %v3090, %v3076
  %v3093 = vlaneseq
  %v3094 = vshrl.u32 %v3093, 7
  %v3095 = vsub.s32 7, %v3094
  %v3096 = vrot.slane %v2866, %v3095
  %v3097 = vmax.f32 %v3083, %v3096
  %v3098 = vmax.f32 %v3084, %v3096
  %v3099 = vsel %vm480, %v3097, %v3083
  %v3100 = vsel %vm481, %v3098, %v3084
  %v3101 = vlaneseq
  %v3102 = vshrl.u32 %v3101, 7
  %v3103 = vsub.s32 7, %v3102
  %v3104 = vrot.slane %v2989, %v3103
  %v3105 = vmax.f32 %v3091, %v3104
  %v3106 = vmax.f32 %v3092, %v3104
  %v3107 = vsel %vm480, %v3105, %v3091
  %v3108 = vsel %vm481, %v3106, %v3092
  %v3109 = vlaneseq
  %v3110 = vshrl.u32 %v3109, 7
  %v3111 = vsub.s32 0, %v3110
  %v3112 = vrot.slane %v2867, %v3111
  %v3113 = vmax.f32 %v3099, %v3112
  %v3114 = vmax.f32 %v3100, %v3112
  %v3115 = vsel %vm512, %v3113, %v3099
  %v3116 = vsel %vm513, %v3114, %v3100
  %v3117 = vsub.f32 0.0, %v2867
  %v3118 = vlaneseq
  %v3119 = vshrl.u32 %v3118, 7
  %v3120 = vsub.s32 0, %v3119
  %v3121 = vrot.slane %v3117, %v3120
  %v3122 = vmax.f32 %v3107, %v3121
  %v3123 = vmax.f32 %v3108, %v3121
  %v3124 = vsel %vm512, %v3122, %v3107
  %v3125 = vsel %vm513, %v3123, %v3108
  %v3126 = vlaneseq
  %v3127 = vshrl.u32 %v3126, 7
  %v3128 = vsub.s32 1, %v3127
  %v3129 = vrot.slane %v2867, %v3128
  %v3130 = vmax.f32 %v3115, %v3129
  %v3131 = vmax.f32 %v3116, %v3129
  %v3132 = vsel %vm545, %v3130, %v3115
  %v3133 = vsel %vm546, %v3131, %v3116
  %v3134 = vlaneseq
  %v3135 = vshrl.u32 %v3134, 7
  %v3136 = vsub.s32 1, %v3135
  %v3137 = vrot.slane %v3117, %v3136
  %v3138 = vmax.f32 %v3124, %v3137
  %v3139 = vmax.f32 %v3125, %v3137
  %v3140 = vsel %vm545, %v3138, %v3124
  %v3141 = vsel %vm546, %v3139, %v3125
  %v3142 = vlaneseq
  %v3143 = vshrl.u32 %v3142, 7
  %v3144 = vsub.s32 2, %v3143
  %v3145 = vrot.slane %v2867, %v3144
  %v3146 = vmax.f32 %v3132, %v3145
  %v3147 = vmax.f32 %v3133, %v3145
  %v3148 = vsel %vm577, %v3146, %v3132
  %v3149 = vsel %vm578, %v3147, %v3133
  %v3150 = vlaneseq
  %v3151 = vshrl.u32 %v3150, 7
  %v3152 = vsub.s32 2, %v3151
  %v3153 = vrot.slane %v3117, %v3152
  %v3154 = vmax.f32 %v3140, %v3153
  %v3155 = vmax.f32 %v3141, %v3153
  %v3156 = vsel %vm577, %v3154, %v3140
  %v3157 = vsel %vm578, %v3155, %v3141
  %v3158 = vlaneseq
  %v3159 = vshrl.u32 %v3158, 7
  %v3160 = vsub.s32 3, %v3159
  %v3161 = vrot.slane %v2867, %v3160
  %v3162 = vmax.f32 %v3148, %v3161
  %v3163 = vmax.f32 %v3149, %v3161
  %v3164 = vsel %vm609, %v3162, %v3148
  %v3165 = vsel %vm610, %v3163, %v3149
  %v3166 = vlaneseq
  %v3167 = vshrl.u32 %v3166, 7
  %v3168 = vsub.s32 3, %v3167
  %v3169 = vrot.slane %v3117, %v3168
  %v3170 = vmax.f32 %v3156, %v3169
  %v3171 = vmax.f32 %v3157, %v3169
  %v3172 = vsel %vm609, %v3170, %v3156
  %v3173 = vsel %vm610, %v3171, %v3157
  %v3174 = vlaneseq
  %v3175 = vshrl.u32 %v3174, 7
  %v3176 = vsub.s32 4, %v3175
  %v3177 = vrot.slane %v2867, %v3176
  %v3178 = vmax.f32 %v3164, %v3177
  %v3179 = vmax.f32 %v3165, %v3177
  %v3180 = vsel %vm641, %v3178, %v3164
  %v3181 = vsel %vm642, %v3179, %v3165
  %v3182 = vlaneseq
  %v3183 = vshrl.u32 %v3182, 7
  %v3184 = vsub.s32 4, %v3183
  %v3185 = vrot.slane %v3117, %v3184
  %v3186 = vmax.f32 %v3172, %v3185
  %v3187 = vmax.f32 %v3173, %v3185
  %v3188 = vsel %vm641, %v3186, %v3172
  %v3189 = vsel %vm642, %v3187, %v3173
  %v3190 = vlaneseq
  %v3191 = vshrl.u32 %v3190, 7
  %v3192 = vsub.s32 5, %v3191
  %v3193 = vrot.slane %v2867, %v3192
  %v3194 = vmax.f32 %v3180, %v3193
  %v3195 = vmax.f32 %v3181, %v3193
  %v3196 = vsel %vm673, %v3194, %v3180
  %v3197 = vsel %vm674, %v3195, %v3181
  %v3198 = vlaneseq
  %v3199 = vshrl.u32 %v3198, 7
  %v3200 = vsub.s32 5, %v3199
  %v3201 = vrot.slane %v3117, %v3200
  %v3202 = vmax.f32 %v3188, %v3201
  %v3203 = vmax.f32 %v3189, %v3201
  %v3204 = vsel %vm673, %v3202, %v3188
  %v3205 = vsel %vm674, %v3203, %v3189
  %v3206 = vlaneseq
  %v3207 = vshrl.u32 %v3206, 7
  %v3208 = vsub.s32 6, %v3207
  %v3209 = vrot.slane %v2867, %v3208
  %v3210 = vmax.f32 %v3196, %v3209
  %v3211 = vmax.f32 %v3197, %v3209
  %v3212 = vsel %vm705, %v3210, %v3196
  %v3213 = vsel %vm706, %v3211, %v3197
  %v3214 = vlaneseq
  %v3215 = vshrl.u32 %v3214, 7
  %v3216 = vsub.s32 6, %v3215
  %v3217 = vrot.slane %v3117, %v3216
  %v3218 = vmax.f32 %v3204, %v3217
  %v3219 = vmax.f32 %v3205, %v3217
  %v3220 = vsel %vm705, %v3218, %v3204
  %v3221 = vsel %vm706, %v3219, %v3205
  %v3222 = vlaneseq
  %v3223 = vshrl.u32 %v3222, 7
  %v3224 = vsub.s32 7, %v3223
  %v3225 = vrot.slane %v2867, %v3224
  %v3226 = vmax.f32 %v3212, %v3225
  %v3227 = vmax.f32 %v3213, %v3225
  %v3228 = vsel %vm737, %v3226, %v3212
  %v3229 = vsel %vm738, %v3227, %v3213
  %v3230 = vlaneseq
  %v3231 = vshrl.u32 %v3230, 7
  %v3232 = vsub.s32 7, %v3231
  %v3233 = vrot.slane %v3117, %v3232
  %v3234 = vmax.f32 %v3220, %v3233
  %v3235 = vmax.f32 %v3221, %v3233
  %v3236 = vsel %vm737, %v3234, %v3220
  %v3237 = vsel %vm738, %v3235, %v3221
  %v3238 = vsub.f32 0.0, %v3236
  %v3239 = vsub.f32 0.0, %v3237
  %v3240 = vmul.f32 %v3238, %v226
  %v3241 = vmul.f32 %v3239, %v231
  %v3242 = vmul.f32 %v3228, %v226
  %v3243 = vmul.f32 %v3229, %v231
  %3246 = vrot.lane.b32.xlu0 %v3240, 32
  %v3247 = vpop.permute.xlu0 %3246
  %3248 = vrot.lane.b32.xlu0 %v3241, 32
  %v3249 = vpop.permute.xlu0 %3248
  %3254 = vrot.lane.b32.xlu0 %v3242, 64
  %v3255 = vpop.permute.xlu0 %3254
  %3256 = vrot.lane.b32.xlu0 %v3243, 64
  %v3257 = vpop.permute.xlu0 %3256
  %3262 = vrot.lane.b32.xlu0 %v2980, 96
  %v3263 = vpop.permute.xlu0 %3262
  %3264 = vrot.lane.b32.xlu0 %v2981, 96
  %v3265 = vpop.permute.xlu0 %3264
  %v3268 = vsel %vm779, %v2954, %v3247
  %v3269 = vsel %vm779, %v2955, %v3249
  %v3270 = vsel %vm782, %v3268, %v3255
  %v3271 = vsel %vm782, %v3269, %v3257
  %v3272 = vsel %vm785, %v3270, %v3263
  %v3273 = vsel %vm785, %v3271, %v3265
  %v3274 = vmul.f32 %v791, %v3272
  %v3275 = vmul.f32 %v796, %v3273
  %v3276 = vmul.f32 %v803, %v3272
  %v3277 = vmul.f32 %v808, %v3273
  %v3278 = vpack.c.bf16 %v3273, %v3272
  %v3279 = vpack.c.bf16 %v3275, %v3274
  %v3280 = vpack.c.bf16 %v3277, %v3276
  %v3281 = vld [vmem:[%s18] sm:$0xf]
  %v3282 = vld [vmem:[%s18 + $0x4] sm:$0xf]
  %v3283 = vld [vmem:[%s18 + $0x8] sm:$0xf]
  %v3284 = vld [vmem:[%s18 + $0xc] sm:$0xf]
  %v3285 = vld [vmem:[%s18 + $0x10] sm:$0xf]
  %v3286 = vld [vmem:[%s18 + $0x14] sm:$0xf]
  %v3287 = vld [vmem:[%s18 + $0x18] sm:$0xf]
  %v3288 = vld [vmem:[%s18 + $0x1c] sm:$0xf]
  %v3289 = vld [vmem:[%s18 + $0x20] sm:$0xf]
  %v3290 = vld [vmem:[%s18 + $0x24] sm:$0xf]
  %v3291 = vld [vmem:[%s18 + $0x28] sm:$0xf]
  %v3292 = vld [vmem:[%s18 + $0x2c] sm:$0xf]
  %v3293 = vld [vmem:[%s18 + $0x30] sm:$0xf]
  %v3294 = vld [vmem:[%s18 + $0x34] sm:$0xf]
  %v3295 = vld [vmem:[%s18 + $0x38] sm:$0xf]
  %v3296 = vld [vmem:[%s18 + $0x3c] sm:$0xf]
  %v3297 = vld [vmem:[%s18 + $0x40] sm:$0xf]
  %v3298 = vld [vmem:[%s18 + $0x44] sm:$0xf]
  %v3299 = vld [vmem:[%s18 + $0x48] sm:$0xf]
  %v3300 = vld [vmem:[%s18 + $0x4c] sm:$0xf]
  %v3301 = vld [vmem:[%s18 + $0x50] sm:$0xf]
  %v3302 = vld [vmem:[%s18 + $0x54] sm:$0xf]
  %v3303 = vld [vmem:[%s18 + $0x58] sm:$0xf]
  %v3304 = vld [vmem:[%s18 + $0x5c] sm:$0xf]
  %v3305 = vld [vmem:[%s18 + $0x60] sm:$0xf]
  %v3306 = vld [vmem:[%s18 + $0x64] sm:$0xf]
  %v3307 = vld [vmem:[%s18 + $0x68] sm:$0xf]
  %v3308 = vld [vmem:[%s18 + $0x6c] sm:$0xf]
  %v3309 = vld [vmem:[%s18 + $0x70] sm:$0xf]
  %v3310 = vld [vmem:[%s18 + $0x74] sm:$0xf]
  %v3311 = vld [vmem:[%s18 + $0x78] sm:$0xf]
  %v3312 = vld [vmem:[%s18 + $0x7c] sm:$0xf]
  %v3313 = vld [vmem:[%s18 + $0x80] sm:$0xf]
  %v3314 = vld [vmem:[%s18 + $0x84] sm:$0xf]
  %v3315 = vld [vmem:[%s18 + $0x88] sm:$0xf]
  %v3316 = vld [vmem:[%s18 + $0x8c] sm:$0xf]
  %v3317 = vld [vmem:[%s18 + $0x90] sm:$0xf]
  %v3318 = vld [vmem:[%s18 + $0x94] sm:$0xf]
  %v3319 = vld [vmem:[%s18 + $0x98] sm:$0xf]
  %v3320 = vld [vmem:[%s18 + $0x9c] sm:$0xf]
  %v3321 = vld [vmem:[%s18 + $0xa0] sm:$0xf]
  %v3322 = vld [vmem:[%s18 + $0xa4] sm:$0xf]
  %v3323 = vld [vmem:[%s18 + $0xa8] sm:$0xf]
  %v3324 = vld [vmem:[%s18 + $0xac] sm:$0xf]
  %v3325 = vld [vmem:[%s18 + $0xb0] sm:$0xf]
  %v3326 = vld [vmem:[%s18 + $0xb4] sm:$0xf]
  %v3327 = vld [vmem:[%s18 + $0xb8] sm:$0xf]
  %v3328 = vld [vmem:[%s18 + $0xbc] sm:$0xf]
  %v3329 = vld [vmem:[%s19] sm:$0x1]
  %v3331 = vlaneseq
  %v3332 = vshrl.u32 %v3331, 7
  %v3333 = vsub.s32 0, %v3332
  %v3334 = vrot.slane %v3329, %v3333
  %v3384 = vunpack.c.l.b16 %v3281
  %v3385 = vunpack.c.l.b16 %v3282
  %v3386 = vunpack.c.l.b16 %v3283
  %v3387 = vunpack.c.l.b16 %v3284
  %v3388 = vunpack.c.l.b16 %v3285
  %v3389 = vunpack.c.l.b16 %v3286
  %v3390 = vunpack.c.l.b16 %v3287
  %v3391 = vunpack.c.l.b16 %v3288
  %v3392 = vunpack.c.l.b16 %v3289
  %v3393 = vunpack.c.l.b16 %v3290
  %v3394 = vunpack.c.l.b16 %v3291
  %v3395 = vunpack.c.l.b16 %v3292
  %v3396 = vunpack.c.l.b16 %v3293
  %v3397 = vunpack.c.l.b16 %v3294
  %v3398 = vunpack.c.l.b16 %v3295
  %v3399 = vunpack.c.l.b16 %v3296
  %v3400 = vunpack.c.l.b16 %v3297
  %v3401 = vunpack.c.l.b16 %v3298
  %v3402 = vunpack.c.l.b16 %v3299
  %v3403 = vunpack.c.l.b16 %v3300
  %v3404 = vunpack.c.l.b16 %v3301
  %v3405 = vunpack.c.l.b16 %v3302
  %v3406 = vunpack.c.l.b16 %v3303
  %v3407 = vunpack.c.l.b16 %v3304
  %v3408 = vunpack.c.l.b16 %v3305
  %v3409 = vunpack.c.l.b16 %v3306
  %v3410 = vunpack.c.l.b16 %v3307
  %v3411 = vunpack.c.l.b16 %v3308
  %v3412 = vunpack.c.l.b16 %v3309
  %v3413 = vunpack.c.l.b16 %v3310
  %v3414 = vunpack.c.l.b16 %v3311
  %v3415 = vunpack.c.l.b16 %v3312
  %v3416 = vunpack.c.l.b16 %v3313
  %v3417 = vunpack.c.l.b16 %v3314
  %v3418 = vunpack.c.l.b16 %v3315
  %v3419 = vunpack.c.l.b16 %v3316
  %v3420 = vunpack.c.l.b16 %v3317
  %v3421 = vunpack.c.l.b16 %v3318
  %v3422 = vunpack.c.l.b16 %v3319
  %v3423 = vunpack.c.l.b16 %v3320
  %v3424 = vunpack.c.l.b16 %v3321
  %v3425 = vunpack.c.l.b16 %v3322
  %v3426 = vunpack.c.l.b16 %v3323
  %v3427 = vunpack.c.l.b16 %v3324
  %v3428 = vunpack.c.l.b16 %v3325
  %v3429 = vunpack.c.l.b16 %v3326
  %v3430 = vunpack.c.l.b16 %v3327
  %v3431 = vunpack.c.l.b16 %v3328
  %v3432 = vpack.c.b16 %v3385, %v3384
  %v3433 = vpack.c.b16 %v3387, %v3386
  %v3434 = vpack.c.b16 %v3389, %v3388
  %v3435 = vpack.c.b16 %v3391, %v3390
  %v3436 = vpack.c.b16 %v3393, %v3392
  %v3437 = vpack.c.b16 %v3395, %v3394
  %v3438 = vpack.c.b16 %v3397, %v3396
  %v3439 = vpack.c.b16 %v3399, %v3398
  %v3440 = vpack.c.b16 %v3401, %v3400
  %v3441 = vpack.c.b16 %v3403, %v3402
  %v3442 = vpack.c.b16 %v3405, %v3404
  %v3443 = vpack.c.b16 %v3407, %v3406
  %v3444 = vpack.c.b16 %v3409, %v3408
  %v3445 = vpack.c.b16 %v3411, %v3410
  %v3446 = vpack.c.b16 %v3413, %v3412
  %v3447 = vpack.c.b16 %v3415, %v3414
  %v3448 = vpack.c.b16 %v3417, %v3416
  %v3449 = vpack.c.b16 %v3419, %v3418
  %v3450 = vpack.c.b16 %v3421, %v3420
  %v3451 = vpack.c.b16 %v3423, %v3422
  %v3452 = vpack.c.b16 %v3425, %v3424
  %v3453 = vpack.c.b16 %v3427, %v3426
  %v3454 = vpack.c.b16 %v3429, %v3428
  %v3455 = vpack.c.b16 %v3431, %v3430
  %3480 = vmatprep.subr.bf16.mxu0 0
  %3481 = vmatpush1.bf16.msra.mxu0 %v3432
  %3482 = vmatprep.subr.bf16.mxu0 0
  %3483 = vmatpush1.bf16.msra.mxu0 %v3433
  %3484 = vmatprep.subr.bf16.mxu0 0
  %3485 = vmatpush1.bf16.msra.mxu0 %v3434
  %3486 = vmatprep.subr.bf16.mxu0 0
  %3487 = vmatpush1.bf16.msra.mxu0 %v3435
  %3488 = vmatprep.subr.bf16.mxu0 0
  %3489 = vmatpush1.bf16.msra.mxu0 %v3436
  %3490 = vmatprep.subr.bf16.mxu0 0
  %3491 = vmatpush1.bf16.msra.mxu0 %v3437
  %3492 = vmatprep.subr.bf16.mxu0 0
  %3493 = vmatpush1.bf16.msra.mxu0 %v3438
  %3494 = vmatprep.subr.bf16.mxu0 0
  %3495 = vmatpush1.bf16.msra.mxu0 %v3439
  %3496 = vmatprep.subr.bf16.mxu0 0
  %3497 = vmatpush1.bf16.msra.mxu0 %v3440
  %3498 = vmatprep.subr.bf16.mxu0 0
  %3499 = vmatpush1.bf16.msra.mxu0 %v3441
  %3500 = vmatprep.subr.bf16.mxu0 0
  %3501 = vmatpush1.bf16.msra.mxu0 %v3442
  %3502 = vmatprep.subr.bf16.mxu0 0
  %3503 = vmatpush1.bf16.msra.mxu0 %v3443
  %3504 = vmatprep.subr.bf16.mxu0 0
  %3505 = vmatpush1.bf16.msra.mxu0 %v3444
  %3506 = vmatprep.subr.bf16.mxu0 0
  %3507 = vmatpush1.bf16.msra.mxu0 %v3445
  %3508 = vmatprep.subr.bf16.mxu0 0
  %3509 = vmatpush1.bf16.msra.mxu0 %v3446
  %3510 = vmatprep.subr.bf16.mxu0 0
  %3511 = vmatpush1.bf16.msra.mxu0 %v3447
  %3512 = vmatprep.mubr.bf16.mxu0 %v3279
  %3513 = vmatmul.mubr.bf16.gmra.mrb[0].mxu0 %v3278
  %v3514 = vpop.f32.mrb[0].mxu0
  %v3515 = vadd.f32 %v3334, %v3514
  %v3516 = vpop.f32.mrb[0].mxu0
  %v3517 = vpop.f32.mrb[0].mxu0
  %v3518 = vadd.f32 %v3334, %v3517
  %v3519 = vpop.f32.mrb[0].mxu0
  %3520 = vdwg.mxu0
  %3521 = vmatprep.subr.bf16.mxu0 0
  %3522 = vmatpush1.bf16.msra.mxu0 %v3448
  %3523 = vmatprep.subr.bf16.mxu0 0
  %3524 = vmatpush1.bf16.msra.mxu0 %v3449
  %3525 = vmatprep.subr.bf16.mxu0 0
  %3526 = vmatpush1.bf16.msra.mxu0 %v3450
  %3527 = vmatprep.subr.bf16.mxu0 0
  %3528 = vmatpush1.bf16.msra.mxu0 %v3451
  %3529 = vmatprep.subr.bf16.mxu0 0
  %3530 = vmatpush1.bf16.msra.mxu0 %v3452
  %3531 = vmatprep.subr.bf16.mxu0 0
  %3532 = vmatpush1.bf16.msra.mxu0 %v3453
  %3533 = vmatprep.subr.bf16.mxu0 0
  %3534 = vmatpush1.bf16.msra.mxu0 %v3454
  %3535 = vmatprep.subr.bf16.mxu0 0
  %3536 = vmatpush1.bf16.msra.mxu0 %v3455
  %3537 = vmatprep.subr.bf16.mxu0 0
  %3538 = vmatpush1.bf16.msra.mxu0 0
  %3539 = vmatprep.subr.bf16.mxu0 0
  %3540 = vmatpush1.bf16.msra.mxu0 0
  %3541 = vmatprep.subr.bf16.mxu0 0
  %3542 = vmatpush1.bf16.msra.mxu0 0
  %3543 = vmatprep.subr.bf16.mxu0 0
  %3544 = vmatpush1.bf16.msra.mxu0 0
  %3545 = vmatprep.subr.bf16.mxu0 0
  %3546 = vmatpush1.bf16.msra.mxu0 0
  %3547 = vmatprep.subr.bf16.mxu0 0
  %3548 = vmatpush1.bf16.msra.mxu0 0
  %3549 = vmatprep.subr.bf16.mxu0 0
  %3550 = vmatpush1.bf16.msra.mxu0 0
  %3551 = vmatprep.subr.bf16.mxu0 0
  %3552 = vmatpush1.bf16.msra.mxu0 0
  %3553 = vmatprep.mubr.bf16.mxu0 0
  %3554 = vmatmul.mubr.bf16.gmra.mrb[0].mxu0 %v3280
  %v3555 = vpop.f32.mrb[0].mxu0
  %v3556 = vadd.f32 %v3515, %v3555
  %v3557 = vpop.f32.mrb[0].mxu0
  %v3558 = vpop.f32.mrb[0].mxu0
  %v3559 = vadd.f32 %v3518, %v3558
  %v3560 = vpop.f32.mrb[0].mxu0
  %3561 = vdwg.mxu0
  %v3562 = vmax.f32 %v3556, 0.0
  %v3563 = vmax.f32 %v3559, 0.0
  %v3564 = vsel %vm98, %v3562, 0.0
  %v3565 = vsel %vm98, %v3563, 0.0
  %v3566 = vadd.f32 %v3564, %v3565
  %v3567 = vrot.slane %v3566, 4
  %v3568 = vadd.f32 %v3566, %v3567
  %v3569 = vrot.slane %v3568, 2
  %v3570 = vadd.f32 %v3568, %v3569
  %v3571 = vrot.slane %v3570, 1
  %v3572 = vadd.f32 %v3570, %v3571
  %v3573 = vmul.f32 %v3572, %v1107
  %v3574 = vmul.f32 %v3562, %v3562
  %v3575 = vmul.f32 %v3563, %v3563
  %v3576 = vsel %vm98, %v3574, 0.0
  %v3577 = vsel %vm98, %v3575, 0.0
  %v3578 = vadd.f32 %v3576, %v3577
  %v3579 = vrot.slane %v3578, 4
  %v3580 = vadd.f32 %v3578, %v3579
  %v3581 = vrot.slane %v3580, 2
  %v3582 = vadd.f32 %v3580, %v3581
  %v3583 = vrot.slane %v3582, 1
  %v3584 = vadd.f32 %v3582, %v3583
  %v3585 = vmul.f32 %v3584, %v1107
  %v3586 = vmul.f32 %v3573, %v3573
  %v3587 = vsub.f32 %v3585, %v3586
  %v3588 = vmax.f32 %v3587, 0.0
  %v3589 = vsub.f32 %v3562, %v3573
  %v3590 = vsub.f32 %v3563, %v3573
  %v3591 = vadd.f32 %v3588, 1e-05
  %v3592 = vrsqrt.pop %v3591
  %v3593 = vmul.f32 %v3589, %v3592
  %v3594 = vmul.f32 %v3590, %v3592
  %v3595 = vld [vmem:[%s20] sm:$0x1]
  %v3597 = vlaneseq
  %v3598 = vshrl.u32 %v3597, 7
  %v3599 = vsub.s32 0, %v3598
  %v3600 = vrot.slane %v3595, %v3599
  %v3602 = vmul.f32 %v3593, %v3600
  %v3603 = vmul.f32 %v3594, %v3600
  %v3604 = vld [vmem:[%s21] sm:$0x1]
  %v3606 = vlaneseq
  %v3607 = vshrl.u32 %v3606, 7
  %v3608 = vsub.s32 0, %v3607
  %v3609 = vrot.slane %v3604, %v3608
  %v3611 = vadd.f32 %v3602, %v3609
  %v3612 = vadd.f32 %v3603, %v3609
  %v3613 = vpack.c.bf16 %v3612, %v3611
  %v3614 = vld [vmem:[%s22] sm:$0xf]
  %v3615 = vld [vmem:[%s22 + $0x4] sm:$0xf]
  %v3616 = vld [vmem:[%s23] sm:$0x1]
  %v3618 = vlaneseq
  %v3619 = vshrl.u32 %v3618, 7
  %v3620 = vsub.s32 0, %v3619
  %v3621 = vrot.slane %v3616, %v3620
  %v3625 = vunpack.c.l.b16 %v3614
  %v3626 = vunpack.c.l.b16 %v3615
  %v3627 = vpack.c.b16 %v3626, %v3625
  %v3630 = vsel %vm98, %v3613, 0
  %3632 = vmatprep.subr.bf16.mxu0 0
  %3633 = vmatpush1.bf16.msra.mxu0 %v3627
  %3634 = vmatprep.subr.bf16.mxu0 0
  %3635 = vmatpush1.bf16.msra.mxu0 0
  %3636 = vmatprep.subr.bf16.mxu0 0
  %3637 = vmatpush1.bf16.msra.mxu0 0
  %3638 = vmatprep.subr.bf16.mxu0 0
  %3639 = vmatpush1.bf16.msra.mxu0 0
  %3640 = vmatprep.subr.bf16.mxu0 0
  %3641 = vmatpush1.bf16.msra.mxu0 0
  %3642 = vmatprep.subr.bf16.mxu0 0
  %3643 = vmatpush1.bf16.msra.mxu0 0
  %3644 = vmatprep.subr.bf16.mxu0 0
  %3645 = vmatpush1.bf16.msra.mxu0 0
  %3646 = vmatprep.subr.bf16.mxu0 0
  %3647 = vmatpush1.bf16.msra.mxu0 0
  %3648 = vmatprep.subr.bf16.mxu0 0
  %3649 = vmatpush1.bf16.msra.mxu0 0
  %3650 = vmatprep.subr.bf16.mxu0 0
  %3651 = vmatpush1.bf16.msra.mxu0 0
  %3652 = vmatprep.subr.bf16.mxu0 0
  %3653 = vmatpush1.bf16.msra.mxu0 0
  %3654 = vmatprep.subr.bf16.mxu0 0
  %3655 = vmatpush1.bf16.msra.mxu0 0
  %3656 = vmatprep.subr.bf16.mxu0 0
  %3657 = vmatpush1.bf16.msra.mxu0 0
  %3658 = vmatprep.subr.bf16.mxu0 0
  %3659 = vmatpush1.bf16.msra.mxu0 0
  %3660 = vmatprep.subr.bf16.mxu0 0
  %3661 = vmatpush1.bf16.msra.mxu0 0
  %3662 = vmatprep.subr.bf16.mxu0 0
  %3663 = vmatpush1.bf16.msra.mxu0 0
  %3664 = vmatprep.mubr.bf16.mxu0 0
  %3665 = vmatmul.mubr.bf16.gmra.mrb[0].mxu0 %v3630
  %v3666 = vpop.f32.mrb[0].mxu0
  %v3667 = vadd.f32 %v3621, %v3666
  %v3668 = vpop.f32.mrb[0].mxu0
  %v3669 = vpop.f32.mrb[0].mxu0
  %v3670 = vadd.f32 %v3621, %v3669
  %v3671 = vpop.f32.mrb[0].mxu0
  %3672 = vdwg.mxu0
  %3673 = vst [vmem:[%s24] sm:$0xff] %v3667
  %3674 = vst [vmem:[%s24 + $0x8] sm:$0xff] %v3670
  // Predicated region
  $region98: #{gcn_forward.1} parent=0 // pred_check
    _
  $region99: #{gcn_forward.1} parent=0 // pred_check_branch
    %3676 = sbr.rel (0) target = $region101
  $region100: #{gcn_forward.1} parent=0 // pred_region
    _
  $region101: #{gcn_forward.1} parent=0 // pred_fallthru
    _
  // Predicated region
  $region102: #{gcn_forward.1} parent=0 // pred_check
    _
  $region103: #{gcn_forward.1} parent=0 // pred_check_branch
    %3678 = sbr.rel (0) target = $region105
  $region104: #{gcn_forward.1} parent=0 // pred_region
    _
  $region105: #{gcn_forward.1} parent=0 // pred_fallthru
    _

</llo_original>
